<compile_context>
chip_gen: v7x
topology: tpu7x:2x2x1
jax: 0.10.0
libtpu: 0.0.40
codegen_flags: <defaults>
</compile_context>

<pallas_src>
import functools

import jax
import jax.numpy as jnp
import numpy as np
from jax.experimental import pallas as pl
from jax.experimental.pallas import tpu as pltpu


# ----------------------------- Pallas kernel --------------------------------


def _basic_block_kernel(x_ref, w1_ref, s1_ref, b1_ref, w2_ref, s2_ref, b2_ref,
                        out_ref,
                        xpad_ref, p1_ref, hpad_ref, p2_ref,
                        *, compute_dtype):
    """Fused conv3x3+BN+Swish -> conv3x3+BN+residual+Swish on one NHWC image."""
    _, H, W, Cin = x_ref.shape
    Cmid = w1_ref.shape[1]
    Cout = w2_ref.shape[1]

    x = x_ref[0]                                            # (H, W, Cin), f32

    # ---- conv1: zero-halo tile + im2col patch + single K=9*Cin MXU matmul ---
    xpad_ref[...] = jnp.zeros_like(xpad_ref)                # halo rows/cols = 0
    xpad_ref[1:H + 1, 1:W + 1, :] = x
    for tap in range(9):                                    # (H, W, 9*Cin) patch
        dy, dx = tap // 3, tap % 3
        p1_ref[:, :, tap * Cin:(tap + 1) * Cin] = xpad_ref[dy:dy + H, dx:dx + W, :]
    patch1 = p1_ref[...].reshape(H * W, 9 * Cin).astype(compute_dtype)
    acc1 = jnp.dot(patch1, w1_ref[...], preferred_element_type=jnp.float32)

    h = acc1 * s1_ref[...] + b1_ref[...]                    # BN1 (folded), f32
    h = h * jax.nn.sigmoid(h)                               # Swish, (H*W, Cmid)

    # ---- conv2 on the VMEM-resident intermediate (never written to HBM) ----
    hpad_ref[...] = jnp.zeros_like(hpad_ref)
    hpad_ref[1:H + 1, 1:W + 1, :] = h.reshape(H, W, Cmid)
    for tap in range(9):                                    # (H, W, 9*Cmid) patch
        dy, dx = tap // 3, tap % 3
        p2_ref[:, :, tap * Cmid:(tap + 1) * Cmid] = hpad_ref[dy:dy + H, dx:dx + W, :]
    patch2 = p2_ref[...].reshape(H * W, 9 * Cmid).astype(compute_dtype)
    acc2 = jnp.dot(patch2, w2_ref[...], preferred_element_type=jnp.float32)

    y = acc2 * s2_ref[...] + b2_ref[...]                    # BN2 (folded)
    y = y + x.reshape(H * W, Cout)                          # residual (exact f32)
    y = y * jax.nn.sigmoid(y)                               # Swish

    # TODO(synk): lane-dense (H, W*Cout) output packing needs an in-kernel
    # minor-dim merge relayout; NHWC blocks kept here for lowering safety.
    out_ref[...] = y.reshape(1, H, W, Cout).astype(out_ref.dtype)


# ------------------------------- wrapper -------------------------------------


def _round_up(v, m):
    return (v + m - 1) // m * m


def _vmem_bytes(shape, dtype):
    """Rough VMEM residency of one buffer (last dim padded to 128 lanes,
    second-to-last to 8 sublanes)."""
    itemsize = jnp.dtype(dtype).itemsize
    padded = list(shape)
    if len(padded) >= 1:
        padded[-1] = _round_up(padded[-1], 128)
    if len(padded) >= 2:
        padded[-2] = _round_up(padded[-2], 8)
    n = 1
    for d in padded:
        n *= d
    return n * itemsize


def _basic_block_pallas(x_nhwc, w1, s1, b1, w2, s2, b2, *, compute_dtype):
    N, H, W, Cin = x_nhwc.shape
    Cmid = w1.shape[1]
    Cout = w2.shape[1]
    if Cout != Cin:
        raise ValueError("residual path requires Cin == Cout "
                         "(stride=1, downsample=None)")

    kernel = functools.partial(_basic_block_kernel, compute_dtype=compute_dtype)

    # Per-tile scratch: zero-padded input/intermediate tiles + im2col patches.
    scratch_shapes = [
        pltpu.VMEM((H + 2, W + 2, Cin), jnp.float32),   # zero-padded x tile
        pltpu.VMEM((H, W, 9 * Cin), jnp.float32),       # im2col patch, conv1
        pltpu.VMEM((H + 2, W + 2, Cmid), jnp.float32),  # zero-padded h tile
        pltpu.VMEM((H, W, 9 * Cmid), jnp.float32),      # im2col patch, conv2
    ]

    # VMEM budget: scratch + double-buffered in/out blocks (with lane padding),
    # clamped to stay well inside v7x's 64 MiB physical / 32 MiB scoped VMEM.
    block_bytes = (_vmem_bytes((1, H, W, Cin), x_nhwc.dtype)
                   + _vmem_bytes((9 * Cin, Cmid), compute_dtype)
                   + _vmem_bytes((9 * Cmid, Cout), compute_dtype)
                   + 4 * _vmem_bytes((1, max(Cmid, Cout)), jnp.float32)
                   + _vmem_bytes((1, H, W, Cout), jnp.float32))
    scratch_bytes = sum(_vmem_bytes(s.shape, s.dtype) for s in scratch_shapes)
    vmem_limit = int(min(32 * 1024 * 1024,
                         max(16 * 1024 * 1024,
                             4 * (scratch_bytes + 2 * block_bytes))))

    flops = 2 * N * H * W * 9 * (Cin * Cmid + Cmid * Cout)
    transcendentals = N * H * W * (Cmid + Cout)          # one exp per Swish elem
    bytes_accessed = (x_nhwc.size * x_nhwc.dtype.itemsize
                      + (w1.size + w2.size) * jnp.dtype(compute_dtype).itemsize
                      + (s1.size + b1.size + s2.size + b2.size) * 4
                      + N * H * W * Cout * 4)

    # TODO(synk): row-block tiling with halo DMA for large H*W (bounds per-step
    # VMEM); whole-image tiles per batch element are used here and fit easily.
    return pl.pallas_call(
        kernel,
        out_shape=jax.ShapeDtypeStruct((N, H, W, Cout), jnp.float32),
        grid_spec=pltpu.PrefetchScalarGridSpec(
            num_scalar_prefetch=0,
            grid=(N,),
            in_specs=[
                pl.BlockSpec((1, H, W, Cin), lambda n: (n, 0, 0, 0)),   # x
                pl.BlockSpec((9 * Cin, Cmid), lambda n: (0, 0)),        # W1
                pl.BlockSpec((1, Cmid), lambda n: (0, 0)),              # bn1 scale
                pl.BlockSpec((1, Cmid), lambda n: (0, 0)),              # bn1 shift
                pl.BlockSpec((9 * Cmid, Cout), lambda n: (0, 0)),       # W2
                pl.BlockSpec((1, Cout), lambda n: (0, 0)),              # bn2 scale
                pl.BlockSpec((1, Cout), lambda n: (0, 0)),              # bn2 shift
            ],
            out_specs=pl.BlockSpec((1, H, W, Cout), lambda n: (n, 0, 0, 0)),
            scratch_shapes=scratch_shapes,
        ),
        compiler_params=pltpu.CompilerParams(
            dimension_semantics=("parallel",),   # batch shards across TCs (v7x)
            vmem_limit_bytes=vmem_limit,
        ),
        cost_estimate=pl.CostEstimate(flops=flops,
                                      transcendentals=transcendentals,
                                      bytes_accessed=bytes_accessed),
    )(x_nhwc, w1, s1, b1, w2, s2, b2)


def _fold_bn(gamma, beta, mean, var, eps=1e-5):
    """Fold BatchNorm (inference) into per-channel scale/shift, shaped (1, C)."""
    scale = gamma / jnp.sqrt(var + eps)
    shift = beta - mean * scale
    return (scale.reshape(1, -1).astype(jnp.float32),
            shift.reshape(1, -1).astype(jnp.float32))


def _prep_conv_weight(w_oihw, dtype):
    """(Cout, Cin, 3, 3) PyTorch layout -> (9*Cin, Cout), tap-major (dy, dx),
    input channel fastest -- matches the im2col patch built in the kernel."""
    cout, cin = w_oihw.shape[0], w_oihw.shape[1]
    w = jnp.transpose(w_oihw, (2, 3, 1, 0)).reshape(9 * cin, cout)
    return w.astype(dtype)


@functools.partial(jax.jit, static_argnames=("compute_dtype",))
def basic_block_forward(x_nchw, params, *, compute_dtype=jnp.bfloat16):
    """BasicBlock forward (stride=1, downsample=None). NCHW in / NCHW out.

    compute_dtype: dtype of the MXU matmul inputs (im2col patches + weights).
      bfloat16 (default) halves weight traffic and roughly doubles MXU rate on
      v6e/v7x; float32 reproduces the PyTorch reference to ~1e-5. Accumulation
      and the BN / Swish / residual epilogue are always float32.
    """
    # TODO(synk): stride>1 / downsample branch not implemented (the module is
    # instantiated with downsample=None, stride=1).
    x = jnp.transpose(x_nchw, (0, 2, 3, 1)).astype(jnp.float32)   # NCHW -> NHWC

    w1 = _prep_conv_weight(params["conv1_w"], compute_dtype)
    w2 = _prep_conv_weight(params["conv2_w"], compute_dtype)
    s1, b1 = _fold_bn(params["bn1_gamma"], params["bn1_beta"],
                      params["bn1_mean"], params["bn1_var"])
    s2, b2 = _fold_bn(params["bn2_gamma"], params["bn2_beta"],
                      params["bn2_mean"], params["bn2_var"])

    out = _basic_block_pallas(x, w1, s1, b1, w2, s2, b2,
                              compute_dtype=compute_dtype)
    return jnp.transpose(out, (0, 3, 1, 2))                       # NHWC -> NCHW


# ------------------------------ reference ------------------------------------


def _reference_forward(x_nchw, params, eps=1e-5):
    """Pure-JAX reference (lax.conv) of the same forward pass, for validation."""
    def conv(x, w_oihw):
        return jax.lax.conv_general_dilated(
            x, w_oihw, window_strides=(1, 1), padding=((1, 1), (1, 1)),
            dimension_numbers=("NCHW", "OIHW", "NCHW"))

    def bn(x, g, b, m, v):
        return (x - m[None, :, None, None]) / jnp.sqrt(v + eps)[None, :, None, None] \
               * g[None, :, None, None] + b[None, :, None, None]

    swish = lambda t: t * jax.nn.sigmoid(t)
    out = swish(bn(conv(x_nchw, params["conv1_w"]),
                   params["bn1_gamma"], params["bn1_beta"],
                   params["bn1_mean"], params["bn1_var"]))
    out = bn(conv(out, params["conv2_w"]),
             params["bn2_gamma"], params["bn2_beta"],
             params["bn2_mean"], params["bn2_var"])
    out = out + x_nchw
    return swish(out)


# --------------------------------- main ---------------------------------------


if __name__ == "__main__":
    N, C, H, W = 2, 8, 16, 16          # inplanes = planes = 8, stride = 1
    key = jax.random.PRNGKey(0)
    ks = jax.random.split(key, 11)

    x = jax.random.normal(ks[0], (N, C, H, W), jnp.float32)
    params = {
        "conv1_w":   0.1 * jax.random.normal(ks[1], (C, C, 3, 3), jnp.float32),
        "conv2_w":   0.1 * jax.random.normal(ks[2], (C, C, 3, 3), jnp.float32),
        "bn1_gamma": 1.0 + 0.1 * jax.random.normal(ks[3], (C,), jnp.float32),
        "bn1_beta":  0.1 * jax.random.normal(ks[4], (C,), jnp.float32),
        "bn1_mean":  0.1 * jax.random.normal(ks[5], (C,), jnp.float32),
        "bn1_var":   0.5 + jnp.abs(jax.random.normal(ks[6], (C,), jnp.float32)),
        "bn2_gamma": 1.0 + 0.1 * jax.random.normal(ks[7], (C,), jnp.float32),
        "bn2_beta":  0.1 * jax.random.normal(ks[8], (C,), jnp.float32),
        "bn2_mean":  0.1 * jax.random.normal(ks[9], (C,), jnp.float32),
        "bn2_var":   0.5 + jnp.abs(jax.random.normal(ks[10], (C,), jnp.float32)),
    }

    ref = jax.block_until_ready(_reference_forward(x, params))

    # Exact-semantics path: f32 MXU inputs.
    out_f32 = jax.block_until_ready(
        basic_block_forward(x, params, compute_dtype=jnp.float32))
    np.testing.assert_allclose(np.asarray(out_f32), np.asarray(ref),
                               rtol=1e-4, atol=1e-4)

    # Default fast path: bf16 MXU inputs, f32 accumulation/epilogue.
    out_bf16 = jax.block_until_ready(basic_block_forward(x, params))
    np.testing.assert_allclose(np.asarray(out_bf16), np.asarray(ref),
                               rtol=5e-2, atol=5e-2)

    print("KERNEL_OK")
</pallas_src>

<mosaic_0001>
module attributes {stable_mosaic.version = 11 : i64} {
  func.func @_basic_block_kernel(%arg0: i32, %arg1: memref<1x16x16x8xf32, #tpu.memory_space<vmem>>, %arg2: memref<72x8xf32, #tpu.memory_space<vmem>>, %arg3: memref<1x8xf32, #tpu.memory_space<vmem>>, %arg4: memref<1x8xf32, #tpu.memory_space<vmem>>, %arg5: memref<72x8xf32, #tpu.memory_space<vmem>>, %arg6: memref<1x8xf32, #tpu.memory_space<vmem>>, %arg7: memref<1x8xf32, #tpu.memory_space<vmem>>, %arg8: memref<1x16x16x8xf32, #tpu.memory_space<vmem>>, %arg9: memref<18x18x8xf32, #tpu.memory_space<vmem>>, %arg10: memref<16x16x72xf32, #tpu.memory_space<vmem>>, %arg11: memref<18x18x8xf32, #tpu.memory_space<vmem>>, %arg12: memref<16x16x72xf32, #tpu.memory_space<vmem>>) attributes {dimension_semantics = [#tpu.dimension_semantics<parallel>], iteration_bounds = array<i64: 2>, scalar_prefetch = 0 : i64, scratch_operands = 4 : i64, tpu.core_type = #tpu.core_type<tc>, window_params = [{transform_indices = @transform_0, window_bounds = array<i64: 1, 16, 16, 8>}, {pipeline_mode = #tpu.pipeline_mode<synchronous>, transform_indices = @transform_1, window_bounds = array<i64: 72, 8>}, {pipeline_mode = #tpu.pipeline_mode<synchronous>, transform_indices = @transform_2, window_bounds = array<i64: 1, 8>}, {pipeline_mode = #tpu.pipeline_mode<synchronous>, transform_indices = @transform_3, window_bounds = array<i64: 1, 8>}, {pipeline_mode = #tpu.pipeline_mode<synchronous>, transform_indices = @transform_4, window_bounds = array<i64: 72, 8>}, {pipeline_mode = #tpu.pipeline_mode<synchronous>, transform_indices = @transform_5, window_bounds = array<i64: 1, 8>}, {pipeline_mode = #tpu.pipeline_mode<synchronous>, transform_indices = @transform_6, window_bounds = array<i64: 1, 8>}, {transform_indices = @transform_7, window_bounds = array<i64: 1, 16, 16, 8>}]} {
    %c0 = arith.constant 0 : index
    %c0_0 = arith.constant 0 : index
    %c0_1 = arith.constant 0 : index
    %c0_2 = arith.constant 0 : index
    %0 = vector.load %arg1[%c0, %c0_0, %c0_1, %c0_2] : memref<1x16x16x8xf32, #tpu.memory_space<vmem>>, vector<1x16x16x8xf32>
    %1 = vector.shape_cast %0 : vector<1x16x16x8xf32> to vector<16x16x8xf32>
    %cst = arith.constant 0.000000e+00 : f32
    %2 = vector.broadcast %cst : f32 to vector<18x18x8xf32>
    %c0_3 = arith.constant 0 : index
    %c0_4 = arith.constant 0 : index
    %c0_5 = arith.constant 0 : index
    %3 = vector.load %arg9[%c0_3, %c0_4, %c0_5] : memref<18x18x8xf32, #tpu.memory_space<vmem>>, vector<18x18x8xf32>
    tpu.vector_store %arg9[%c0_3, %c0_4, %c0_5], %2 {strides = array<i32>} : memref<18x18x8xf32, #tpu.memory_space<vmem>>, vector<18x18x8xf32>,
    %c1 = arith.constant 1 : index
    %c1_6 = arith.constant 1 : index
    %c0_7 = arith.constant 0 : index
    %4 = vector.load %arg9[%c1, %c1_6, %c0_7] : memref<18x18x8xf32, #tpu.memory_space<vmem>>, vector<16x16x8xf32>
    tpu.vector_store %arg9[%c1, %c1_6, %c0_7], %1 {strides = array<i32>} : memref<18x18x8xf32, #tpu.memory_space<vmem>>, vector<16x16x8xf32>,
    %c0_8 = arith.constant 0 : index
    %c0_9 = arith.constant 0 : index
    %c0_10 = arith.constant 0 : index
    %5 = vector.load %arg9[%c0_8, %c0_9, %c0_10] : memref<18x18x8xf32, #tpu.memory_space<vmem>>, vector<16x16x8xf32>
    %c0_11 = arith.constant 0 : index
    %c0_12 = arith.constant 0 : index
    %c0_13 = arith.constant 0 : index
    %6 = vector.load %arg10[%c0_11, %c0_12, %c0_13] : memref<16x16x72xf32, #tpu.memory_space<vmem>>, vector<16x16x8xf32>
    tpu.vector_store %arg10[%c0_11, %c0_12, %c0_13], %5 {strides = array<i32>} : memref<16x16x72xf32, #tpu.memory_space<vmem>>, vector<16x16x8xf32>,
    %c0_14 = arith.constant 0 : index
    %c1_15 = arith.constant 1 : index
    %c0_16 = arith.constant 0 : index
    %7 = vector.load %arg9[%c0_14, %c1_15, %c0_16] : memref<18x18x8xf32, #tpu.memory_space<vmem>>, vector<16x16x8xf32>
    %c0_17 = arith.constant 0 : index
    %c0_18 = arith.constant 0 : index
    %c8 = arith.constant 8 : index
    %8 = vector.load %arg10[%c0_17, %c0_18, %c8] : memref<16x16x72xf32, #tpu.memory_space<vmem>>, vector<16x16x8xf32>
    tpu.vector_store %arg10[%c0_17, %c0_18, %c8], %7 {strides = array<i32>} : memref<16x16x72xf32, #tpu.memory_space<vmem>>, vector<16x16x8xf32>,
    %c0_19 = arith.constant 0 : index
    %c2 = arith.constant 2 : index
    %c0_20 = arith.constant 0 : index
    %9 = vector.load %arg9[%c0_19, %c2, %c0_20] : memref<18x18x8xf32, #tpu.memory_space<vmem>>, vector<16x16x8xf32>
    %c0_21 = arith.constant 0 : index
    %c0_22 = arith.constant 0 : index
    %c16 = arith.constant 16 : index
    %10 = vector.load %arg10[%c0_21, %c0_22, %c16] : memref<16x16x72xf32, #tpu.memory_space<vmem>>, vector<16x16x8xf32>
    tpu.vector_store %arg10[%c0_21, %c0_22, %c16], %9 {strides = array<i32>} : memref<16x16x72xf32, #tpu.memory_space<vmem>>, vector<16x16x8xf32>,
    %c1_23 = arith.constant 1 : index
    %c0_24 = arith.constant 0 : index
    %c0_25 = arith.constant 0 : index
    %11 = vector.load %arg9[%c1_23, %c0_24, %c0_25] : memref<18x18x8xf32, #tpu.memory_space<vmem>>, vector<16x16x8xf32>
    %c0_26 = arith.constant 0 : index
    %c0_27 = arith.constant 0 : index
    %c24 = arith.constant 24 : index
    %12 = vector.load %arg10[%c0_26, %c0_27, %c24] : memref<16x16x72xf32, #tpu.memory_space<vmem>>, vector<16x16x8xf32>
    tpu.vector_store %arg10[%c0_26, %c0_27, %c24], %11 {strides = array<i32>} : memref<16x16x72xf32, #tpu.memory_space<vmem>>, vector<16x16x8xf32>,
    %c1_28 = arith.constant 1 : index
    %c1_29 = arith.constant 1 : index
    %c0_30 = arith.constant 0 : index
    %13 = vector.load %arg9[%c1_28, %c1_29, %c0_30] : memref<18x18x8xf32, #tpu.memory_space<vmem>>, vector<16x16x8xf32>
    %c0_31 = arith.constant 0 : index
    %c0_32 = arith.constant 0 : index
    %c32 = arith.constant 32 : index
    %14 = vector.load %arg10[%c0_31, %c0_32, %c32] : memref<16x16x72xf32, #tpu.memory_space<vmem>>, vector<16x16x8xf32>
    tpu.vector_store %arg10[%c0_31, %c0_32, %c32], %13 {strides = array<i32>} : memref<16x16x72xf32, #tpu.memory_space<vmem>>, vector<16x16x8xf32>,
    %c1_33 = arith.constant 1 : index
    %c2_34 = arith.constant 2 : index
    %c0_35 = arith.constant 0 : index
    %15 = vector.load %arg9[%c1_33, %c2_34, %c0_35] : memref<18x18x8xf32, #tpu.memory_space<vmem>>, vector<16x16x8xf32>
    %c0_36 = arith.constant 0 : index
    %c0_37 = arith.constant 0 : index
    %c40 = arith.constant 40 : index
    %16 = vector.load %arg10[%c0_36, %c0_37, %c40] : memref<16x16x72xf32, #tpu.memory_space<vmem>>, vector<16x16x8xf32>
    tpu.vector_store %arg10[%c0_36, %c0_37, %c40], %15 {strides = array<i32>} : memref<16x16x72xf32, #tpu.memory_space<vmem>>, vector<16x16x8xf32>,
    %c2_38 = arith.constant 2 : index
    %c0_39 = arith.constant 0 : index
    %c0_40 = arith.constant 0 : index
    %17 = vector.load %arg9[%c2_38, %c0_39, %c0_40] : memref<18x18x8xf32, #tpu.memory_space<vmem>>, vector<16x16x8xf32>
    %c0_41 = arith.constant 0 : index
    %c0_42 = arith.constant 0 : index
    %c48 = arith.constant 48 : index
    %18 = vector.load %arg10[%c0_41, %c0_42, %c48] : memref<16x16x72xf32, #tpu.memory_space<vmem>>, vector<16x16x8xf32>
    tpu.vector_store %arg10[%c0_41, %c0_42, %c48], %17 {strides = array<i32>} : memref<16x16x72xf32, #tpu.memory_space<vmem>>, vector<16x16x8xf32>,
    %c2_43 = arith.constant 2 : index
    %c1_44 = arith.constant 1 : index
    %c0_45 = arith.constant 0 : index
    %19 = vector.load %arg9[%c2_43, %c1_44, %c0_45] : memref<18x18x8xf32, #tpu.memory_space<vmem>>, vector<16x16x8xf32>
    %c0_46 = arith.constant 0 : index
    %c0_47 = arith.constant 0 : index
    %c56 = arith.constant 56 : index
    %20 = vector.load %arg10[%c0_46, %c0_47, %c56] : memref<16x16x72xf32, #tpu.memory_space<vmem>>, vector<16x16x8xf32>
    tpu.vector_store %arg10[%c0_46, %c0_47, %c56], %19 {strides = array<i32>} : memref<16x16x72xf32, #tpu.memory_space<vmem>>, vector<16x16x8xf32>,
    %c2_48 = arith.constant 2 : index
    %c2_49 = arith.constant 2 : index
    %c0_50 = arith.constant 0 : index
    %21 = vector.load %arg9[%c2_48, %c2_49, %c0_50] : memref<18x18x8xf32, #tpu.memory_space<vmem>>, vector<16x16x8xf32>
    %c0_51 = arith.constant 0 : index
    %c0_52 = arith.constant 0 : index
    %c64 = arith.constant 64 : index
    %22 = vector.load %arg10[%c0_51, %c0_52, %c64] : memref<16x16x72xf32, #tpu.memory_space<vmem>>, vector<16x16x8xf32>
    tpu.vector_store %arg10[%c0_51, %c0_52, %c64], %21 {strides = array<i32>} : memref<16x16x72xf32, #tpu.memory_space<vmem>>, vector<16x16x8xf32>,
    %c0_53 = arith.constant 0 : index
    %c0_54 = arith.constant 0 : index
    %c0_55 = arith.constant 0 : index
    %23 = vector.load %arg10[%c0_53, %c0_54, %c0_55] : memref<16x16x72xf32, #tpu.memory_space<vmem>>, vector<16x16x72xf32>
    %24 = vector.shape_cast %23 : vector<16x16x72xf32> to vector<256x72xf32>
    %c0_56 = arith.constant 0 : index
    %c0_57 = arith.constant 0 : index
    %25 = vector.load %arg2[%c0_56, %c0_57] : memref<72x8xf32, #tpu.memory_space<vmem>>, vector<72x8xf32>
    %cst_58 = arith.constant dense<0.000000e+00> : vector<256x8xf32>
    %26 = tpu.matmul %24, %25, %cst_58 {dimension_numbers = #tpu.dot_dimension_numbers<[1], [0], [0], [1], [0, 0, 1, 1], [], []>} : vector<256x72xf32>, vector<72x8xf32>, vector<256x8xf32> -> vector<256x8xf32>
    %c0_59 = arith.constant 0 : index
    %c0_60 = arith.constant 0 : index
    %27 = vector.load %arg3[%c0_59, %c0_60] : memref<1x8xf32, #tpu.memory_space<vmem>>, vector<1x8xf32>
    %28 = vector.broadcast %27 : vector<1x8xf32> to vector<256x8xf32>
    %29 = arith.mulf %26, %28 : vector<256x8xf32>
    %c0_61 = arith.constant 0 : index
    %c0_62 = arith.constant 0 : index
    %30 = vector.load %arg4[%c0_61, %c0_62] : memref<1x8xf32, #tpu.memory_space<vmem>>, vector<1x8xf32>
    %31 = vector.broadcast %30 : vector<1x8xf32> to vector<256x8xf32>
    %32 = arith.addf %29, %31 : vector<256x8xf32>
    %33 = arith.negf %32 : vector<256x8xf32>
    %34 = math.exp %33 : vector<256x8xf32>
    %cst_63 = arith.constant 1.000000e+00 : f32
    %35 = vector.broadcast %cst_63 : f32 to vector<256x8xf32>
    %36 = arith.addf %35, %34 : vector<256x8xf32>
    %37 = arith.divf %35, %36 : vector<256x8xf32>
    %38 = arith.mulf %32, %37 : vector<256x8xf32>
    %cst_64 = arith.constant 0.000000e+00 : f32
    %39 = vector.broadcast %cst_64 : f32 to vector<18x18x8xf32>
    %c0_65 = arith.constant 0 : index
    %c0_66 = arith.constant 0 : index
    %c0_67 = arith.constant 0 : index
    %40 = vector.load %arg11[%c0_65, %c0_66, %c0_67] : memref<18x18x8xf32, #tpu.memory_space<vmem>>, vector<18x18x8xf32>
    tpu.vector_store %arg11[%c0_65, %c0_66, %c0_67], %39 {strides = array<i32>} : memref<18x18x8xf32, #tpu.memory_space<vmem>>, vector<18x18x8xf32>,
    %41 = vector.shape_cast %38 : vector<256x8xf32> to vector<16x16x8xf32>
    %c1_68 = arith.constant 1 : index
    %c1_69 = arith.constant 1 : index
    %c0_70 = arith.constant 0 : index
    %42 = vector.load %arg11[%c1_68, %c1_69, %c0_70] : memref<18x18x8xf32, #tpu.memory_space<vmem>>, vector<16x16x8xf32>
    tpu.vector_store %arg11[%c1_68, %c1_69, %c0_70], %41 {strides = array<i32>} : memref<18x18x8xf32, #tpu.memory_space<vmem>>, vector<16x16x8xf32>,
    %c0_71 = arith.constant 0 : index
    %c0_72 = arith.constant 0 : index
    %c0_73 = arith.constant 0 : index
    %43 = vector.load %arg11[%c0_71, %c0_72, %c0_73] : memref<18x18x8xf32, #tpu.memory_space<vmem>>, vector<16x16x8xf32>
    %c0_74 = arith.constant 0 : index
    %c0_75 = arith.constant 0 : index
    %c0_76 = arith.constant 0 : index
    %44 = vector.load %arg12[%c0_74, %c0_75, %c0_76] : memref<16x16x72xf32, #tpu.memory_space<vmem>>, vector<16x16x8xf32>
    tpu.vector_store %arg12[%c0_74, %c0_75, %c0_76], %43 {strides = array<i32>} : memref<16x16x72xf32, #tpu.memory_space<vmem>>, vector<16x16x8xf32>,
    %c0_77 = arith.constant 0 : index
    %c1_78 = arith.constant 1 : index
    %c0_79 = arith.constant 0 : index
    %45 = vector.load %arg11[%c0_77, %c1_78, %c0_79] : memref<18x18x8xf32, #tpu.memory_space<vmem>>, vector<16x16x8xf32>
    %c0_80 = arith.constant 0 : index
    %c0_81 = arith.constant 0 : index
    %c8_82 = arith.constant 8 : index
    %46 = vector.load %arg12[%c0_80, %c0_81, %c8_82] : memref<16x16x72xf32, #tpu.memory_space<vmem>>, vector<16x16x8xf32>
    tpu.vector_store %arg12[%c0_80, %c0_81, %c8_82], %45 {strides = array<i32>} : memref<16x16x72xf32, #tpu.memory_space<vmem>>, vector<16x16x8xf32>,
    %c0_83 = arith.constant 0 : index
    %c2_84 = arith.constant 2 : index
    %c0_85 = arith.constant 0 : index
    %47 = vector.load %arg11[%c0_83, %c2_84, %c0_85] : memref<18x18x8xf32, #tpu.memory_space<vmem>>, vector<16x16x8xf32>
    %c0_86 = arith.constant 0 : index
    %c0_87 = arith.constant 0 : index
    %c16_88 = arith.constant 16 : index
    %48 = vector.load %arg12[%c0_86, %c0_87, %c16_88] : memref<16x16x72xf32, #tpu.memory_space<vmem>>, vector<16x16x8xf32>
    tpu.vector_store %arg12[%c0_86, %c0_87, %c16_88], %47 {strides = array<i32>} : memref<16x16x72xf32, #tpu.memory_space<vmem>>, vector<16x16x8xf32>,
    %c1_89 = arith.constant 1 : index
    %c0_90 = arith.constant 0 : index
    %c0_91 = arith.constant 0 : index
    %49 = vector.load %arg11[%c1_89, %c0_90, %c0_91] : memref<18x18x8xf32, #tpu.memory_space<vmem>>, vector<16x16x8xf32>
    %c0_92 = arith.constant 0 : index
    %c0_93 = arith.constant 0 : index
    %c24_94 = arith.constant 24 : index
    %50 = vector.load %arg12[%c0_92, %c0_93, %c24_94] : memref<16x16x72xf32, #tpu.memory_space<vmem>>, vector<16x16x8xf32>
    tpu.vector_store %arg12[%c0_92, %c0_93, %c24_94], %49 {strides = array<i32>} : memref<16x16x72xf32, #tpu.memory_space<vmem>>, vector<16x16x8xf32>,
    %c1_95 = arith.constant 1 : index
    %c1_96 = arith.constant 1 : index
    %c0_97 = arith.constant 0 : index
    %51 = vector.load %arg11[%c1_95, %c1_96, %c0_97] : memref<18x18x8xf32, #tpu.memory_space<vmem>>, vector<16x16x8xf32>
    %c0_98 = arith.constant 0 : index
    %c0_99 = arith.constant 0 : index
    %c32_100 = arith.constant 32 : index
    %52 = vector.load %arg12[%c0_98, %c0_99, %c32_100] : memref<16x16x72xf32, #tpu.memory_space<vmem>>, vector<16x16x8xf32>
    tpu.vector_store %arg12[%c0_98, %c0_99, %c32_100], %51 {strides = array<i32>} : memref<16x16x72xf32, #tpu.memory_space<vmem>>, vector<16x16x8xf32>,
    %c1_101 = arith.constant 1 : index
    %c2_102 = arith.constant 2 : index
    %c0_103 = arith.constant 0 : index
    %53 = vector.load %arg11[%c1_101, %c2_102, %c0_103] : memref<18x18x8xf32, #tpu.memory_space<vmem>>, vector<16x16x8xf32>
    %c0_104 = arith.constant 0 : index
    %c0_105 = arith.constant 0 : index
    %c40_106 = arith.constant 40 : index
    %54 = vector.load %arg12[%c0_104, %c0_105, %c40_106] : memref<16x16x72xf32, #tpu.memory_space<vmem>>, vector<16x16x8xf32>
    tpu.vector_store %arg12[%c0_104, %c0_105, %c40_106], %53 {strides = array<i32>} : memref<16x16x72xf32, #tpu.memory_space<vmem>>, vector<16x16x8xf32>,
    %c2_107 = arith.constant 2 : index
    %c0_108 = arith.constant 0 : index
    %c0_109 = arith.constant 0 : index
    %55 = vector.load %arg11[%c2_107, %c0_108, %c0_109] : memref<18x18x8xf32, #tpu.memory_space<vmem>>, vector<16x16x8xf32>
    %c0_110 = arith.constant 0 : index
    %c0_111 = arith.constant 0 : index
    %c48_112 = arith.constant 48 : index
    %56 = vector.load %arg12[%c0_110, %c0_111, %c48_112] : memref<16x16x72xf32, #tpu.memory_space<vmem>>, vector<16x16x8xf32>
    tpu.vector_store %arg12[%c0_110, %c0_111, %c48_112], %55 {strides = array<i32>} : memref<16x16x72xf32, #tpu.memory_space<vmem>>, vector<16x16x8xf32>,
    %c2_113 = arith.constant 2 : index
    %c1_114 = arith.constant 1 : index
    %c0_115 = arith.constant 0 : index
    %57 = vector.load %arg11[%c2_113, %c1_114, %c0_115] : memref<18x18x8xf32, #tpu.memory_space<vmem>>, vector<16x16x8xf32>
    %c0_116 = arith.constant 0 : index
    %c0_117 = arith.constant 0 : index
    %c56_118 = arith.constant 56 : index
    %58 = vector.load %arg12[%c0_116, %c0_117, %c56_118] : memref<16x16x72xf32, #tpu.memory_space<vmem>>, vector<16x16x8xf32>
    tpu.vector_store %arg12[%c0_116, %c0_117, %c56_118], %57 {strides = array<i32>} : memref<16x16x72xf32, #tpu.memory_space<vmem>>, vector<16x16x8xf32>,
    %c2_119 = arith.constant 2 : index
    %c2_120 = arith.constant 2 : index
    %c0_121 = arith.constant 0 : index
    %59 = vector.load %arg11[%c2_119, %c2_120, %c0_121] : memref<18x18x8xf32, #tpu.memory_space<vmem>>, vector<16x16x8xf32>
    %c0_122 = arith.constant 0 : index
    %c0_123 = arith.constant 0 : index
    %c64_124 = arith.constant 64 : index
    %60 = vector.load %arg12[%c0_122, %c0_123, %c64_124] : memref<16x16x72xf32, #tpu.memory_space<vmem>>, vector<16x16x8xf32>
    tpu.vector_store %arg12[%c0_122, %c0_123, %c64_124], %59 {strides = array<i32>} : memref<16x16x72xf32, #tpu.memory_space<vmem>>, vector<16x16x8xf32>,
    %c0_125 = arith.constant 0 : index
    %c0_126 = arith.constant 0 : index
    %c0_127 = arith.constant 0 : index
    %61 = vector.load %arg12[%c0_125, %c0_126, %c0_127] : memref<16x16x72xf32, #tpu.memory_space<vmem>>, vector<16x16x72xf32>
    %62 = vector.shape_cast %61 : vector<16x16x72xf32> to vector<256x72xf32>
    %c0_128 = arith.constant 0 : index
    %c0_129 = arith.constant 0 : index
    %63 = vector.load %arg5[%c0_128, %c0_129] : memref<72x8xf32, #tpu.memory_space<vmem>>, vector<72x8xf32>
    %cst_130 = arith.constant dense<0.000000e+00> : vector<256x8xf32>
    %64 = tpu.matmul %62, %63, %cst_130 {dimension_numbers = #tpu.dot_dimension_numbers<[1], [0], [0], [1], [0, 0, 1, 1], [], []>} : vector<256x72xf32>, vector<72x8xf32>, vector<256x8xf32> -> vector<256x8xf32>
    %c0_131 = arith.constant 0 : index
    %c0_132 = arith.constant 0 : index
    %65 = vector.load %arg6[%c0_131, %c0_132] : memref<1x8xf32, #tpu.memory_space<vmem>>, vector<1x8xf32>
    %66 = vector.broadcast %65 : vector<1x8xf32> to vector<256x8xf32>
    %67 = arith.mulf %64, %66 : vector<256x8xf32>
    %c0_133 = arith.constant 0 : index
    %c0_134 = arith.constant 0 : index
    %68 = vector.load %arg7[%c0_133, %c0_134] : memref<1x8xf32, #tpu.memory_space<vmem>>, vector<1x8xf32>
    %69 = vector.broadcast %68 : vector<1x8xf32> to vector<256x8xf32>
    %70 = arith.addf %67, %69 : vector<256x8xf32>
    %71 = vector.shape_cast %1 : vector<16x16x8xf32> to vector<256x8xf32>
    %72 = arith.addf %70, %71 : vector<256x8xf32>
    %73 = arith.negf %72 : vector<256x8xf32>
    %74 = math.exp %73 : vector<256x8xf32>
    %cst_135 = arith.constant 1.000000e+00 : f32
    %75 = vector.broadcast %cst_135 : f32 to vector<256x8xf32>
    %76 = arith.addf %75, %74 : vector<256x8xf32>
    %77 = arith.divf %75, %76 : vector<256x8xf32>
    %78 = arith.mulf %72, %77 : vector<256x8xf32>
    %79 = vector.shape_cast %78 : vector<256x8xf32> to vector<1x16x16x8xf32>
    %c0_136 = arith.constant 0 : index
    %c0_137 = arith.constant 0 : index
    %c0_138 = arith.constant 0 : index
    %c0_139 = arith.constant 0 : index
    %80 = vector.load %arg8[%c0_136, %c0_137, %c0_138, %c0_139] : memref<1x16x16x8xf32, #tpu.memory_space<vmem>>, vector<1x16x16x8xf32>
    tpu.vector_store %arg8[%c0_136, %c0_137, %c0_138, %c0_139], %79 {strides = array<i32>} : memref<1x16x16x8xf32, #tpu.memory_space<vmem>>, vector<1x16x16x8xf32>,
    return
  }
  func.func @transform_0(%arg0: i32) -> (i32, i32, i32, i32) {
    %c0_i32 = arith.constant 0 : i32
    %c0_i32_0 = arith.constant 0 : i32
    %c0_i32_1 = arith.constant 0 : i32
    %c0_i32_2 = arith.constant 0 : i32
    return %arg0, %c0_i32, %c0_i32_0, %c0_i32_1 : i32, i32, i32, i32
  }
  func.func @transform_1(%arg0: i32) -> (i32, i32) {
    %c0_i32 = arith.constant 0 : i32
    %c0_i32_0 = arith.constant 0 : i32
    %c0_i32_1 = arith.constant 0 : i32
    return %c0_i32, %c0_i32_0 : i32, i32
  }
  func.func @transform_2(%arg0: i32) -> (i32, i32) {
    %c0_i32 = arith.constant 0 : i32
    %c0_i32_0 = arith.constant 0 : i32
    %c0_i32_1 = arith.constant 0 : i32
    return %c0_i32, %c0_i32_0 : i32, i32
  }
  func.func @transform_3(%arg0: i32) -> (i32, i32) {
    %c0_i32 = arith.constant 0 : i32
    %c0_i32_0 = arith.constant 0 : i32
    %c0_i32_1 = arith.constant 0 : i32
    return %c0_i32, %c0_i32_0 : i32, i32
  }
  func.func @transform_4(%arg0: i32) -> (i32, i32) {
    %c0_i32 = arith.constant 0 : i32
    %c0_i32_0 = arith.constant 0 : i32
    %c0_i32_1 = arith.constant 0 : i32
    return %c0_i32, %c0_i32_0 : i32, i32
  }
  func.func @transform_5(%arg0: i32) -> (i32, i32) {
    %c0_i32 = arith.constant 0 : i32
    %c0_i32_0 = arith.constant 0 : i32
    %c0_i32_1 = arith.constant 0 : i32
    return %c0_i32, %c0_i32_0 : i32, i32
  }
  func.func @transform_6(%arg0: i32) -> (i32, i32) {
    %c0_i32 = arith.constant 0 : i32
    %c0_i32_0 = arith.constant 0 : i32
    %c0_i32_1 = arith.constant 0 : i32
    return %c0_i32, %c0_i32_0 : i32, i32
  }
  func.func @transform_7(%arg0: i32) -> (i32, i32, i32, i32) {
    %c0_i32 = arith.constant 0 : i32
    %c0_i32_0 = arith.constant 0 : i32
    %c0_i32_1 = arith.constant 0 : i32
    %c0_i32_2 = arith.constant 0 : i32
    return %arg0, %c0_i32, %c0_i32_0, %c0_i32_1 : i32, i32, i32, i32
  }
}

</mosaic_0001>

<llo_original>
// kernel: basic_block_forward.1
$region0: #{basic_block_forward.1}
  #allocation0 [shape = 'u32[]', space=smem, size = 0x4, offset = 0x4, fixed_abs, tag = 'smem constant byte address 0x4 - core index']
  #allocation1 [shape = 'u32[144,128]{1,0:T(1,128)}', space=vmem, size = 0x12000, scoped, tag = 'internal scratch']
  #allocation2 [shape = 'f32[18,18,8]{2,1,0:T(8,128)}', space=vmem, size = 0x36000, scoped, tag = 'scratch operand']
  #allocation3 [shape = 'f32[16,16,72]{2,1,0:T(8,128)}', space=vmem, size = 0x20000, scoped, tag = 'scratch operand']
  #allocation4 [shape = 'f32[18,18,8]{2,1,0:T(8,128)}', space=vmem, size = 0x36000, scoped, tag = 'scratch operand']
  #allocation5 [shape = 'f32[16,16,72]{2,1,0:T(8,128)}', space=vmem, size = 0x20000, scoped, tag = 'scratch operand']
  %s0 = inlined_call_operand.vmem [shape: f32[2,16,16,8], index: 0, kind: input, shape index: {}]
  %s1 = inlined_call_operand.vmem [shape: f32[72,8], index: 1, kind: input, shape index: {}]
  %s2 = inlined_call_operand.vmem [shape: f32[1,8], index: 2, kind: input, shape index: {}]
  %s3 = inlined_call_operand.vmem [shape: f32[1,8], index: 3, kind: input, shape index: {}]
  %s4 = inlined_call_operand.vmem [shape: f32[72,8], index: 4, kind: input, shape index: {}]
  %s5 = inlined_call_operand.vmem [shape: f32[1,8], index: 5, kind: input, shape index: {}]
  %s6 = inlined_call_operand.vmem [shape: f32[1,8], index: 6, kind: input, shape index: {}]
  %s7 = inlined_call_operand.vmem [shape: f32[2,16,16,8], index: 7, kind: output, shape index: {}]
  %s8 = sld [smem:[#allocation0]]
  $region61: #{basic_block_forward.1} parent=0
    _
  %s10 = ssub.s32 1, %s8
  %s11 = scalar_select 0, %s10, %s8
  loop: start=0, step=1, limit=4
  $region2: #{basic_block_forward.1} parent=0 // loop_pre_header
    _
  $region3: #{basic_block_forward.1} parent=0 // loop_header
    %s13 = sphi 0, %s17
    %p14 = scmp.ge.s32.totalorder %s13, 4
    %s23 = sphi 0, %s25
    %s26 = sphi 0, %s23
    %s27 = sphi 0, %s26
    %s43 = sphi 0, %s27
    %s47 = sphi 0, %s47
    %s49 = sphi 0, %s47
    %s50 = sphi 0, %s49
    %s64 = sphi 0, %s50
    %s68 = sphi 0, %s68
    %s70 = sphi 0, %s68
    %s71 = sphi 0, %s70
    %s85 = sphi 0, %s71
    %s89 = sphi 0, %s89
    %s91 = sphi 0, %s89
    %s92 = sphi 0, %s91
    %s106 = sphi 0, %s92
    %s110 = sphi 0, %s110
    %s112 = sphi 0, %s110
    %s113 = sphi 0, %s112
    %s127 = sphi 0, %s113
    %s131 = sphi 0, %s131
    %s133 = sphi 0, %s131
    %s134 = sphi 0, %s133
    %s148 = sphi 0, %s134
    %s152 = sphi 0, %s152
    %s154 = sphi 0, %s152
    %s155 = sphi 0, %s154
    %s169 = sphi 0, %s155
    %s175 = sphi 0, %s177
    %s178 = sphi 0, %s175
    %s179 = sphi 0, %s178
    %s195 = sphi 0, %s179
  $region4: #{basic_block_forward.1} parent=0 // loop_header_branch
    %16 = sbr.rel (%p14) target = $region8
  $region5: #{basic_block_forward.1} parent=0 // loop_body
    %s18 = ssub.s32 %s13, 1
    %s19 = ssub.s32 %s13, 2
    %s20 = sadd.s32 %s13, 1
    %s21 = ssub.s32 %s13, %s20
    %p22 = scmp.eq.s32.totalorder %s21, 0
    %s24 = sadd.s32 %s23, 1
    %s25 = scalar_select %p22, %s23, %s24
    %p28 = pneg %p22
    %p29 = scmp.eq.s32.totalorder %s13, 1
    %p30 = por %p28, %p29
    %p31 = scmp.ne.s32.totalorder %s23, %s26
    %p32 = scmp.eq.s32.totalorder %s13, 0
    %p33 = por %p31, %p32
    %p34 = scmp.ne.s32.totalorder %s23, %s26
    %p35 = scmp.eq.s32.totalorder %s18, 1
    %p36 = por %p34, %p35
    %p37 = scmp.ne.s32.totalorder %s26, %s27
    %p38 = scmp.eq.s32.totalorder %s18, 0
    %p39 = por %p37, %p38
    %p40 = scmp.ne.s32.totalorder %s26, %s27
    %p41 = scmp.eq.s32.totalorder %s19, 1
    %p42 = por %p40, %p41
    %p44 = scmp.ne.s32.totalorder %s27, %s43
    %p45 = scmp.eq.s32.totalorder %s19, 0
    %p46 = por %p44, %p45
    %s48 = sadd.s32 %s47, 1
    %p51 = scmp.eq.s32.totalorder %s13, 1
    %p52 = scmp.ne.s32.totalorder %s47, %s49
    %p53 = scmp.eq.s32.totalorder %s13, 0
    %p54 = por %p52, %p53
    %p55 = scmp.ne.s32.totalorder %s47, %s49
    %p56 = scmp.eq.s32.totalorder %s18, 1
    %p57 = por %p55, %p56
    %p58 = scmp.ne.s32.totalorder %s49, %s50
    %p59 = scmp.eq.s32.totalorder %s18, 0
    %p60 = por %p58, %p59
    %p61 = scmp.ne.s32.totalorder %s49, %s50
    %p62 = scmp.eq.s32.totalorder %s19, 1
    %p63 = por %p61, %p62
    %p65 = scmp.ne.s32.totalorder %s50, %s64
    %p66 = scmp.eq.s32.totalorder %s19, 0
    %p67 = por %p65, %p66
    %s69 = sadd.s32 %s68, 1
    %p72 = scmp.eq.s32.totalorder %s13, 1
    %p73 = scmp.ne.s32.totalorder %s68, %s70
    %p74 = scmp.eq.s32.totalorder %s13, 0
    %p75 = por %p73, %p74
    %p76 = scmp.ne.s32.totalorder %s68, %s70
    %p77 = scmp.eq.s32.totalorder %s18, 1
    %p78 = por %p76, %p77
    %p79 = scmp.ne.s32.totalorder %s70, %s71
    %p80 = scmp.eq.s32.totalorder %s18, 0
    %p81 = por %p79, %p80
    %p82 = scmp.ne.s32.totalorder %s70, %s71
    %p83 = scmp.eq.s32.totalorder %s19, 1
    %p84 = por %p82, %p83
    %p86 = scmp.ne.s32.totalorder %s71, %s85
    %p87 = scmp.eq.s32.totalorder %s19, 0
    %p88 = por %p86, %p87
    %s90 = sadd.s32 %s89, 1
    %p93 = scmp.eq.s32.totalorder %s13, 1
    %p94 = scmp.ne.s32.totalorder %s89, %s91
    %p95 = scmp.eq.s32.totalorder %s13, 0
    %p96 = por %p94, %p95
    %p97 = scmp.ne.s32.totalorder %s89, %s91
    %p98 = scmp.eq.s32.totalorder %s18, 1
    %p99 = por %p97, %p98
    %p100 = scmp.ne.s32.totalorder %s91, %s92
    %p101 = scmp.eq.s32.totalorder %s18, 0
    %p102 = por %p100, %p101
    %p103 = scmp.ne.s32.totalorder %s91, %s92
    %p104 = scmp.eq.s32.totalorder %s19, 1
    %p105 = por %p103, %p104
    %p107 = scmp.ne.s32.totalorder %s92, %s106
    %p108 = scmp.eq.s32.totalorder %s19, 0
    %p109 = por %p107, %p108
    %s111 = sadd.s32 %s110, 1
    %p114 = scmp.eq.s32.totalorder %s13, 1
    %p115 = scmp.ne.s32.totalorder %s110, %s112
    %p116 = scmp.eq.s32.totalorder %s13, 0
    %p117 = por %p115, %p116
    %p118 = scmp.ne.s32.totalorder %s110, %s112
    %p119 = scmp.eq.s32.totalorder %s18, 1
    %p120 = por %p118, %p119
    %p121 = scmp.ne.s32.totalorder %s112, %s113
    %p122 = scmp.eq.s32.totalorder %s18, 0
    %p123 = por %p121, %p122
    %p124 = scmp.ne.s32.totalorder %s112, %s113
    %p125 = scmp.eq.s32.totalorder %s19, 1
    %p126 = por %p124, %p125
    %p128 = scmp.ne.s32.totalorder %s113, %s127
    %p129 = scmp.eq.s32.totalorder %s19, 0
    %p130 = por %p128, %p129
    %s132 = sadd.s32 %s131, 1
    %p135 = scmp.eq.s32.totalorder %s13, 1
    %p136 = scmp.ne.s32.totalorder %s131, %s133
    %p137 = scmp.eq.s32.totalorder %s13, 0
    %p138 = por %p136, %p137
    %p139 = scmp.ne.s32.totalorder %s131, %s133
    %p140 = scmp.eq.s32.totalorder %s18, 1
    %p141 = por %p139, %p140
    %p142 = scmp.ne.s32.totalorder %s133, %s134
    %p143 = scmp.eq.s32.totalorder %s18, 0
    %p144 = por %p142, %p143
    %p145 = scmp.ne.s32.totalorder %s133, %s134
    %p146 = scmp.eq.s32.totalorder %s19, 1
    %p147 = por %p145, %p146
    %p149 = scmp.ne.s32.totalorder %s134, %s148
    %p150 = scmp.eq.s32.totalorder %s19, 0
    %p151 = por %p149, %p150
    %s153 = sadd.s32 %s152, 1
    %p156 = scmp.eq.s32.totalorder %s13, 1
    %p157 = scmp.ne.s32.totalorder %s152, %s154
    %p158 = scmp.eq.s32.totalorder %s13, 0
    %p159 = por %p157, %p158
    %p160 = scmp.ne.s32.totalorder %s152, %s154
    %p161 = scmp.eq.s32.totalorder %s18, 1
    %p162 = por %p160, %p161
    %p163 = scmp.ne.s32.totalorder %s154, %s155
    %p164 = scmp.eq.s32.totalorder %s18, 0
    %p165 = por %p163, %p164
    %p166 = scmp.ne.s32.totalorder %s154, %s155
    %p167 = scmp.eq.s32.totalorder %s19, 1
    %p168 = por %p166, %p167
    %p170 = scmp.ne.s32.totalorder %s155, %s169
    %p171 = scmp.eq.s32.totalorder %s19, 0
    %p172 = por %p170, %p171
    %s173 = ssub.s32 %s13, %s20
    %p174 = scmp.eq.s32.totalorder %s173, 0
    %s176 = sadd.s32 %s175, 1
    %s177 = scalar_select %p174, %s175, %s176
    %p180 = pneg %p174
    %p181 = scmp.eq.s32.totalorder %s13, 1
    %p182 = por %p180, %p181
    %p183 = scmp.ne.s32.totalorder %s175, %s178
    %p184 = scmp.eq.s32.totalorder %s13, 0
    %p185 = por %p183, %p184
    %p186 = scmp.ne.s32.totalorder %s175, %s178
    %p187 = scmp.eq.s32.totalorder %s18, 1
    %p188 = por %p186, %p187
    %p189 = scmp.ne.s32.totalorder %s178, %s179
    %p190 = scmp.eq.s32.totalorder %s18, 0
    %p191 = por %p189, %p190
    %p192 = scmp.ne.s32.totalorder %s178, %s179
    %p193 = scmp.eq.s32.totalorder %s19, 1
    %p194 = por %p192, %p193
    %p196 = scmp.ne.s32.totalorder %s179, %s195
    %p197 = scmp.eq.s32.totalorder %s19, 0
    %p198 = por %p196, %p197
    %p199 = scmp.le.s32.totalorder 1, %s13
    %p200 = scmp.lt.s32.totalorder %s13, 3
    %p201 = pnand %p199, %p200
    %p202 = pneg %p201
    // Predicated region
    $region9: #{basic_block_forward.1} parent=5 // pred_check
      _
    $region10: #{basic_block_forward.1} parent=5 // pred_check_branch
      %204 = sbr.rel (%p201) target = $region12
    $region11: #{basic_block_forward.1} parent=5 // pred_region
      %s205 = ssub.s32 %s13, 1
      // Predicated region
      $region13: #{basic_block_forward.1} parent=11 // pred_check
        %p206 = pneg %p60
      $region14: #{basic_block_forward.1} parent=11 // pred_check_branch
        %208 = sbr.rel (%p206) target = $region16
      $region15: #{basic_block_forward.1} parent=11 // pred_region
        _
      $region16: #{basic_block_forward.1} parent=11 // pred_fallthru
        _
      // Predicated region
      $region17: #{basic_block_forward.1} parent=11 // pred_check
        %p209 = pneg %p81
      $region18: #{basic_block_forward.1} parent=11 // pred_check_branch
        %211 = sbr.rel (%p209) target = $region20
      $region19: #{basic_block_forward.1} parent=11 // pred_region
        _
      $region20: #{basic_block_forward.1} parent=11 // pred_fallthru
        _
      // Predicated region
      $region21: #{basic_block_forward.1} parent=11 // pred_check
        %p212 = pneg %p102
      $region22: #{basic_block_forward.1} parent=11 // pred_check_branch
        %214 = sbr.rel (%p212) target = $region24
      $region23: #{basic_block_forward.1} parent=11 // pred_region
        _
      $region24: #{basic_block_forward.1} parent=11 // pred_fallthru
        _
      // Predicated region
      $region25: #{basic_block_forward.1} parent=11 // pred_check
        %p215 = pneg %p123
      $region26: #{basic_block_forward.1} parent=11 // pred_check_branch
        %217 = sbr.rel (%p215) target = $region28
      $region27: #{basic_block_forward.1} parent=11 // pred_region
        _
      $region28: #{basic_block_forward.1} parent=11 // pred_fallthru
        _
      // Predicated region
      $region29: #{basic_block_forward.1} parent=11 // pred_check
        %p218 = pneg %p144
      $region30: #{basic_block_forward.1} parent=11 // pred_check_branch
        %220 = sbr.rel (%p218) target = $region32
      $region31: #{basic_block_forward.1} parent=11 // pred_region
        _
      $region32: #{basic_block_forward.1} parent=11 // pred_fallthru
        _
      // Predicated region
      $region33: #{basic_block_forward.1} parent=11 // pred_check
        %p221 = pneg %p165
      $region34: #{basic_block_forward.1} parent=11 // pred_check_branch
        %223 = sbr.rel (%p221) target = $region36
      $region35: #{basic_block_forward.1} parent=11 // pred_region
        _
      $region36: #{basic_block_forward.1} parent=11 // pred_fallthru
        _
    $region12: #{basic_block_forward.1} parent=5 // pred_fallthru
      _
    %p224 = scmp.lt.s32.totalorder %s13, 2
    // Predicated region
    $region37: #{basic_block_forward.1} parent=5 // pred_check
      %p225 = pneg %p224
    $region38: #{basic_block_forward.1} parent=5 // pred_check_branch
      %227 = sbr.rel (%p225) target = $region40
    $region39: #{basic_block_forward.1} parent=5 // pred_region
      // Predicated region
      $region41: #{basic_block_forward.1} parent=39 // pred_check
        %p228 = pneg %p33
      $region42: #{basic_block_forward.1} parent=39 // pred_check_branch
        %230 = sbr.rel (%p228) target = $region44
      $region43: #{basic_block_forward.1} parent=39 // pred_region
        %p231 = scmp.lt.s32.totalorder %s13, 1
        %s232 = scalar_select %p231, %s13, 1
        %s233 = smul.addr %s232, 32
        %s234 = smul.addr %s233, 8
        %s235 = scalar_lea.vmem %s0, %s234
      $region44: #{basic_block_forward.1} parent=39 // pred_fallthru
        _
    $region40: #{basic_block_forward.1} parent=5 // pred_fallthru
      _
    %p236 = scmp.le.s32.totalorder 1, %s13
    %p237 = scmp.lt.s32.totalorder %s13, 3
    %p238 = pnand %p236, %p237
    %p239 = pneg %p238
    // Predicated region
    $region45: #{basic_block_forward.1} parent=5 // pred_check
      _
    $region46: #{basic_block_forward.1} parent=5 // pred_check_branch
      %241 = sbr.rel (%p238) target = $region48
    $region47: #{basic_block_forward.1} parent=5 // pred_region
      %s242 = ssub.s32 %s13, 1
      %p243 = scmp.lt.s32.totalorder %s18, 1
      %s244 = scalar_select %p243, %s18, 1
      %s245 = smul.addr %s244, 32
      %s246 = smul.addr %s245, 8
      %s247 = scalar_lea.vmem %s0, %s246
      %p248 = pneg %p39
      %p249 = pneg %p36
      %p250 = pneg %p60
      %p251 = pneg %p57
      %p252 = pneg %p81
      %p253 = pneg %p78
      %p254 = pneg %p102
      %p255 = pneg %p99
      %p256 = pneg %p123
      %p257 = pneg %p120
      %p258 = pneg %p144
      %p259 = pneg %p141
      %p260 = pneg %p165
      %p261 = pneg %p162
      %p262 = pneg %p191
      %p263 = pneg %p188
      %p264 = scmp.lt.s32.totalorder %s18, 1
      %s265 = scalar_select %p264, %s18, 1
      %s266 = smul.addr %s265, 32
      %s267 = smul.addr %s266, 8
      %s268 = scalar_lea.vmem %s7, %s267
      %p269 = scmp.lt.s32.totalorder %s18, 1
      %s270 = scalar_select %p269, %s18, 1
      %s271 = smul.addr %s270, 32
      %s272 = smul.addr %s271, 8
      %s273 = scalar_lea.vmem %s0, %s272
      %p274 = scmp.lt.s32.totalorder %s18, 1
      %s275 = scalar_select %p274, %s18, 1
      %s276 = smul.addr %s275, 32
      %s277 = smul.addr %s276, 8
      %s278 = scalar_lea.vmem %s7, %s277
      %v279 = vld [vmem:[%s273] sm:$0xff]
      %v280 = vld [vmem:[%s273 + $0x8] sm:$0xff]
      %v281 = vld [vmem:[%s273 + $0x10] sm:$0xff]
      %v282 = vld [vmem:[%s273 + $0x18] sm:$0xff]
      %v283 = vld [vmem:[%s273 + $0x20] sm:$0xff]
      %v284 = vld [vmem:[%s273 + $0x28] sm:$0xff]
      %v285 = vld [vmem:[%s273 + $0x30] sm:$0xff]
      %v286 = vld [vmem:[%s273 + $0x38] sm:$0xff]
      %v287 = vld [vmem:[%s273 + $0x40] sm:$0xff]
      %v288 = vld [vmem:[%s273 + $0x48] sm:$0xff]
      %v289 = vld [vmem:[%s273 + $0x50] sm:$0xff]
      %v290 = vld [vmem:[%s273 + $0x58] sm:$0xff]
      %v291 = vld [vmem:[%s273 + $0x60] sm:$0xff]
      %v292 = vld [vmem:[%s273 + $0x68] sm:$0xff]
      %v293 = vld [vmem:[%s273 + $0x70] sm:$0xff]
      %v294 = vld [vmem:[%s273 + $0x78] sm:$0xff]
      %v295 = vld [vmem:[%s273 + $0x80] sm:$0xff]
      %v296 = vld [vmem:[%s273 + $0x88] sm:$0xff]
      %v297 = vld [vmem:[%s273 + $0x90] sm:$0xff]
      %v298 = vld [vmem:[%s273 + $0x98] sm:$0xff]
      %v299 = vld [vmem:[%s273 + $0xa0] sm:$0xff]
      %v300 = vld [vmem:[%s273 + $0xa8] sm:$0xff]
      %v301 = vld [vmem:[%s273 + $0xb0] sm:$0xff]
      %v302 = vld [vmem:[%s273 + $0xb8] sm:$0xff]
      %v303 = vld [vmem:[%s273 + $0xc0] sm:$0xff]
      %v304 = vld [vmem:[%s273 + $0xc8] sm:$0xff]
      %v305 = vld [vmem:[%s273 + $0xd0] sm:$0xff]
      %v306 = vld [vmem:[%s273 + $0xd8] sm:$0xff]
      %v307 = vld [vmem:[%s273 + $0xe0] sm:$0xff]
      %v308 = vld [vmem:[%s273 + $0xe8] sm:$0xff]
      %v309 = vld [vmem:[%s273 + $0xf0] sm:$0xff]
      %v310 = vld [vmem:[%s273 + $0xf8] sm:$0xff]
      %vm311 = vcmask 64512
      %312 = vst.msk [vmem:[#allocation2] sm:$0xff] %vm311, 0.0
      %313 = vst.msk [vmem:[#allocation2 + $0x8] sm:$0xff] %vm311, 0.0
      %vm314 = vcmask 58368
      %315 = vst.msk [vmem:[#allocation2 + $0x10] sm:$0x3] %vm314, 0.0
      %316 = vst.msk [vmem:[#allocation2 + $0x18] sm:$0xff] %vm311, 0.0
      %317 = vst.msk [vmem:[#allocation2 + $0x20] sm:$0xff] %vm311, 0.0
      %318 = vst.msk [vmem:[#allocation2 + $0x28] sm:$0x3] %vm314, 0.0
      %319 = vst.msk [vmem:[#allocation2 + $0x30] sm:$0xff] %vm311, 0.0
      %320 = vst.msk [vmem:[#allocation2 + $0x38] sm:$0xff] %vm311, 0.0
      %321 = vst.msk [vmem:[#allocation2 + $0x40] sm:$0x3] %vm314, 0.0
      %322 = vst.msk [vmem:[#allocation2 + $0x48] sm:$0xff] %vm311, 0.0
      %323 = vst.msk [vmem:[#allocation2 + $0x50] sm:$0xff] %vm311, 0.0
      %324 = vst.msk [vmem:[#allocation2 + $0x58] sm:$0x3] %vm314, 0.0
      %325 = vst.msk [vmem:[#allocation2 + $0x60] sm:$0xff] %vm311, 0.0
      %326 = vst.msk [vmem:[#allocation2 + $0x68] sm:$0xff] %vm311, 0.0
      %327 = vst.msk [vmem:[#allocation2 + $0x70] sm:$0x3] %vm314, 0.0
      %328 = vst.msk [vmem:[#allocation2 + $0x78] sm:$0xff] %vm311, 0.0
      %329 = vst.msk [vmem:[#allocation2 + $0x80] sm:$0xff] %vm311, 0.0
      %330 = vst.msk [vmem:[#allocation2 + $0x88] sm:$0x3] %vm314, 0.0
      %331 = vst.msk [vmem:[#allocation2 + $0x90] sm:$0xff] %vm311, 0.0
      %332 = vst.msk [vmem:[#allocation2 + $0x98] sm:$0xff] %vm311, 0.0
      %333 = vst.msk [vmem:[#allocation2 + $0xa0] sm:$0x3] %vm314, 0.0
      %334 = vst.msk [vmem:[#allocation2 + $0xa8] sm:$0xff] %vm311, 0.0
      %335 = vst.msk [vmem:[#allocation2 + $0xb0] sm:$0xff] %vm311, 0.0
      %336 = vst.msk [vmem:[#allocation2 + $0xb8] sm:$0x3] %vm314, 0.0
      %337 = vst.msk [vmem:[#allocation2 + $0xc0] sm:$0xff] %vm311, 0.0
      %338 = vst.msk [vmem:[#allocation2 + $0xc8] sm:$0xff] %vm311, 0.0
      %339 = vst.msk [vmem:[#allocation2 + $0xd0] sm:$0x3] %vm314, 0.0
      %340 = vst.msk [vmem:[#allocation2 + $0xd8] sm:$0xff] %vm311, 0.0
      %341 = vst.msk [vmem:[#allocation2 + $0xe0] sm:$0xff] %vm311, 0.0
      %342 = vst.msk [vmem:[#allocation2 + $0xe8] sm:$0x3] %vm314, 0.0
      %343 = vst.msk [vmem:[#allocation2 + $0xf0] sm:$0xff] %vm311, 0.0
      %344 = vst.msk [vmem:[#allocation2 + $0xf8] sm:$0xff] %vm311, 0.0
      %345 = vst.msk [vmem:[#allocation2 + $0x100] sm:$0x3] %vm314, 0.0
      %346 = vst.msk [vmem:[#allocation2 + $0x108] sm:$0xff] %vm311, 0.0
      %347 = vst.msk [vmem:[#allocation2 + $0x110] sm:$0xff] %vm311, 0.0
      %348 = vst.msk [vmem:[#allocation2 + $0x118] sm:$0x3] %vm314, 0.0
      %349 = vst.msk [vmem:[#allocation2 + $0x120] sm:$0xff] %vm311, 0.0
      %350 = vst.msk [vmem:[#allocation2 + $0x128] sm:$0xff] %vm311, 0.0
      %351 = vst.msk [vmem:[#allocation2 + $0x130] sm:$0x3] %vm314, 0.0
      %352 = vst.msk [vmem:[#allocation2 + $0x138] sm:$0xff] %vm311, 0.0
      %353 = vst.msk [vmem:[#allocation2 + $0x140] sm:$0xff] %vm311, 0.0
      %354 = vst.msk [vmem:[#allocation2 + $0x148] sm:$0x3] %vm314, 0.0
      %355 = vst.msk [vmem:[#allocation2 + $0x150] sm:$0xff] %vm311, 0.0
      %356 = vst.msk [vmem:[#allocation2 + $0x158] sm:$0xff] %vm311, 0.0
      %357 = vst.msk [vmem:[#allocation2 + $0x160] sm:$0x3] %vm314, 0.0
      %358 = vst.msk [vmem:[#allocation2 + $0x168] sm:$0xff] %vm311, 0.0
      %359 = vst.msk [vmem:[#allocation2 + $0x170] sm:$0xff] %vm311, 0.0
      %360 = vst.msk [vmem:[#allocation2 + $0x178] sm:$0x3] %vm314, 0.0
      %361 = vst.msk [vmem:[#allocation2 + $0x180] sm:$0xff] %vm311, 0.0
      %362 = vst.msk [vmem:[#allocation2 + $0x188] sm:$0xff] %vm311, 0.0
      %363 = vst.msk [vmem:[#allocation2 + $0x190] sm:$0x3] %vm314, 0.0
      %364 = vst.msk [vmem:[#allocation2 + $0x198] sm:$0xff] %vm311, 0.0
      %365 = vst.msk [vmem:[#allocation2 + $0x1a0] sm:$0xff] %vm311, 0.0
      %366 = vst.msk [vmem:[#allocation2 + $0x1a8] sm:$0x3] %vm314, 0.0
      %s367 = scalar_lea.vmem [#allocation2], 24
      %368 = vst.msk [vmem:[%s367 + $0x1] sm:$0xff] %vm311, %v279
      %369 = vst.msk [vmem:[%s367 + $0x9] sm:$0xff] %vm311, %v280
      %370 = vst.msk [vmem:[%s367 + $0x19] sm:$0xff] %vm311, %v281
      %371 = vst.msk [vmem:[%s367 + $0x21] sm:$0xff] %vm311, %v282
      %372 = vst.msk [vmem:[%s367 + $0x31] sm:$0xff] %vm311, %v283
      %373 = vst.msk [vmem:[%s367 + $0x39] sm:$0xff] %vm311, %v284
      %374 = vst.msk [vmem:[%s367 + $0x49] sm:$0xff] %vm311, %v285
      %375 = vst.msk [vmem:[%s367 + $0x51] sm:$0xff] %vm311, %v286
      %376 = vst.msk [vmem:[%s367 + $0x61] sm:$0xff] %vm311, %v287
      %377 = vst.msk [vmem:[%s367 + $0x69] sm:$0xff] %vm311, %v288
      %378 = vst.msk [vmem:[%s367 + $0x79] sm:$0xff] %vm311, %v289
      %379 = vst.msk [vmem:[%s367 + $0x81] sm:$0xff] %vm311, %v290
      %380 = vst.msk [vmem:[%s367 + $0x91] sm:$0xff] %vm311, %v291
      %381 = vst.msk [vmem:[%s367 + $0x99] sm:$0xff] %vm311, %v292
      %382 = vst.msk [vmem:[%s367 + $0xa9] sm:$0xff] %vm311, %v293
      %383 = vst.msk [vmem:[%s367 + $0xb1] sm:$0xff] %vm311, %v294
      %384 = vst.msk [vmem:[%s367 + $0xc1] sm:$0xff] %vm311, %v295
      %385 = vst.msk [vmem:[%s367 + $0xc9] sm:$0xff] %vm311, %v296
      %386 = vst.msk [vmem:[%s367 + $0xd9] sm:$0xff] %vm311, %v297
      %387 = vst.msk [vmem:[%s367 + $0xe1] sm:$0xff] %vm311, %v298
      %388 = vst.msk [vmem:[%s367 + $0xf1] sm:$0xff] %vm311, %v299
      %389 = vst.msk [vmem:[%s367 + $0xf9] sm:$0xff] %vm311, %v300
      %390 = vst.msk [vmem:[%s367 + $0x109] sm:$0xff] %vm311, %v301
      %391 = vst.msk [vmem:[%s367 + $0x111] sm:$0xff] %vm311, %v302
      %392 = vst.msk [vmem:[%s367 + $0x121] sm:$0xff] %vm311, %v303
      %393 = vst.msk [vmem:[%s367 + $0x129] sm:$0xff] %vm311, %v304
      %394 = vst.msk [vmem:[%s367 + $0x139] sm:$0xff] %vm311, %v305
      %395 = vst.msk [vmem:[%s367 + $0x141] sm:$0xff] %vm311, %v306
      %396 = vst.msk [vmem:[%s367 + $0x151] sm:$0xff] %vm311, %v307
      %397 = vst.msk [vmem:[%s367 + $0x159] sm:$0xff] %vm311, %v308
      %398 = vst.msk [vmem:[%s367 + $0x169] sm:$0xff] %vm311, %v309
      %399 = vst.msk [vmem:[%s367 + $0x171] sm:$0xff] %vm311, %v310
      %v400 = vld [vmem:[#allocation2] sm:$0xff]
      %v401 = vld [vmem:[#allocation2 + $0x8] sm:$0xff]
      %v402 = vld [vmem:[#allocation2 + $0x18] sm:$0xff]
      %v403 = vld [vmem:[#allocation2 + $0x20] sm:$0xff]
      %v404 = vld [vmem:[#allocation2 + $0x30] sm:$0xff]
      %v405 = vld [vmem:[#allocation2 + $0x38] sm:$0xff]
      %v406 = vld [vmem:[#allocation2 + $0x48] sm:$0xff]
      %v407 = vld [vmem:[#allocation2 + $0x50] sm:$0xff]
      %v408 = vld [vmem:[#allocation2 + $0x60] sm:$0xff]
      %v409 = vld [vmem:[#allocation2 + $0x68] sm:$0xff]
      %v410 = vld [vmem:[#allocation2 + $0x78] sm:$0xff]
      %v411 = vld [vmem:[#allocation2 + $0x80] sm:$0xff]
      %v412 = vld [vmem:[#allocation2 + $0x90] sm:$0xff]
      %v413 = vld [vmem:[#allocation2 + $0x98] sm:$0xff]
      %v414 = vld [vmem:[#allocation2 + $0xa8] sm:$0xff]
      %v415 = vld [vmem:[#allocation2 + $0xb0] sm:$0xff]
      %v416 = vld [vmem:[#allocation2 + $0xc0] sm:$0xff]
      %v417 = vld [vmem:[#allocation2 + $0xc8] sm:$0xff]
      %v418 = vld [vmem:[#allocation2 + $0xd8] sm:$0xff]
      %v419 = vld [vmem:[#allocation2 + $0xe0] sm:$0xff]
      %v420 = vld [vmem:[#allocation2 + $0xf0] sm:$0xff]
      %v421 = vld [vmem:[#allocation2 + $0xf8] sm:$0xff]
      %v422 = vld [vmem:[#allocation2 + $0x108] sm:$0xff]
      %v423 = vld [vmem:[#allocation2 + $0x110] sm:$0xff]
      %v424 = vld [vmem:[#allocation2 + $0x120] sm:$0xff]
      %v425 = vld [vmem:[#allocation2 + $0x128] sm:$0xff]
      %v426 = vld [vmem:[#allocation2 + $0x138] sm:$0xff]
      %v427 = vld [vmem:[#allocation2 + $0x140] sm:$0xff]
      %v428 = vld [vmem:[#allocation2 + $0x150] sm:$0xff]
      %v429 = vld [vmem:[#allocation2 + $0x158] sm:$0xff]
      %v430 = vld [vmem:[#allocation2 + $0x168] sm:$0xff]
      %v431 = vld [vmem:[#allocation2 + $0x170] sm:$0xff]
      %432 = vst.msk [vmem:[#allocation3] sm:$0xff] %vm311, %v400
      %433 = vst.msk [vmem:[#allocation3 + $0x8] sm:$0xff] %vm311, %v401
      %434 = vst.msk [vmem:[#allocation3 + $0x10] sm:$0xff] %vm311, %v402
      %435 = vst.msk [vmem:[#allocation3 + $0x18] sm:$0xff] %vm311, %v403
      %436 = vst.msk [vmem:[#allocation3 + $0x20] sm:$0xff] %vm311, %v404
      %437 = vst.msk [vmem:[#allocation3 + $0x28] sm:$0xff] %vm311, %v405
      %438 = vst.msk [vmem:[#allocation3 + $0x30] sm:$0xff] %vm311, %v406
      %439 = vst.msk [vmem:[#allocation3 + $0x38] sm:$0xff] %vm311, %v407
      %440 = vst.msk [vmem:[#allocation3 + $0x40] sm:$0xff] %vm311, %v408
      %441 = vst.msk [vmem:[#allocation3 + $0x48] sm:$0xff] %vm311, %v409
      %442 = vst.msk [vmem:[#allocation3 + $0x50] sm:$0xff] %vm311, %v410
      %443 = vst.msk [vmem:[#allocation3 + $0x58] sm:$0xff] %vm311, %v411
      %444 = vst.msk [vmem:[#allocation3 + $0x60] sm:$0xff] %vm311, %v412
      %445 = vst.msk [vmem:[#allocation3 + $0x68] sm:$0xff] %vm311, %v413
      %446 = vst.msk [vmem:[#allocation3 + $0x70] sm:$0xff] %vm311, %v414
      %447 = vst.msk [vmem:[#allocation3 + $0x78] sm:$0xff] %vm311, %v415
      %448 = vst.msk [vmem:[#allocation3 + $0x80] sm:$0xff] %vm311, %v416
      %449 = vst.msk [vmem:[#allocation3 + $0x88] sm:$0xff] %vm311, %v417
      %450 = vst.msk [vmem:[#allocation3 + $0x90] sm:$0xff] %vm311, %v418
      %451 = vst.msk [vmem:[#allocation3 + $0x98] sm:$0xff] %vm311, %v419
      %452 = vst.msk [vmem:[#allocation3 + $0xa0] sm:$0xff] %vm311, %v420
      %453 = vst.msk [vmem:[#allocation3 + $0xa8] sm:$0xff] %vm311, %v421
      %454 = vst.msk [vmem:[#allocation3 + $0xb0] sm:$0xff] %vm311, %v422
      %455 = vst.msk [vmem:[#allocation3 + $0xb8] sm:$0xff] %vm311, %v423
      %456 = vst.msk [vmem:[#allocation3 + $0xc0] sm:$0xff] %vm311, %v424
      %457 = vst.msk [vmem:[#allocation3 + $0xc8] sm:$0xff] %vm311, %v425
      %458 = vst.msk [vmem:[#allocation3 + $0xd0] sm:$0xff] %vm311, %v426
      %459 = vst.msk [vmem:[#allocation3 + $0xd8] sm:$0xff] %vm311, %v427
      %460 = vst.msk [vmem:[#allocation3 + $0xe0] sm:$0xff] %vm311, %v428
      %461 = vst.msk [vmem:[#allocation3 + $0xe8] sm:$0xff] %vm311, %v429
      %462 = vst.msk [vmem:[#allocation3 + $0xf0] sm:$0xff] %vm311, %v430
      %463 = vst.msk [vmem:[#allocation3 + $0xf8] sm:$0xff] %vm311, %v431
      %v464 = vld [vmem:[#allocation2 + $0x1] sm:$0xff]
      %v465 = vld [vmem:[#allocation2 + $0x9] sm:$0xff]
      %v466 = vld [vmem:[#allocation2 + $0x19] sm:$0xff]
      %v467 = vld [vmem:[#allocation2 + $0x21] sm:$0xff]
      %v468 = vld [vmem:[#allocation2 + $0x31] sm:$0xff]
      %v469 = vld [vmem:[#allocation2 + $0x39] sm:$0xff]
      %v470 = vld [vmem:[#allocation2 + $0x49] sm:$0xff]
      %v471 = vld [vmem:[#allocation2 + $0x51] sm:$0xff]
      %v472 = vld [vmem:[#allocation2 + $0x61] sm:$0xff]
      %v473 = vld [vmem:[#allocation2 + $0x69] sm:$0xff]
      %v474 = vld [vmem:[#allocation2 + $0x79] sm:$0xff]
      %v475 = vld [vmem:[#allocation2 + $0x81] sm:$0xff]
      %v476 = vld [vmem:[#allocation2 + $0x91] sm:$0xff]
      %v477 = vld [vmem:[#allocation2 + $0x99] sm:$0xff]
      %v478 = vld [vmem:[#allocation2 + $0xa9] sm:$0xff]
      %v479 = vld [vmem:[#allocation2 + $0xb1] sm:$0xff]
      %v480 = vld [vmem:[#allocation2 + $0xc1] sm:$0xff]
      %v481 = vld [vmem:[#allocation2 + $0xc9] sm:$0xff]
      %v482 = vld [vmem:[#allocation2 + $0xd9] sm:$0xff]
      %v483 = vld [vmem:[#allocation2 + $0xe1] sm:$0xff]
      %v484 = vld [vmem:[#allocation2 + $0xf1] sm:$0xff]
      %v485 = vld [vmem:[#allocation2 + $0xf9] sm:$0xff]
      %v486 = vld [vmem:[#allocation2 + $0x109] sm:$0xff]
      %v487 = vld [vmem:[#allocation2 + $0x111] sm:$0xff]
      %v488 = vld [vmem:[#allocation2 + $0x121] sm:$0xff]
      %v489 = vld [vmem:[#allocation2 + $0x129] sm:$0xff]
      %v490 = vld [vmem:[#allocation2 + $0x139] sm:$0xff]
      %v491 = vld [vmem:[#allocation2 + $0x141] sm:$0xff]
      %v492 = vld [vmem:[#allocation2 + $0x151] sm:$0xff]
      %v493 = vld [vmem:[#allocation2 + $0x159] sm:$0xff]
      %v494 = vld [vmem:[#allocation2 + $0x169] sm:$0xff]
      %v495 = vld [vmem:[#allocation2 + $0x171] sm:$0xff]
      %528 = vrot.lane.b32.xlu0 %v464, 8
      %v529 = vpop.permute.xlu0 %528
      %530 = vrot.lane.b32.xlu0 %v465, 8
      %v531 = vpop.permute.xlu0 %530
      %532 = vrot.lane.b32.xlu0 %v466, 8
      %v533 = vpop.permute.xlu0 %532
      %534 = vrot.lane.b32.xlu0 %v467, 8
      %v535 = vpop.permute.xlu0 %534
      %536 = vrot.lane.b32.xlu0 %v468, 8
      %v537 = vpop.permute.xlu0 %536
      %538 = vrot.lane.b32.xlu0 %v469, 8
      %v539 = vpop.permute.xlu0 %538
      %540 = vrot.lane.b32.xlu0 %v470, 8
      %v541 = vpop.permute.xlu0 %540
      %542 = vrot.lane.b32.xlu0 %v471, 8
      %v543 = vpop.permute.xlu0 %542
      %544 = vrot.lane.b32.xlu0 %v472, 8
      %v545 = vpop.permute.xlu0 %544
      %546 = vrot.lane.b32.xlu0 %v473, 8
      %v547 = vpop.permute.xlu0 %546
      %548 = vrot.lane.b32.xlu0 %v474, 8
      %v549 = vpop.permute.xlu0 %548
      %550 = vrot.lane.b32.xlu0 %v475, 8
      %v551 = vpop.permute.xlu0 %550
      %552 = vrot.lane.b32.xlu0 %v476, 8
      %v553 = vpop.permute.xlu0 %552
      %554 = vrot.lane.b32.xlu0 %v477, 8
      %v555 = vpop.permute.xlu0 %554
      %556 = vrot.lane.b32.xlu0 %v478, 8
      %v557 = vpop.permute.xlu0 %556
      %558 = vrot.lane.b32.xlu0 %v479, 8
      %v559 = vpop.permute.xlu0 %558
      %560 = vrot.lane.b32.xlu0 %v480, 8
      %v561 = vpop.permute.xlu0 %560
      %562 = vrot.lane.b32.xlu0 %v481, 8
      %v563 = vpop.permute.xlu0 %562
      %564 = vrot.lane.b32.xlu0 %v482, 8
      %v565 = vpop.permute.xlu0 %564
      %566 = vrot.lane.b32.xlu0 %v483, 8
      %v567 = vpop.permute.xlu0 %566
      %568 = vrot.lane.b32.xlu0 %v484, 8
      %v569 = vpop.permute.xlu0 %568
      %570 = vrot.lane.b32.xlu0 %v485, 8
      %v571 = vpop.permute.xlu0 %570
      %572 = vrot.lane.b32.xlu0 %v486, 8
      %v573 = vpop.permute.xlu0 %572
      %574 = vrot.lane.b32.xlu0 %v487, 8
      %v575 = vpop.permute.xlu0 %574
      %576 = vrot.lane.b32.xlu0 %v488, 8
      %v577 = vpop.permute.xlu0 %576
      %578 = vrot.lane.b32.xlu0 %v489, 8
      %v579 = vpop.permute.xlu0 %578
      %580 = vrot.lane.b32.xlu0 %v490, 8
      %v581 = vpop.permute.xlu0 %580
      %582 = vrot.lane.b32.xlu0 %v491, 8
      %v583 = vpop.permute.xlu0 %582
      %584 = vrot.lane.b32.xlu0 %v492, 8
      %v585 = vpop.permute.xlu0 %584
      %586 = vrot.lane.b32.xlu0 %v493, 8
      %v587 = vpop.permute.xlu0 %586
      %588 = vrot.lane.b32.xlu0 %v494, 8
      %v589 = vpop.permute.xlu0 %588
      %590 = vrot.lane.b32.xlu0 %v495, 8
      %v591 = vpop.permute.xlu0 %590
      %vm624 = vcmask 130112
      %625 = vst.msk [vmem:[#allocation3] sm:$0xff] %vm624, %v529
      %626 = vst.msk [vmem:[#allocation3 + $0x8] sm:$0xff] %vm624, %v531
      %627 = vst.msk [vmem:[#allocation3 + $0x10] sm:$0xff] %vm624, %v533
      %628 = vst.msk [vmem:[#allocation3 + $0x18] sm:$0xff] %vm624, %v535
      %629 = vst.msk [vmem:[#allocation3 + $0x20] sm:$0xff] %vm624, %v537
      %630 = vst.msk [vmem:[#allocation3 + $0x28] sm:$0xff] %vm624, %v539
      %631 = vst.msk [vmem:[#allocation3 + $0x30] sm:$0xff] %vm624, %v541
      %632 = vst.msk [vmem:[#allocation3 + $0x38] sm:$0xff] %vm624, %v543
      %633 = vst.msk [vmem:[#allocation3 + $0x40] sm:$0xff] %vm624, %v545
      %634 = vst.msk [vmem:[#allocation3 + $0x48] sm:$0xff] %vm624, %v547
      %635 = vst.msk [vmem:[#allocation3 + $0x50] sm:$0xff] %vm624, %v549
      %636 = vst.msk [vmem:[#allocation3 + $0x58] sm:$0xff] %vm624, %v551
      %637 = vst.msk [vmem:[#allocation3 + $0x60] sm:$0xff] %vm624, %v553
      %638 = vst.msk [vmem:[#allocation3 + $0x68] sm:$0xff] %vm624, %v555
      %639 = vst.msk [vmem:[#allocation3 + $0x70] sm:$0xff] %vm624, %v557
      %640 = vst.msk [vmem:[#allocation3 + $0x78] sm:$0xff] %vm624, %v559
      %641 = vst.msk [vmem:[#allocation3 + $0x80] sm:$0xff] %vm624, %v561
      %642 = vst.msk [vmem:[#allocation3 + $0x88] sm:$0xff] %vm624, %v563
      %643 = vst.msk [vmem:[#allocation3 + $0x90] sm:$0xff] %vm624, %v565
      %644 = vst.msk [vmem:[#allocation3 + $0x98] sm:$0xff] %vm624, %v567
      %645 = vst.msk [vmem:[#allocation3 + $0xa0] sm:$0xff] %vm624, %v569
      %646 = vst.msk [vmem:[#allocation3 + $0xa8] sm:$0xff] %vm624, %v571
      %647 = vst.msk [vmem:[#allocation3 + $0xb0] sm:$0xff] %vm624, %v573
      %648 = vst.msk [vmem:[#allocation3 + $0xb8] sm:$0xff] %vm624, %v575
      %649 = vst.msk [vmem:[#allocation3 + $0xc0] sm:$0xff] %vm624, %v577
      %650 = vst.msk [vmem:[#allocation3 + $0xc8] sm:$0xff] %vm624, %v579
      %651 = vst.msk [vmem:[#allocation3 + $0xd0] sm:$0xff] %vm624, %v581
      %652 = vst.msk [vmem:[#allocation3 + $0xd8] sm:$0xff] %vm624, %v583
      %653 = vst.msk [vmem:[#allocation3 + $0xe0] sm:$0xff] %vm624, %v585
      %654 = vst.msk [vmem:[#allocation3 + $0xe8] sm:$0xff] %vm624, %v587
      %655 = vst.msk [vmem:[#allocation3 + $0xf0] sm:$0xff] %vm624, %v589
      %656 = vst.msk [vmem:[#allocation3 + $0xf8] sm:$0xff] %vm624, %v591
      %v657 = vld [vmem:[#allocation2 + $0x2] sm:$0xff]
      %v658 = vld [vmem:[#allocation2 + $0xa] sm:$0xff]
      %v659 = vld [vmem:[#allocation2 + $0x1a] sm:$0xff]
      %v660 = vld [vmem:[#allocation2 + $0x22] sm:$0xff]
      %v661 = vld [vmem:[#allocation2 + $0x32] sm:$0xff]
      %v662 = vld [vmem:[#allocation2 + $0x3a] sm:$0xff]
      %v663 = vld [vmem:[#allocation2 + $0x4a] sm:$0xff]
      %v664 = vld [vmem:[#allocation2 + $0x52] sm:$0xff]
      %v665 = vld [vmem:[#allocation2 + $0x62] sm:$0xff]
      %v666 = vld [vmem:[#allocation2 + $0x6a] sm:$0xff]
      %v667 = vld [vmem:[#allocation2 + $0x7a] sm:$0xff]
      %v668 = vld [vmem:[#allocation2 + $0x82] sm:$0xff]
      %v669 = vld [vmem:[#allocation2 + $0x92] sm:$0xff]
      %v670 = vld [vmem:[#allocation2 + $0x9a] sm:$0xff]
      %v671 = vld [vmem:[#allocation2 + $0xaa] sm:$0xff]
      %v672 = vld [vmem:[#allocation2 + $0xb2] sm:$0xff]
      %v673 = vld [vmem:[#allocation2 + $0xc2] sm:$0xff]
      %v674 = vld [vmem:[#allocation2 + $0xca] sm:$0xff]
      %v675 = vld [vmem:[#allocation2 + $0xda] sm:$0xff]
      %v676 = vld [vmem:[#allocation2 + $0xe2] sm:$0xff]
      %v677 = vld [vmem:[#allocation2 + $0xf2] sm:$0xff]
      %v678 = vld [vmem:[#allocation2 + $0xfa] sm:$0xff]
      %v679 = vld [vmem:[#allocation2 + $0x10a] sm:$0xff]
      %v680 = vld [vmem:[#allocation2 + $0x112] sm:$0xff]
      %v681 = vld [vmem:[#allocation2 + $0x122] sm:$0xff]
      %v682 = vld [vmem:[#allocation2 + $0x12a] sm:$0xff]
      %v683 = vld [vmem:[#allocation2 + $0x13a] sm:$0xff]
      %v684 = vld [vmem:[#allocation2 + $0x142] sm:$0xff]
      %v685 = vld [vmem:[#allocation2 + $0x152] sm:$0xff]
      %v686 = vld [vmem:[#allocation2 + $0x15a] sm:$0xff]
      %v687 = vld [vmem:[#allocation2 + $0x16a] sm:$0xff]
      %v688 = vld [vmem:[#allocation2 + $0x172] sm:$0xff]
      %721 = vrot.lane.b32.xlu0 %v657, 16
      %v722 = vpop.permute.xlu0 %721
      %723 = vrot.lane.b32.xlu0 %v658, 16
      %v724 = vpop.permute.xlu0 %723
      %725 = vrot.lane.b32.xlu0 %v659, 16
      %v726 = vpop.permute.xlu0 %725
      %727 = vrot.lane.b32.xlu0 %v660, 16
      %v728 = vpop.permute.xlu0 %727
      %729 = vrot.lane.b32.xlu0 %v661, 16
      %v730 = vpop.permute.xlu0 %729
      %731 = vrot.lane.b32.xlu0 %v662, 16
      %v732 = vpop.permute.xlu0 %731
      %733 = vrot.lane.b32.xlu0 %v663, 16
      %v734 = vpop.permute.xlu0 %733
      %735 = vrot.lane.b32.xlu0 %v664, 16
      %v736 = vpop.permute.xlu0 %735
      %737 = vrot.lane.b32.xlu0 %v665, 16
      %v738 = vpop.permute.xlu0 %737
      %739 = vrot.lane.b32.xlu0 %v666, 16
      %v740 = vpop.permute.xlu0 %739
      %741 = vrot.lane.b32.xlu0 %v667, 16
      %v742 = vpop.permute.xlu0 %741
      %743 = vrot.lane.b32.xlu0 %v668, 16
      %v744 = vpop.permute.xlu0 %743
      %745 = vrot.lane.b32.xlu0 %v669, 16
      %v746 = vpop.permute.xlu0 %745
      %747 = vrot.lane.b32.xlu0 %v670, 16
      %v748 = vpop.permute.xlu0 %747
      %749 = vrot.lane.b32.xlu0 %v671, 16
      %v750 = vpop.permute.xlu0 %749
      %751 = vrot.lane.b32.xlu0 %v672, 16
      %v752 = vpop.permute.xlu0 %751
      %753 = vrot.lane.b32.xlu0 %v673, 16
      %v754 = vpop.permute.xlu0 %753
      %755 = vrot.lane.b32.xlu0 %v674, 16
      %v756 = vpop.permute.xlu0 %755
      %757 = vrot.lane.b32.xlu0 %v675, 16
      %v758 = vpop.permute.xlu0 %757
      %759 = vrot.lane.b32.xlu0 %v676, 16
      %v760 = vpop.permute.xlu0 %759
      %761 = vrot.lane.b32.xlu0 %v677, 16
      %v762 = vpop.permute.xlu0 %761
      %763 = vrot.lane.b32.xlu0 %v678, 16
      %v764 = vpop.permute.xlu0 %763
      %765 = vrot.lane.b32.xlu0 %v679, 16
      %v766 = vpop.permute.xlu0 %765
      %767 = vrot.lane.b32.xlu0 %v680, 16
      %v768 = vpop.permute.xlu0 %767
      %769 = vrot.lane.b32.xlu0 %v681, 16
      %v770 = vpop.permute.xlu0 %769
      %771 = vrot.lane.b32.xlu0 %v682, 16
      %v772 = vpop.permute.xlu0 %771
      %773 = vrot.lane.b32.xlu0 %v683, 16
      %v774 = vpop.permute.xlu0 %773
      %775 = vrot.lane.b32.xlu0 %v684, 16
      %v776 = vpop.permute.xlu0 %775
      %777 = vrot.lane.b32.xlu0 %v685, 16
      %v778 = vpop.permute.xlu0 %777
      %779 = vrot.lane.b32.xlu0 %v686, 16
      %v780 = vpop.permute.xlu0 %779
      %781 = vrot.lane.b32.xlu0 %v687, 16
      %v782 = vpop.permute.xlu0 %781
      %783 = vrot.lane.b32.xlu0 %v688, 16
      %v784 = vpop.permute.xlu0 %783
      %vm817 = vcmask 195712
      %818 = vst.msk [vmem:[#allocation3] sm:$0xff] %vm817, %v722
      %819 = vst.msk [vmem:[#allocation3 + $0x8] sm:$0xff] %vm817, %v724
      %820 = vst.msk [vmem:[#allocation3 + $0x10] sm:$0xff] %vm817, %v726
      %821 = vst.msk [vmem:[#allocation3 + $0x18] sm:$0xff] %vm817, %v728
      %822 = vst.msk [vmem:[#allocation3 + $0x20] sm:$0xff] %vm817, %v730
      %823 = vst.msk [vmem:[#allocation3 + $0x28] sm:$0xff] %vm817, %v732
      %824 = vst.msk [vmem:[#allocation3 + $0x30] sm:$0xff] %vm817, %v734
      %825 = vst.msk [vmem:[#allocation3 + $0x38] sm:$0xff] %vm817, %v736
      %826 = vst.msk [vmem:[#allocation3 + $0x40] sm:$0xff] %vm817, %v738
      %827 = vst.msk [vmem:[#allocation3 + $0x48] sm:$0xff] %vm817, %v740
      %828 = vst.msk [vmem:[#allocation3 + $0x50] sm:$0xff] %vm817, %v742
      %829 = vst.msk [vmem:[#allocation3 + $0x58] sm:$0xff] %vm817, %v744
      %830 = vst.msk [vmem:[#allocation3 + $0x60] sm:$0xff] %vm817, %v746
      %831 = vst.msk [vmem:[#allocation3 + $0x68] sm:$0xff] %vm817, %v748
      %832 = vst.msk [vmem:[#allocation3 + $0x70] sm:$0xff] %vm817, %v750
      %833 = vst.msk [vmem:[#allocation3 + $0x78] sm:$0xff] %vm817, %v752
      %834 = vst.msk [vmem:[#allocation3 + $0x80] sm:$0xff] %vm817, %v754
      %835 = vst.msk [vmem:[#allocation3 + $0x88] sm:$0xff] %vm817, %v756
      %836 = vst.msk [vmem:[#allocation3 + $0x90] sm:$0xff] %vm817, %v758
      %837 = vst.msk [vmem:[#allocation3 + $0x98] sm:$0xff] %vm817, %v760
      %838 = vst.msk [vmem:[#allocation3 + $0xa0] sm:$0xff] %vm817, %v762
      %839 = vst.msk [vmem:[#allocation3 + $0xa8] sm:$0xff] %vm817, %v764
      %840 = vst.msk [vmem:[#allocation3 + $0xb0] sm:$0xff] %vm817, %v766
      %841 = vst.msk [vmem:[#allocation3 + $0xb8] sm:$0xff] %vm817, %v768
      %842 = vst.msk [vmem:[#allocation3 + $0xc0] sm:$0xff] %vm817, %v770
      %843 = vst.msk [vmem:[#allocation3 + $0xc8] sm:$0xff] %vm817, %v772
      %844 = vst.msk [vmem:[#allocation3 + $0xd0] sm:$0xff] %vm817, %v774
      %845 = vst.msk [vmem:[#allocation3 + $0xd8] sm:$0xff] %vm817, %v776
      %846 = vst.msk [vmem:[#allocation3 + $0xe0] sm:$0xff] %vm817, %v778
      %847 = vst.msk [vmem:[#allocation3 + $0xe8] sm:$0xff] %vm817, %v780
      %848 = vst.msk [vmem:[#allocation3 + $0xf0] sm:$0xff] %vm817, %v782
      %849 = vst.msk [vmem:[#allocation3 + $0xf8] sm:$0xff] %vm817, %v784
      %v850 = vld [vmem:[%s367] sm:$0xff]
      %v851 = vld [vmem:[%s367 + $0x8] sm:$0xff]
      %v852 = vld [vmem:[%s367 + $0x18] sm:$0xff]
      %v853 = vld [vmem:[%s367 + $0x20] sm:$0xff]
      %v854 = vld [vmem:[%s367 + $0x30] sm:$0xff]
      %v855 = vld [vmem:[%s367 + $0x38] sm:$0xff]
      %v856 = vld [vmem:[%s367 + $0x48] sm:$0xff]
      %v857 = vld [vmem:[%s367 + $0x50] sm:$0xff]
      %v858 = vld [vmem:[%s367 + $0x60] sm:$0xff]
      %v859 = vld [vmem:[%s367 + $0x68] sm:$0xff]
      %v860 = vld [vmem:[%s367 + $0x78] sm:$0xff]
      %v861 = vld [vmem:[%s367 + $0x80] sm:$0xff]
      %v862 = vld [vmem:[%s367 + $0x90] sm:$0xff]
      %v863 = vld [vmem:[%s367 + $0x98] sm:$0xff]
      %v864 = vld [vmem:[%s367 + $0xa8] sm:$0xff]
      %v865 = vld [vmem:[%s367 + $0xb0] sm:$0xff]
      %v866 = vld [vmem:[%s367 + $0xc0] sm:$0xff]
      %v867 = vld [vmem:[%s367 + $0xc8] sm:$0xff]
      %v868 = vld [vmem:[%s367 + $0xd8] sm:$0xff]
      %v869 = vld [vmem:[%s367 + $0xe0] sm:$0xff]
      %v870 = vld [vmem:[%s367 + $0xf0] sm:$0xff]
      %v871 = vld [vmem:[%s367 + $0xf8] sm:$0xff]
      %v872 = vld [vmem:[%s367 + $0x108] sm:$0xff]
      %v873 = vld [vmem:[%s367 + $0x110] sm:$0xff]
      %v874 = vld [vmem:[%s367 + $0x120] sm:$0xff]
      %v875 = vld [vmem:[%s367 + $0x128] sm:$0xff]
      %v876 = vld [vmem:[%s367 + $0x138] sm:$0xff]
      %v877 = vld [vmem:[%s367 + $0x140] sm:$0xff]
      %v878 = vld [vmem:[%s367 + $0x150] sm:$0xff]
      %v879 = vld [vmem:[%s367 + $0x158] sm:$0xff]
      %v880 = vld [vmem:[%s367 + $0x168] sm:$0xff]
      %v881 = vld [vmem:[%s367 + $0x170] sm:$0xff]
      %914 = vrot.lane.b32.xlu0 %v850, 24
      %v915 = vpop.permute.xlu0 %914
      %916 = vrot.lane.b32.xlu0 %v851, 24
      %v917 = vpop.permute.xlu0 %916
      %918 = vrot.lane.b32.xlu0 %v852, 24
      %v919 = vpop.permute.xlu0 %918
      %920 = vrot.lane.b32.xlu0 %v853, 24
      %v921 = vpop.permute.xlu0 %920
      %922 = vrot.lane.b32.xlu0 %v854, 24
      %v923 = vpop.permute.xlu0 %922
      %924 = vrot.lane.b32.xlu0 %v855, 24
      %v925 = vpop.permute.xlu0 %924
      %926 = vrot.lane.b32.xlu0 %v856, 24
      %v927 = vpop.permute.xlu0 %926
      %928 = vrot.lane.b32.xlu0 %v857, 24
      %v929 = vpop.permute.xlu0 %928
      %930 = vrot.lane.b32.xlu0 %v858, 24
      %v931 = vpop.permute.xlu0 %930
      %932 = vrot.lane.b32.xlu0 %v859, 24
      %v933 = vpop.permute.xlu0 %932
      %934 = vrot.lane.b32.xlu0 %v860, 24
      %v935 = vpop.permute.xlu0 %934
      %936 = vrot.lane.b32.xlu0 %v861, 24
      %v937 = vpop.permute.xlu0 %936
      %938 = vrot.lane.b32.xlu0 %v862, 24
      %v939 = vpop.permute.xlu0 %938
      %940 = vrot.lane.b32.xlu0 %v863, 24
      %v941 = vpop.permute.xlu0 %940
      %942 = vrot.lane.b32.xlu0 %v864, 24
      %v943 = vpop.permute.xlu0 %942
      %944 = vrot.lane.b32.xlu0 %v865, 24
      %v945 = vpop.permute.xlu0 %944
      %946 = vrot.lane.b32.xlu0 %v866, 24
      %v947 = vpop.permute.xlu0 %946
      %948 = vrot.lane.b32.xlu0 %v867, 24
      %v949 = vpop.permute.xlu0 %948
      %950 = vrot.lane.b32.xlu0 %v868, 24
      %v951 = vpop.permute.xlu0 %950
      %952 = vrot.lane.b32.xlu0 %v869, 24
      %v953 = vpop.permute.xlu0 %952
      %954 = vrot.lane.b32.xlu0 %v870, 24
      %v955 = vpop.permute.xlu0 %954
      %956 = vrot.lane.b32.xlu0 %v871, 24
      %v957 = vpop.permute.xlu0 %956
      %958 = vrot.lane.b32.xlu0 %v872, 24
      %v959 = vpop.permute.xlu0 %958
      %960 = vrot.lane.b32.xlu0 %v873, 24
      %v961 = vpop.permute.xlu0 %960
      %962 = vrot.lane.b32.xlu0 %v874, 24
      %v963 = vpop.permute.xlu0 %962
      %964 = vrot.lane.b32.xlu0 %v875, 24
      %v965 = vpop.permute.xlu0 %964
      %966 = vrot.lane.b32.xlu0 %v876, 24
      %v967 = vpop.permute.xlu0 %966
      %968 = vrot.lane.b32.xlu0 %v877, 24
      %v969 = vpop.permute.xlu0 %968
      %970 = vrot.lane.b32.xlu0 %v878, 24
      %v971 = vpop.permute.xlu0 %970
      %972 = vrot.lane.b32.xlu0 %v879, 24
      %v973 = vpop.permute.xlu0 %972
      %974 = vrot.lane.b32.xlu0 %v880, 24
      %v975 = vpop.permute.xlu0 %974
      %976 = vrot.lane.b32.xlu0 %v881, 24
      %v977 = vpop.permute.xlu0 %976
      %vm1010 = vcmask 261312
      %1011 = vst.msk [vmem:[#allocation3] sm:$0xff] %vm1010, %v915
      %1012 = vst.msk [vmem:[#allocation3 + $0x8] sm:$0xff] %vm1010, %v917
      %1013 = vst.msk [vmem:[#allocation3 + $0x10] sm:$0xff] %vm1010, %v919
      %1014 = vst.msk [vmem:[#allocation3 + $0x18] sm:$0xff] %vm1010, %v921
      %1015 = vst.msk [vmem:[#allocation3 + $0x20] sm:$0xff] %vm1010, %v923
      %1016 = vst.msk [vmem:[#allocation3 + $0x28] sm:$0xff] %vm1010, %v925
      %1017 = vst.msk [vmem:[#allocation3 + $0x30] sm:$0xff] %vm1010, %v927
      %1018 = vst.msk [vmem:[#allocation3 + $0x38] sm:$0xff] %vm1010, %v929
      %1019 = vst.msk [vmem:[#allocation3 + $0x40] sm:$0xff] %vm1010, %v931
      %1020 = vst.msk [vmem:[#allocation3 + $0x48] sm:$0xff] %vm1010, %v933
      %1021 = vst.msk [vmem:[#allocation3 + $0x50] sm:$0xff] %vm1010, %v935
      %1022 = vst.msk [vmem:[#allocation3 + $0x58] sm:$0xff] %vm1010, %v937
      %1023 = vst.msk [vmem:[#allocation3 + $0x60] sm:$0xff] %vm1010, %v939
      %1024 = vst.msk [vmem:[#allocation3 + $0x68] sm:$0xff] %vm1010, %v941
      %1025 = vst.msk [vmem:[#allocation3 + $0x70] sm:$0xff] %vm1010, %v943
      %1026 = vst.msk [vmem:[#allocation3 + $0x78] sm:$0xff] %vm1010, %v945
      %1027 = vst.msk [vmem:[#allocation3 + $0x80] sm:$0xff] %vm1010, %v947
      %1028 = vst.msk [vmem:[#allocation3 + $0x88] sm:$0xff] %vm1010, %v949
      %1029 = vst.msk [vmem:[#allocation3 + $0x90] sm:$0xff] %vm1010, %v951
      %1030 = vst.msk [vmem:[#allocation3 + $0x98] sm:$0xff] %vm1010, %v953
      %1031 = vst.msk [vmem:[#allocation3 + $0xa0] sm:$0xff] %vm1010, %v955
      %1032 = vst.msk [vmem:[#allocation3 + $0xa8] sm:$0xff] %vm1010, %v957
      %1033 = vst.msk [vmem:[#allocation3 + $0xb0] sm:$0xff] %vm1010, %v959
      %1034 = vst.msk [vmem:[#allocation3 + $0xb8] sm:$0xff] %vm1010, %v961
      %1035 = vst.msk [vmem:[#allocation3 + $0xc0] sm:$0xff] %vm1010, %v963
      %1036 = vst.msk [vmem:[#allocation3 + $0xc8] sm:$0xff] %vm1010, %v965
      %1037 = vst.msk [vmem:[#allocation3 + $0xd0] sm:$0xff] %vm1010, %v967
      %1038 = vst.msk [vmem:[#allocation3 + $0xd8] sm:$0xff] %vm1010, %v969
      %1039 = vst.msk [vmem:[#allocation3 + $0xe0] sm:$0xff] %vm1010, %v971
      %1040 = vst.msk [vmem:[#allocation3 + $0xe8] sm:$0xff] %vm1010, %v973
      %1041 = vst.msk [vmem:[#allocation3 + $0xf0] sm:$0xff] %vm1010, %v975
      %1042 = vst.msk [vmem:[#allocation3 + $0xf8] sm:$0xff] %vm1010, %v977
      %v1043 = vld [vmem:[%s367 + $0x1] sm:$0xff]
      %v1044 = vld [vmem:[%s367 + $0x9] sm:$0xff]
      %v1045 = vld [vmem:[%s367 + $0x19] sm:$0xff]
      %v1046 = vld [vmem:[%s367 + $0x21] sm:$0xff]
      %v1047 = vld [vmem:[%s367 + $0x31] sm:$0xff]
      %v1048 = vld [vmem:[%s367 + $0x39] sm:$0xff]
      %v1049 = vld [vmem:[%s367 + $0x49] sm:$0xff]
      %v1050 = vld [vmem:[%s367 + $0x51] sm:$0xff]
      %v1051 = vld [vmem:[%s367 + $0x61] sm:$0xff]
      %v1052 = vld [vmem:[%s367 + $0x69] sm:$0xff]
      %v1053 = vld [vmem:[%s367 + $0x79] sm:$0xff]
      %v1054 = vld [vmem:[%s367 + $0x81] sm:$0xff]
      %v1055 = vld [vmem:[%s367 + $0x91] sm:$0xff]
      %v1056 = vld [vmem:[%s367 + $0x99] sm:$0xff]
      %v1057 = vld [vmem:[%s367 + $0xa9] sm:$0xff]
      %v1058 = vld [vmem:[%s367 + $0xb1] sm:$0xff]
      %v1059 = vld [vmem:[%s367 + $0xc1] sm:$0xff]
      %v1060 = vld [vmem:[%s367 + $0xc9] sm:$0xff]
      %v1061 = vld [vmem:[%s367 + $0xd9] sm:$0xff]
      %v1062 = vld [vmem:[%s367 + $0xe1] sm:$0xff]
      %v1063 = vld [vmem:[%s367 + $0xf1] sm:$0xff]
      %v1064 = vld [vmem:[%s367 + $0xf9] sm:$0xff]
      %v1065 = vld [vmem:[%s367 + $0x109] sm:$0xff]
      %v1066 = vld [vmem:[%s367 + $0x111] sm:$0xff]
      %v1067 = vld [vmem:[%s367 + $0x121] sm:$0xff]
      %v1068 = vld [vmem:[%s367 + $0x129] sm:$0xff]
      %v1069 = vld [vmem:[%s367 + $0x139] sm:$0xff]
      %v1070 = vld [vmem:[%s367 + $0x141] sm:$0xff]
      %v1071 = vld [vmem:[%s367 + $0x151] sm:$0xff]
      %v1072 = vld [vmem:[%s367 + $0x159] sm:$0xff]
      %v1073 = vld [vmem:[%s367 + $0x169] sm:$0xff]
      %v1074 = vld [vmem:[%s367 + $0x171] sm:$0xff]
      %1107 = vrot.lane.b32.xlu0 %v1043, 32
      %v1108 = vpop.permute.xlu0 %1107
      %1109 = vrot.lane.b32.xlu0 %v1044, 32
      %v1110 = vpop.permute.xlu0 %1109
      %1111 = vrot.lane.b32.xlu0 %v1045, 32
      %v1112 = vpop.permute.xlu0 %1111
      %1113 = vrot.lane.b32.xlu0 %v1046, 32
      %v1114 = vpop.permute.xlu0 %1113
      %1115 = vrot.lane.b32.xlu0 %v1047, 32
      %v1116 = vpop.permute.xlu0 %1115
      %1117 = vrot.lane.b32.xlu0 %v1048, 32
      %v1118 = vpop.permute.xlu0 %1117
      %1119 = vrot.lane.b32.xlu0 %v1049, 32
      %v1120 = vpop.permute.xlu0 %1119
      %1121 = vrot.lane.b32.xlu0 %v1050, 32
      %v1122 = vpop.permute.xlu0 %1121
      %1123 = vrot.lane.b32.xlu0 %v1051, 32
      %v1124 = vpop.permute.xlu0 %1123
      %1125 = vrot.lane.b32.xlu0 %v1052, 32
      %v1126 = vpop.permute.xlu0 %1125
      %1127 = vrot.lane.b32.xlu0 %v1053, 32
      %v1128 = vpop.permute.xlu0 %1127
      %1129 = vrot.lane.b32.xlu0 %v1054, 32
      %v1130 = vpop.permute.xlu0 %1129
      %1131 = vrot.lane.b32.xlu0 %v1055, 32
      %v1132 = vpop.permute.xlu0 %1131
      %1133 = vrot.lane.b32.xlu0 %v1056, 32
      %v1134 = vpop.permute.xlu0 %1133
      %1135 = vrot.lane.b32.xlu0 %v1057, 32
      %v1136 = vpop.permute.xlu0 %1135
      %1137 = vrot.lane.b32.xlu0 %v1058, 32
      %v1138 = vpop.permute.xlu0 %1137
      %1139 = vrot.lane.b32.xlu0 %v1059, 32
      %v1140 = vpop.permute.xlu0 %1139
      %1141 = vrot.lane.b32.xlu0 %v1060, 32
      %v1142 = vpop.permute.xlu0 %1141
      %1143 = vrot.lane.b32.xlu0 %v1061, 32
      %v1144 = vpop.permute.xlu0 %1143
      %1145 = vrot.lane.b32.xlu0 %v1062, 32
      %v1146 = vpop.permute.xlu0 %1145
      %1147 = vrot.lane.b32.xlu0 %v1063, 32
      %v1148 = vpop.permute.xlu0 %1147
      %1149 = vrot.lane.b32.xlu0 %v1064, 32
      %v1150 = vpop.permute.xlu0 %1149
      %1151 = vrot.lane.b32.xlu0 %v1065, 32
      %v1152 = vpop.permute.xlu0 %1151
      %1153 = vrot.lane.b32.xlu0 %v1066, 32
      %v1154 = vpop.permute.xlu0 %1153
      %1155 = vrot.lane.b32.xlu0 %v1067, 32
      %v1156 = vpop.permute.xlu0 %1155
      %1157 = vrot.lane.b32.xlu0 %v1068, 32
      %v1158 = vpop.permute.xlu0 %1157
      %1159 = vrot.lane.b32.xlu0 %v1069, 32
      %v1160 = vpop.permute.xlu0 %1159
      %1161 = vrot.lane.b32.xlu0 %v1070, 32
      %v1162 = vpop.permute.xlu0 %1161
      %1163 = vrot.lane.b32.xlu0 %v1071, 32
      %v1164 = vpop.permute.xlu0 %1163
      %1165 = vrot.lane.b32.xlu0 %v1072, 32
      %v1166 = vpop.permute.xlu0 %1165
      %1167 = vrot.lane.b32.xlu0 %v1073, 32
      %v1168 = vpop.permute.xlu0 %1167
      %1169 = vrot.lane.b32.xlu0 %v1074, 32
      %v1170 = vpop.permute.xlu0 %1169
      %vm1203 = vcmask 326912
      %1204 = vst.msk [vmem:[#allocation3] sm:$0xff] %vm1203, %v1108
      %1205 = vst.msk [vmem:[#allocation3 + $0x8] sm:$0xff] %vm1203, %v1110
      %1206 = vst.msk [vmem:[#allocation3 + $0x10] sm:$0xff] %vm1203, %v1112
      %1207 = vst.msk [vmem:[#allocation3 + $0x18] sm:$0xff] %vm1203, %v1114
      %1208 = vst.msk [vmem:[#allocation3 + $0x20] sm:$0xff] %vm1203, %v1116
      %1209 = vst.msk [vmem:[#allocation3 + $0x28] sm:$0xff] %vm1203, %v1118
      %1210 = vst.msk [vmem:[#allocation3 + $0x30] sm:$0xff] %vm1203, %v1120
      %1211 = vst.msk [vmem:[#allocation3 + $0x38] sm:$0xff] %vm1203, %v1122
      %1212 = vst.msk [vmem:[#allocation3 + $0x40] sm:$0xff] %vm1203, %v1124
      %1213 = vst.msk [vmem:[#allocation3 + $0x48] sm:$0xff] %vm1203, %v1126
      %1214 = vst.msk [vmem:[#allocation3 + $0x50] sm:$0xff] %vm1203, %v1128
      %1215 = vst.msk [vmem:[#allocation3 + $0x58] sm:$0xff] %vm1203, %v1130
      %1216 = vst.msk [vmem:[#allocation3 + $0x60] sm:$0xff] %vm1203, %v1132
      %1217 = vst.msk [vmem:[#allocation3 + $0x68] sm:$0xff] %vm1203, %v1134
      %1218 = vst.msk [vmem:[#allocation3 + $0x70] sm:$0xff] %vm1203, %v1136
      %1219 = vst.msk [vmem:[#allocation3 + $0x78] sm:$0xff] %vm1203, %v1138
      %1220 = vst.msk [vmem:[#allocation3 + $0x80] sm:$0xff] %vm1203, %v1140
      %1221 = vst.msk [vmem:[#allocation3 + $0x88] sm:$0xff] %vm1203, %v1142
      %1222 = vst.msk [vmem:[#allocation3 + $0x90] sm:$0xff] %vm1203, %v1144
      %1223 = vst.msk [vmem:[#allocation3 + $0x98] sm:$0xff] %vm1203, %v1146
      %1224 = vst.msk [vmem:[#allocation3 + $0xa0] sm:$0xff] %vm1203, %v1148
      %1225 = vst.msk [vmem:[#allocation3 + $0xa8] sm:$0xff] %vm1203, %v1150
      %1226 = vst.msk [vmem:[#allocation3 + $0xb0] sm:$0xff] %vm1203, %v1152
      %1227 = vst.msk [vmem:[#allocation3 + $0xb8] sm:$0xff] %vm1203, %v1154
      %1228 = vst.msk [vmem:[#allocation3 + $0xc0] sm:$0xff] %vm1203, %v1156
      %1229 = vst.msk [vmem:[#allocation3 + $0xc8] sm:$0xff] %vm1203, %v1158
      %1230 = vst.msk [vmem:[#allocation3 + $0xd0] sm:$0xff] %vm1203, %v1160
      %1231 = vst.msk [vmem:[#allocation3 + $0xd8] sm:$0xff] %vm1203, %v1162
      %1232 = vst.msk [vmem:[#allocation3 + $0xe0] sm:$0xff] %vm1203, %v1164
      %1233 = vst.msk [vmem:[#allocation3 + $0xe8] sm:$0xff] %vm1203, %v1166
      %1234 = vst.msk [vmem:[#allocation3 + $0xf0] sm:$0xff] %vm1203, %v1168
      %1235 = vst.msk [vmem:[#allocation3 + $0xf8] sm:$0xff] %vm1203, %v1170
      %v1236 = vld [vmem:[%s367 + $0x2] sm:$0xff]
      %v1237 = vld [vmem:[%s367 + $0xa] sm:$0xff]
      %v1238 = vld [vmem:[%s367 + $0x1a] sm:$0xff]
      %v1239 = vld [vmem:[%s367 + $0x22] sm:$0xff]
      %v1240 = vld [vmem:[%s367 + $0x32] sm:$0xff]
      %v1241 = vld [vmem:[%s367 + $0x3a] sm:$0xff]
      %v1242 = vld [vmem:[%s367 + $0x4a] sm:$0xff]
      %v1243 = vld [vmem:[%s367 + $0x52] sm:$0xff]
      %v1244 = vld [vmem:[%s367 + $0x62] sm:$0xff]
      %v1245 = vld [vmem:[%s367 + $0x6a] sm:$0xff]
      %v1246 = vld [vmem:[%s367 + $0x7a] sm:$0xff]
      %v1247 = vld [vmem:[%s367 + $0x82] sm:$0xff]
      %v1248 = vld [vmem:[%s367 + $0x92] sm:$0xff]
      %v1249 = vld [vmem:[%s367 + $0x9a] sm:$0xff]
      %v1250 = vld [vmem:[%s367 + $0xaa] sm:$0xff]
      %v1251 = vld [vmem:[%s367 + $0xb2] sm:$0xff]
      %v1252 = vld [vmem:[%s367 + $0xc2] sm:$0xff]
      %v1253 = vld [vmem:[%s367 + $0xca] sm:$0xff]
      %v1254 = vld [vmem:[%s367 + $0xda] sm:$0xff]
      %v1255 = vld [vmem:[%s367 + $0xe2] sm:$0xff]
      %v1256 = vld [vmem:[%s367 + $0xf2] sm:$0xff]
      %v1257 = vld [vmem:[%s367 + $0xfa] sm:$0xff]
      %v1258 = vld [vmem:[%s367 + $0x10a] sm:$0xff]
      %v1259 = vld [vmem:[%s367 + $0x112] sm:$0xff]
      %v1260 = vld [vmem:[%s367 + $0x122] sm:$0xff]
      %v1261 = vld [vmem:[%s367 + $0x12a] sm:$0xff]
      %v1262 = vld [vmem:[%s367 + $0x13a] sm:$0xff]
      %v1263 = vld [vmem:[%s367 + $0x142] sm:$0xff]
      %v1264 = vld [vmem:[%s367 + $0x152] sm:$0xff]
      %v1265 = vld [vmem:[%s367 + $0x15a] sm:$0xff]
      %v1266 = vld [vmem:[%s367 + $0x16a] sm:$0xff]
      %v1267 = vld [vmem:[%s367 + $0x172] sm:$0xff]
      %1300 = vrot.lane.b32.xlu0 %v1236, 40
      %v1301 = vpop.permute.xlu0 %1300
      %1302 = vrot.lane.b32.xlu0 %v1237, 40
      %v1303 = vpop.permute.xlu0 %1302
      %1304 = vrot.lane.b32.xlu0 %v1238, 40
      %v1305 = vpop.permute.xlu0 %1304
      %1306 = vrot.lane.b32.xlu0 %v1239, 40
      %v1307 = vpop.permute.xlu0 %1306
      %1308 = vrot.lane.b32.xlu0 %v1240, 40
      %v1309 = vpop.permute.xlu0 %1308
      %1310 = vrot.lane.b32.xlu0 %v1241, 40
      %v1311 = vpop.permute.xlu0 %1310
      %1312 = vrot.lane.b32.xlu0 %v1242, 40
      %v1313 = vpop.permute.xlu0 %1312
      %1314 = vrot.lane.b32.xlu0 %v1243, 40
      %v1315 = vpop.permute.xlu0 %1314
      %1316 = vrot.lane.b32.xlu0 %v1244, 40
      %v1317 = vpop.permute.xlu0 %1316
      %1318 = vrot.lane.b32.xlu0 %v1245, 40
      %v1319 = vpop.permute.xlu0 %1318
      %1320 = vrot.lane.b32.xlu0 %v1246, 40
      %v1321 = vpop.permute.xlu0 %1320
      %1322 = vrot.lane.b32.xlu0 %v1247, 40
      %v1323 = vpop.permute.xlu0 %1322
      %1324 = vrot.lane.b32.xlu0 %v1248, 40
      %v1325 = vpop.permute.xlu0 %1324
      %1326 = vrot.lane.b32.xlu0 %v1249, 40
      %v1327 = vpop.permute.xlu0 %1326
      %1328 = vrot.lane.b32.xlu0 %v1250, 40
      %v1329 = vpop.permute.xlu0 %1328
      %1330 = vrot.lane.b32.xlu0 %v1251, 40
      %v1331 = vpop.permute.xlu0 %1330
      %1332 = vrot.lane.b32.xlu0 %v1252, 40
      %v1333 = vpop.permute.xlu0 %1332
      %1334 = vrot.lane.b32.xlu0 %v1253, 40
      %v1335 = vpop.permute.xlu0 %1334
      %1336 = vrot.lane.b32.xlu0 %v1254, 40
      %v1337 = vpop.permute.xlu0 %1336
      %1338 = vrot.lane.b32.xlu0 %v1255, 40
      %v1339 = vpop.permute.xlu0 %1338
      %1340 = vrot.lane.b32.xlu0 %v1256, 40
      %v1341 = vpop.permute.xlu0 %1340
      %1342 = vrot.lane.b32.xlu0 %v1257, 40
      %v1343 = vpop.permute.xlu0 %1342
      %1344 = vrot.lane.b32.xlu0 %v1258, 40
      %v1345 = vpop.permute.xlu0 %1344
      %1346 = vrot.lane.b32.xlu0 %v1259, 40
      %v1347 = vpop.permute.xlu0 %1346
      %1348 = vrot.lane.b32.xlu0 %v1260, 40
      %v1349 = vpop.permute.xlu0 %1348
      %1350 = vrot.lane.b32.xlu0 %v1261, 40
      %v1351 = vpop.permute.xlu0 %1350
      %1352 = vrot.lane.b32.xlu0 %v1262, 40
      %v1353 = vpop.permute.xlu0 %1352
      %1354 = vrot.lane.b32.xlu0 %v1263, 40
      %v1355 = vpop.permute.xlu0 %1354
      %1356 = vrot.lane.b32.xlu0 %v1264, 40
      %v1357 = vpop.permute.xlu0 %1356
      %1358 = vrot.lane.b32.xlu0 %v1265, 40
      %v1359 = vpop.permute.xlu0 %1358
      %1360 = vrot.lane.b32.xlu0 %v1266, 40
      %v1361 = vpop.permute.xlu0 %1360
      %1362 = vrot.lane.b32.xlu0 %v1267, 40
      %v1363 = vpop.permute.xlu0 %1362
      %vm1396 = vcmask 392512
      %1397 = vst.msk [vmem:[#allocation3] sm:$0xff] %vm1396, %v1301
      %1398 = vst.msk [vmem:[#allocation3 + $0x8] sm:$0xff] %vm1396, %v1303
      %1399 = vst.msk [vmem:[#allocation3 + $0x10] sm:$0xff] %vm1396, %v1305
      %1400 = vst.msk [vmem:[#allocation3 + $0x18] sm:$0xff] %vm1396, %v1307
      %1401 = vst.msk [vmem:[#allocation3 + $0x20] sm:$0xff] %vm1396, %v1309
      %1402 = vst.msk [vmem:[#allocation3 + $0x28] sm:$0xff] %vm1396, %v1311
      %1403 = vst.msk [vmem:[#allocation3 + $0x30] sm:$0xff] %vm1396, %v1313
      %1404 = vst.msk [vmem:[#allocation3 + $0x38] sm:$0xff] %vm1396, %v1315
      %1405 = vst.msk [vmem:[#allocation3 + $0x40] sm:$0xff] %vm1396, %v1317
      %1406 = vst.msk [vmem:[#allocation3 + $0x48] sm:$0xff] %vm1396, %v1319
      %1407 = vst.msk [vmem:[#allocation3 + $0x50] sm:$0xff] %vm1396, %v1321
      %1408 = vst.msk [vmem:[#allocation3 + $0x58] sm:$0xff] %vm1396, %v1323
      %1409 = vst.msk [vmem:[#allocation3 + $0x60] sm:$0xff] %vm1396, %v1325
      %1410 = vst.msk [vmem:[#allocation3 + $0x68] sm:$0xff] %vm1396, %v1327
      %1411 = vst.msk [vmem:[#allocation3 + $0x70] sm:$0xff] %vm1396, %v1329
      %1412 = vst.msk [vmem:[#allocation3 + $0x78] sm:$0xff] %vm1396, %v1331
      %1413 = vst.msk [vmem:[#allocation3 + $0x80] sm:$0xff] %vm1396, %v1333
      %1414 = vst.msk [vmem:[#allocation3 + $0x88] sm:$0xff] %vm1396, %v1335
      %1415 = vst.msk [vmem:[#allocation3 + $0x90] sm:$0xff] %vm1396, %v1337
      %1416 = vst.msk [vmem:[#allocation3 + $0x98] sm:$0xff] %vm1396, %v1339
      %1417 = vst.msk [vmem:[#allocation3 + $0xa0] sm:$0xff] %vm1396, %v1341
      %1418 = vst.msk [vmem:[#allocation3 + $0xa8] sm:$0xff] %vm1396, %v1343
      %1419 = vst.msk [vmem:[#allocation3 + $0xb0] sm:$0xff] %vm1396, %v1345
      %1420 = vst.msk [vmem:[#allocation3 + $0xb8] sm:$0xff] %vm1396, %v1347
      %1421 = vst.msk [vmem:[#allocation3 + $0xc0] sm:$0xff] %vm1396, %v1349
      %1422 = vst.msk [vmem:[#allocation3 + $0xc8] sm:$0xff] %vm1396, %v1351
      %1423 = vst.msk [vmem:[#allocation3 + $0xd0] sm:$0xff] %vm1396, %v1353
      %1424 = vst.msk [vmem:[#allocation3 + $0xd8] sm:$0xff] %vm1396, %v1355
      %1425 = vst.msk [vmem:[#allocation3 + $0xe0] sm:$0xff] %vm1396, %v1357
      %1426 = vst.msk [vmem:[#allocation3 + $0xe8] sm:$0xff] %vm1396, %v1359
      %1427 = vst.msk [vmem:[#allocation3 + $0xf0] sm:$0xff] %vm1396, %v1361
      %1428 = vst.msk [vmem:[#allocation3 + $0xf8] sm:$0xff] %vm1396, %v1363
      %s1429 = scalar_lea.vmem [#allocation2], 48
      %v1430 = vld [vmem:[%s1429] sm:$0xff]
      %v1431 = vld [vmem:[%s1429 + $0x8] sm:$0xff]
      %v1432 = vld [vmem:[%s1429 + $0x18] sm:$0xff]
      %v1433 = vld [vmem:[%s1429 + $0x20] sm:$0xff]
      %v1434 = vld [vmem:[%s1429 + $0x30] sm:$0xff]
      %v1435 = vld [vmem:[%s1429 + $0x38] sm:$0xff]
      %v1436 = vld [vmem:[%s1429 + $0x48] sm:$0xff]
      %v1437 = vld [vmem:[%s1429 + $0x50] sm:$0xff]
      %v1438 = vld [vmem:[%s1429 + $0x60] sm:$0xff]
      %v1439 = vld [vmem:[%s1429 + $0x68] sm:$0xff]
      %v1440 = vld [vmem:[%s1429 + $0x78] sm:$0xff]
      %v1441 = vld [vmem:[%s1429 + $0x80] sm:$0xff]
      %v1442 = vld [vmem:[%s1429 + $0x90] sm:$0xff]
      %v1443 = vld [vmem:[%s1429 + $0x98] sm:$0xff]
      %v1444 = vld [vmem:[%s1429 + $0xa8] sm:$0xff]
      %v1445 = vld [vmem:[%s1429 + $0xb0] sm:$0xff]
      %v1446 = vld [vmem:[%s1429 + $0xc0] sm:$0xff]
      %v1447 = vld [vmem:[%s1429 + $0xc8] sm:$0xff]
      %v1448 = vld [vmem:[%s1429 + $0xd8] sm:$0xff]
      %v1449 = vld [vmem:[%s1429 + $0xe0] sm:$0xff]
      %v1450 = vld [vmem:[%s1429 + $0xf0] sm:$0xff]
      %v1451 = vld [vmem:[%s1429 + $0xf8] sm:$0xff]
      %v1452 = vld [vmem:[%s1429 + $0x108] sm:$0xff]
      %v1453 = vld [vmem:[%s1429 + $0x110] sm:$0xff]
      %v1454 = vld [vmem:[%s1429 + $0x120] sm:$0xff]
      %v1455 = vld [vmem:[%s1429 + $0x128] sm:$0xff]
      %v1456 = vld [vmem:[%s1429 + $0x138] sm:$0xff]
      %v1457 = vld [vmem:[%s1429 + $0x140] sm:$0xff]
      %v1458 = vld [vmem:[%s1429 + $0x150] sm:$0xff]
      %v1459 = vld [vmem:[%s1429 + $0x158] sm:$0xff]
      %v1460 = vld [vmem:[%s1429 + $0x168] sm:$0xff]
      %v1461 = vld [vmem:[%s1429 + $0x170] sm:$0xff]
      %1494 = vrot.lane.b32.xlu0 %v1430, 48
      %v1495 = vpop.permute.xlu0 %1494
      %1496 = vrot.lane.b32.xlu0 %v1431, 48
      %v1497 = vpop.permute.xlu0 %1496
      %1498 = vrot.lane.b32.xlu0 %v1432, 48
      %v1499 = vpop.permute.xlu0 %1498
      %1500 = vrot.lane.b32.xlu0 %v1433, 48
      %v1501 = vpop.permute.xlu0 %1500
      %1502 = vrot.lane.b32.xlu0 %v1434, 48
      %v1503 = vpop.permute.xlu0 %1502
      %1504 = vrot.lane.b32.xlu0 %v1435, 48
      %v1505 = vpop.permute.xlu0 %1504
      %1506 = vrot.lane.b32.xlu0 %v1436, 48
      %v1507 = vpop.permute.xlu0 %1506
      %1508 = vrot.lane.b32.xlu0 %v1437, 48
      %v1509 = vpop.permute.xlu0 %1508
      %1510 = vrot.lane.b32.xlu0 %v1438, 48
      %v1511 = vpop.permute.xlu0 %1510
      %1512 = vrot.lane.b32.xlu0 %v1439, 48
      %v1513 = vpop.permute.xlu0 %1512
      %1514 = vrot.lane.b32.xlu0 %v1440, 48
      %v1515 = vpop.permute.xlu0 %1514
      %1516 = vrot.lane.b32.xlu0 %v1441, 48
      %v1517 = vpop.permute.xlu0 %1516
      %1518 = vrot.lane.b32.xlu0 %v1442, 48
      %v1519 = vpop.permute.xlu0 %1518
      %1520 = vrot.lane.b32.xlu0 %v1443, 48
      %v1521 = vpop.permute.xlu0 %1520
      %1522 = vrot.lane.b32.xlu0 %v1444, 48
      %v1523 = vpop.permute.xlu0 %1522
      %1524 = vrot.lane.b32.xlu0 %v1445, 48
      %v1525 = vpop.permute.xlu0 %1524
      %1526 = vrot.lane.b32.xlu0 %v1446, 48
      %v1527 = vpop.permute.xlu0 %1526
      %1528 = vrot.lane.b32.xlu0 %v1447, 48
      %v1529 = vpop.permute.xlu0 %1528
      %1530 = vrot.lane.b32.xlu0 %v1448, 48
      %v1531 = vpop.permute.xlu0 %1530
      %1532 = vrot.lane.b32.xlu0 %v1449, 48
      %v1533 = vpop.permute.xlu0 %1532
      %1534 = vrot.lane.b32.xlu0 %v1450, 48
      %v1535 = vpop.permute.xlu0 %1534
      %1536 = vrot.lane.b32.xlu0 %v1451, 48
      %v1537 = vpop.permute.xlu0 %1536
      %1538 = vrot.lane.b32.xlu0 %v1452, 48
      %v1539 = vpop.permute.xlu0 %1538
      %1540 = vrot.lane.b32.xlu0 %v1453, 48
      %v1541 = vpop.permute.xlu0 %1540
      %1542 = vrot.lane.b32.xlu0 %v1454, 48
      %v1543 = vpop.permute.xlu0 %1542
      %1544 = vrot.lane.b32.xlu0 %v1455, 48
      %v1545 = vpop.permute.xlu0 %1544
      %1546 = vrot.lane.b32.xlu0 %v1456, 48
      %v1547 = vpop.permute.xlu0 %1546
      %1548 = vrot.lane.b32.xlu0 %v1457, 48
      %v1549 = vpop.permute.xlu0 %1548
      %1550 = vrot.lane.b32.xlu0 %v1458, 48
      %v1551 = vpop.permute.xlu0 %1550
      %1552 = vrot.lane.b32.xlu0 %v1459, 48
      %v1553 = vpop.permute.xlu0 %1552
      %1554 = vrot.lane.b32.xlu0 %v1460, 48
      %v1555 = vpop.permute.xlu0 %1554
      %1556 = vrot.lane.b32.xlu0 %v1461, 48
      %v1557 = vpop.permute.xlu0 %1556
      %vm1590 = vcmask 458112
      %1591 = vst.msk [vmem:[#allocation3] sm:$0xff] %vm1590, %v1495
      %1592 = vst.msk [vmem:[#allocation3 + $0x8] sm:$0xff] %vm1590, %v1497
      %1593 = vst.msk [vmem:[#allocation3 + $0x10] sm:$0xff] %vm1590, %v1499
      %1594 = vst.msk [vmem:[#allocation3 + $0x18] sm:$0xff] %vm1590, %v1501
      %1595 = vst.msk [vmem:[#allocation3 + $0x20] sm:$0xff] %vm1590, %v1503
      %1596 = vst.msk [vmem:[#allocation3 + $0x28] sm:$0xff] %vm1590, %v1505
      %1597 = vst.msk [vmem:[#allocation3 + $0x30] sm:$0xff] %vm1590, %v1507
      %1598 = vst.msk [vmem:[#allocation3 + $0x38] sm:$0xff] %vm1590, %v1509
      %1599 = vst.msk [vmem:[#allocation3 + $0x40] sm:$0xff] %vm1590, %v1511
      %1600 = vst.msk [vmem:[#allocation3 + $0x48] sm:$0xff] %vm1590, %v1513
      %1601 = vst.msk [vmem:[#allocation3 + $0x50] sm:$0xff] %vm1590, %v1515
      %1602 = vst.msk [vmem:[#allocation3 + $0x58] sm:$0xff] %vm1590, %v1517
      %1603 = vst.msk [vmem:[#allocation3 + $0x60] sm:$0xff] %vm1590, %v1519
      %1604 = vst.msk [vmem:[#allocation3 + $0x68] sm:$0xff] %vm1590, %v1521
      %1605 = vst.msk [vmem:[#allocation3 + $0x70] sm:$0xff] %vm1590, %v1523
      %1606 = vst.msk [vmem:[#allocation3 + $0x78] sm:$0xff] %vm1590, %v1525
      %1607 = vst.msk [vmem:[#allocation3 + $0x80] sm:$0xff] %vm1590, %v1527
      %1608 = vst.msk [vmem:[#allocation3 + $0x88] sm:$0xff] %vm1590, %v1529
      %1609 = vst.msk [vmem:[#allocation3 + $0x90] sm:$0xff] %vm1590, %v1531
      %1610 = vst.msk [vmem:[#allocation3 + $0x98] sm:$0xff] %vm1590, %v1533
      %1611 = vst.msk [vmem:[#allocation3 + $0xa0] sm:$0xff] %vm1590, %v1535
      %1612 = vst.msk [vmem:[#allocation3 + $0xa8] sm:$0xff] %vm1590, %v1537
      %1613 = vst.msk [vmem:[#allocation3 + $0xb0] sm:$0xff] %vm1590, %v1539
      %1614 = vst.msk [vmem:[#allocation3 + $0xb8] sm:$0xff] %vm1590, %v1541
      %1615 = vst.msk [vmem:[#allocation3 + $0xc0] sm:$0xff] %vm1590, %v1543
      %1616 = vst.msk [vmem:[#allocation3 + $0xc8] sm:$0xff] %vm1590, %v1545
      %1617 = vst.msk [vmem:[#allocation3 + $0xd0] sm:$0xff] %vm1590, %v1547
      %1618 = vst.msk [vmem:[#allocation3 + $0xd8] sm:$0xff] %vm1590, %v1549
      %1619 = vst.msk [vmem:[#allocation3 + $0xe0] sm:$0xff] %vm1590, %v1551
      %1620 = vst.msk [vmem:[#allocation3 + $0xe8] sm:$0xff] %vm1590, %v1553
      %1621 = vst.msk [vmem:[#allocation3 + $0xf0] sm:$0xff] %vm1590, %v1555
      %1622 = vst.msk [vmem:[#allocation3 + $0xf8] sm:$0xff] %vm1590, %v1557
      %v1623 = vld [vmem:[%s1429 + $0x1] sm:$0xff]
      %v1624 = vld [vmem:[%s1429 + $0x9] sm:$0xff]
      %v1625 = vld [vmem:[%s1429 + $0x19] sm:$0xff]
      %v1626 = vld [vmem:[%s1429 + $0x21] sm:$0xff]
      %v1627 = vld [vmem:[%s1429 + $0x31] sm:$0xff]
      %v1628 = vld [vmem:[%s1429 + $0x39] sm:$0xff]
      %v1629 = vld [vmem:[%s1429 + $0x49] sm:$0xff]
      %v1630 = vld [vmem:[%s1429 + $0x51] sm:$0xff]
      %v1631 = vld [vmem:[%s1429 + $0x61] sm:$0xff]
      %v1632 = vld [vmem:[%s1429 + $0x69] sm:$0xff]
      %v1633 = vld [vmem:[%s1429 + $0x79] sm:$0xff]
      %v1634 = vld [vmem:[%s1429 + $0x81] sm:$0xff]
      %v1635 = vld [vmem:[%s1429 + $0x91] sm:$0xff]
      %v1636 = vld [vmem:[%s1429 + $0x99] sm:$0xff]
      %v1637 = vld [vmem:[%s1429 + $0xa9] sm:$0xff]
      %v1638 = vld [vmem:[%s1429 + $0xb1] sm:$0xff]
      %v1639 = vld [vmem:[%s1429 + $0xc1] sm:$0xff]
      %v1640 = vld [vmem:[%s1429 + $0xc9] sm:$0xff]
      %v1641 = vld [vmem:[%s1429 + $0xd9] sm:$0xff]
      %v1642 = vld [vmem:[%s1429 + $0xe1] sm:$0xff]
      %v1643 = vld [vmem:[%s1429 + $0xf1] sm:$0xff]
      %v1644 = vld [vmem:[%s1429 + $0xf9] sm:$0xff]
      %v1645 = vld [vmem:[%s1429 + $0x109] sm:$0xff]
      %v1646 = vld [vmem:[%s1429 + $0x111] sm:$0xff]
      %v1647 = vld [vmem:[%s1429 + $0x121] sm:$0xff]
      %v1648 = vld [vmem:[%s1429 + $0x129] sm:$0xff]
      %v1649 = vld [vmem:[%s1429 + $0x139] sm:$0xff]
      %v1650 = vld [vmem:[%s1429 + $0x141] sm:$0xff]
      %v1651 = vld [vmem:[%s1429 + $0x151] sm:$0xff]
      %v1652 = vld [vmem:[%s1429 + $0x159] sm:$0xff]
      %v1653 = vld [vmem:[%s1429 + $0x169] sm:$0xff]
      %v1654 = vld [vmem:[%s1429 + $0x171] sm:$0xff]
      %1687 = vrot.lane.b32.xlu0 %v1623, 56
      %v1688 = vpop.permute.xlu0 %1687
      %1689 = vrot.lane.b32.xlu0 %v1624, 56
      %v1690 = vpop.permute.xlu0 %1689
      %1691 = vrot.lane.b32.xlu0 %v1625, 56
      %v1692 = vpop.permute.xlu0 %1691
      %1693 = vrot.lane.b32.xlu0 %v1626, 56
      %v1694 = vpop.permute.xlu0 %1693
      %1695 = vrot.lane.b32.xlu0 %v1627, 56
      %v1696 = vpop.permute.xlu0 %1695
      %1697 = vrot.lane.b32.xlu0 %v1628, 56
      %v1698 = vpop.permute.xlu0 %1697
      %1699 = vrot.lane.b32.xlu0 %v1629, 56
      %v1700 = vpop.permute.xlu0 %1699
      %1701 = vrot.lane.b32.xlu0 %v1630, 56
      %v1702 = vpop.permute.xlu0 %1701
      %1703 = vrot.lane.b32.xlu0 %v1631, 56
      %v1704 = vpop.permute.xlu0 %1703
      %1705 = vrot.lane.b32.xlu0 %v1632, 56
      %v1706 = vpop.permute.xlu0 %1705
      %1707 = vrot.lane.b32.xlu0 %v1633, 56
      %v1708 = vpop.permute.xlu0 %1707
      %1709 = vrot.lane.b32.xlu0 %v1634, 56
      %v1710 = vpop.permute.xlu0 %1709
      %1711 = vrot.lane.b32.xlu0 %v1635, 56
      %v1712 = vpop.permute.xlu0 %1711
      %1713 = vrot.lane.b32.xlu0 %v1636, 56
      %v1714 = vpop.permute.xlu0 %1713
      %1715 = vrot.lane.b32.xlu0 %v1637, 56
      %v1716 = vpop.permute.xlu0 %1715
      %1717 = vrot.lane.b32.xlu0 %v1638, 56
      %v1718 = vpop.permute.xlu0 %1717
      %1719 = vrot.lane.b32.xlu0 %v1639, 56
      %v1720 = vpop.permute.xlu0 %1719
      %1721 = vrot.lane.b32.xlu0 %v1640, 56
      %v1722 = vpop.permute.xlu0 %1721
      %1723 = vrot.lane.b32.xlu0 %v1641, 56
      %v1724 = vpop.permute.xlu0 %1723
      %1725 = vrot.lane.b32.xlu0 %v1642, 56
      %v1726 = vpop.permute.xlu0 %1725
      %1727 = vrot.lane.b32.xlu0 %v1643, 56
      %v1728 = vpop.permute.xlu0 %1727
      %1729 = vrot.lane.b32.xlu0 %v1644, 56
      %v1730 = vpop.permute.xlu0 %1729
      %1731 = vrot.lane.b32.xlu0 %v1645, 56
      %v1732 = vpop.permute.xlu0 %1731
      %1733 = vrot.lane.b32.xlu0 %v1646, 56
      %v1734 = vpop.permute.xlu0 %1733
      %1735 = vrot.lane.b32.xlu0 %v1647, 56
      %v1736 = vpop.permute.xlu0 %1735
      %1737 = vrot.lane.b32.xlu0 %v1648, 56
      %v1738 = vpop.permute.xlu0 %1737
      %1739 = vrot.lane.b32.xlu0 %v1649, 56
      %v1740 = vpop.permute.xlu0 %1739
      %1741 = vrot.lane.b32.xlu0 %v1650, 56
      %v1742 = vpop.permute.xlu0 %1741
      %1743 = vrot.lane.b32.xlu0 %v1651, 56
      %v1744 = vpop.permute.xlu0 %1743
      %1745 = vrot.lane.b32.xlu0 %v1652, 56
      %v1746 = vpop.permute.xlu0 %1745
      %1747 = vrot.lane.b32.xlu0 %v1653, 56
      %v1748 = vpop.permute.xlu0 %1747
      %1749 = vrot.lane.b32.xlu0 %v1654, 56
      %v1750 = vpop.permute.xlu0 %1749
      %vm1783 = vcmask 523712
      %1784 = vst.msk [vmem:[#allocation3] sm:$0xff] %vm1783, %v1688
      %1785 = vst.msk [vmem:[#allocation3 + $0x8] sm:$0xff] %vm1783, %v1690
      %1786 = vst.msk [vmem:[#allocation3 + $0x10] sm:$0xff] %vm1783, %v1692
      %1787 = vst.msk [vmem:[#allocation3 + $0x18] sm:$0xff] %vm1783, %v1694
      %1788 = vst.msk [vmem:[#allocation3 + $0x20] sm:$0xff] %vm1783, %v1696
      %1789 = vst.msk [vmem:[#allocation3 + $0x28] sm:$0xff] %vm1783, %v1698
      %1790 = vst.msk [vmem:[#allocation3 + $0x30] sm:$0xff] %vm1783, %v1700
      %1791 = vst.msk [vmem:[#allocation3 + $0x38] sm:$0xff] %vm1783, %v1702
      %1792 = vst.msk [vmem:[#allocation3 + $0x40] sm:$0xff] %vm1783, %v1704
      %1793 = vst.msk [vmem:[#allocation3 + $0x48] sm:$0xff] %vm1783, %v1706
      %1794 = vst.msk [vmem:[#allocation3 + $0x50] sm:$0xff] %vm1783, %v1708
      %1795 = vst.msk [vmem:[#allocation3 + $0x58] sm:$0xff] %vm1783, %v1710
      %1796 = vst.msk [vmem:[#allocation3 + $0x60] sm:$0xff] %vm1783, %v1712
      %1797 = vst.msk [vmem:[#allocation3 + $0x68] sm:$0xff] %vm1783, %v1714
      %1798 = vst.msk [vmem:[#allocation3 + $0x70] sm:$0xff] %vm1783, %v1716
      %1799 = vst.msk [vmem:[#allocation3 + $0x78] sm:$0xff] %vm1783, %v1718
      %1800 = vst.msk [vmem:[#allocation3 + $0x80] sm:$0xff] %vm1783, %v1720
      %1801 = vst.msk [vmem:[#allocation3 + $0x88] sm:$0xff] %vm1783, %v1722
      %1802 = vst.msk [vmem:[#allocation3 + $0x90] sm:$0xff] %vm1783, %v1724
      %1803 = vst.msk [vmem:[#allocation3 + $0x98] sm:$0xff] %vm1783, %v1726
      %1804 = vst.msk [vmem:[#allocation3 + $0xa0] sm:$0xff] %vm1783, %v1728
      %1805 = vst.msk [vmem:[#allocation3 + $0xa8] sm:$0xff] %vm1783, %v1730
      %1806 = vst.msk [vmem:[#allocation3 + $0xb0] sm:$0xff] %vm1783, %v1732
      %1807 = vst.msk [vmem:[#allocation3 + $0xb8] sm:$0xff] %vm1783, %v1734
      %1808 = vst.msk [vmem:[#allocation3 + $0xc0] sm:$0xff] %vm1783, %v1736
      %1809 = vst.msk [vmem:[#allocation3 + $0xc8] sm:$0xff] %vm1783, %v1738
      %1810 = vst.msk [vmem:[#allocation3 + $0xd0] sm:$0xff] %vm1783, %v1740
      %1811 = vst.msk [vmem:[#allocation3 + $0xd8] sm:$0xff] %vm1783, %v1742
      %1812 = vst.msk [vmem:[#allocation3 + $0xe0] sm:$0xff] %vm1783, %v1744
      %1813 = vst.msk [vmem:[#allocation3 + $0xe8] sm:$0xff] %vm1783, %v1746
      %1814 = vst.msk [vmem:[#allocation3 + $0xf0] sm:$0xff] %vm1783, %v1748
      %1815 = vst.msk [vmem:[#allocation3 + $0xf8] sm:$0xff] %vm1783, %v1750
      %v1816 = vld [vmem:[%s1429 + $0x2] sm:$0xff]
      %v1817 = vld [vmem:[%s1429 + $0xa] sm:$0xff]
      %v1818 = vld [vmem:[%s1429 + $0x1a] sm:$0xff]
      %v1819 = vld [vmem:[%s1429 + $0x22] sm:$0xff]
      %v1820 = vld [vmem:[%s1429 + $0x32] sm:$0xff]
      %v1821 = vld [vmem:[%s1429 + $0x3a] sm:$0xff]
      %v1822 = vld [vmem:[%s1429 + $0x4a] sm:$0xff]
      %v1823 = vld [vmem:[%s1429 + $0x52] sm:$0xff]
      %v1824 = vld [vmem:[%s1429 + $0x62] sm:$0xff]
      %v1825 = vld [vmem:[%s1429 + $0x6a] sm:$0xff]
      %v1826 = vld [vmem:[%s1429 + $0x7a] sm:$0xff]
      %v1827 = vld [vmem:[%s1429 + $0x82] sm:$0xff]
      %v1828 = vld [vmem:[%s1429 + $0x92] sm:$0xff]
      %v1829 = vld [vmem:[%s1429 + $0x9a] sm:$0xff]
      %v1830 = vld [vmem:[%s1429 + $0xaa] sm:$0xff]
      %v1831 = vld [vmem:[%s1429 + $0xb2] sm:$0xff]
      %v1832 = vld [vmem:[%s1429 + $0xc2] sm:$0xff]
      %v1833 = vld [vmem:[%s1429 + $0xca] sm:$0xff]
      %v1834 = vld [vmem:[%s1429 + $0xda] sm:$0xff]
      %v1835 = vld [vmem:[%s1429 + $0xe2] sm:$0xff]
      %v1836 = vld [vmem:[%s1429 + $0xf2] sm:$0xff]
      %v1837 = vld [vmem:[%s1429 + $0xfa] sm:$0xff]
      %v1838 = vld [vmem:[%s1429 + $0x10a] sm:$0xff]
      %v1839 = vld [vmem:[%s1429 + $0x112] sm:$0xff]
      %v1840 = vld [vmem:[%s1429 + $0x122] sm:$0xff]
      %v1841 = vld [vmem:[%s1429 + $0x12a] sm:$0xff]
      %v1842 = vld [vmem:[%s1429 + $0x13a] sm:$0xff]
      %v1843 = vld [vmem:[%s1429 + $0x142] sm:$0xff]
      %v1844 = vld [vmem:[%s1429 + $0x152] sm:$0xff]
      %v1845 = vld [vmem:[%s1429 + $0x15a] sm:$0xff]
      %v1846 = vld [vmem:[%s1429 + $0x16a] sm:$0xff]
      %v1847 = vld [vmem:[%s1429 + $0x172] sm:$0xff]
      %1880 = vrot.lane.b32.xlu0 %v1816, 64
      %v1881 = vpop.permute.xlu0 %1880
      %1882 = vrot.lane.b32.xlu0 %v1817, 64
      %v1883 = vpop.permute.xlu0 %1882
      %1884 = vrot.lane.b32.xlu0 %v1818, 64
      %v1885 = vpop.permute.xlu0 %1884
      %1886 = vrot.lane.b32.xlu0 %v1819, 64
      %v1887 = vpop.permute.xlu0 %1886
      %1888 = vrot.lane.b32.xlu0 %v1820, 64
      %v1889 = vpop.permute.xlu0 %1888
      %1890 = vrot.lane.b32.xlu0 %v1821, 64
      %v1891 = vpop.permute.xlu0 %1890
      %1892 = vrot.lane.b32.xlu0 %v1822, 64
      %v1893 = vpop.permute.xlu0 %1892
      %1894 = vrot.lane.b32.xlu0 %v1823, 64
      %v1895 = vpop.permute.xlu0 %1894
      %1896 = vrot.lane.b32.xlu0 %v1824, 64
      %v1897 = vpop.permute.xlu0 %1896
      %1898 = vrot.lane.b32.xlu0 %v1825, 64
      %v1899 = vpop.permute.xlu0 %1898
      %1900 = vrot.lane.b32.xlu0 %v1826, 64
      %v1901 = vpop.permute.xlu0 %1900
      %1902 = vrot.lane.b32.xlu0 %v1827, 64
      %v1903 = vpop.permute.xlu0 %1902
      %1904 = vrot.lane.b32.xlu0 %v1828, 64
      %v1905 = vpop.permute.xlu0 %1904
      %1906 = vrot.lane.b32.xlu0 %v1829, 64
      %v1907 = vpop.permute.xlu0 %1906
      %1908 = vrot.lane.b32.xlu0 %v1830, 64
      %v1909 = vpop.permute.xlu0 %1908
      %1910 = vrot.lane.b32.xlu0 %v1831, 64
      %v1911 = vpop.permute.xlu0 %1910
      %1912 = vrot.lane.b32.xlu0 %v1832, 64
      %v1913 = vpop.permute.xlu0 %1912
      %1914 = vrot.lane.b32.xlu0 %v1833, 64
      %v1915 = vpop.permute.xlu0 %1914
      %1916 = vrot.lane.b32.xlu0 %v1834, 64
      %v1917 = vpop.permute.xlu0 %1916
      %1918 = vrot.lane.b32.xlu0 %v1835, 64
      %v1919 = vpop.permute.xlu0 %1918
      %1920 = vrot.lane.b32.xlu0 %v1836, 64
      %v1921 = vpop.permute.xlu0 %1920
      %1922 = vrot.lane.b32.xlu0 %v1837, 64
      %v1923 = vpop.permute.xlu0 %1922
      %1924 = vrot.lane.b32.xlu0 %v1838, 64
      %v1925 = vpop.permute.xlu0 %1924
      %1926 = vrot.lane.b32.xlu0 %v1839, 64
      %v1927 = vpop.permute.xlu0 %1926
      %1928 = vrot.lane.b32.xlu0 %v1840, 64
      %v1929 = vpop.permute.xlu0 %1928
      %1930 = vrot.lane.b32.xlu0 %v1841, 64
      %v1931 = vpop.permute.xlu0 %1930
      %1932 = vrot.lane.b32.xlu0 %v1842, 64
      %v1933 = vpop.permute.xlu0 %1932
      %1934 = vrot.lane.b32.xlu0 %v1843, 64
      %v1935 = vpop.permute.xlu0 %1934
      %1936 = vrot.lane.b32.xlu0 %v1844, 64
      %v1937 = vpop.permute.xlu0 %1936
      %1938 = vrot.lane.b32.xlu0 %v1845, 64
      %v1939 = vpop.permute.xlu0 %1938
      %1940 = vrot.lane.b32.xlu0 %v1846, 64
      %v1941 = vpop.permute.xlu0 %1940
      %1942 = vrot.lane.b32.xlu0 %v1847, 64
      %v1943 = vpop.permute.xlu0 %1942
      %vm1976 = vcmask 589312
      %1977 = vst.msk [vmem:[#allocation3] sm:$0xff] %vm1976, %v1881
      %1978 = vst.msk [vmem:[#allocation3 + $0x8] sm:$0xff] %vm1976, %v1883
      %1979 = vst.msk [vmem:[#allocation3 + $0x10] sm:$0xff] %vm1976, %v1885
      %1980 = vst.msk [vmem:[#allocation3 + $0x18] sm:$0xff] %vm1976, %v1887
      %1981 = vst.msk [vmem:[#allocation3 + $0x20] sm:$0xff] %vm1976, %v1889
      %1982 = vst.msk [vmem:[#allocation3 + $0x28] sm:$0xff] %vm1976, %v1891
      %1983 = vst.msk [vmem:[#allocation3 + $0x30] sm:$0xff] %vm1976, %v1893
      %1984 = vst.msk [vmem:[#allocation3 + $0x38] sm:$0xff] %vm1976, %v1895
      %1985 = vst.msk [vmem:[#allocation3 + $0x40] sm:$0xff] %vm1976, %v1897
      %1986 = vst.msk [vmem:[#allocation3 + $0x48] sm:$0xff] %vm1976, %v1899
      %1987 = vst.msk [vmem:[#allocation3 + $0x50] sm:$0xff] %vm1976, %v1901
      %1988 = vst.msk [vmem:[#allocation3 + $0x58] sm:$0xff] %vm1976, %v1903
      %1989 = vst.msk [vmem:[#allocation3 + $0x60] sm:$0xff] %vm1976, %v1905
      %1990 = vst.msk [vmem:[#allocation3 + $0x68] sm:$0xff] %vm1976, %v1907
      %1991 = vst.msk [vmem:[#allocation3 + $0x70] sm:$0xff] %vm1976, %v1909
      %1992 = vst.msk [vmem:[#allocation3 + $0x78] sm:$0xff] %vm1976, %v1911
      %1993 = vst.msk [vmem:[#allocation3 + $0x80] sm:$0xff] %vm1976, %v1913
      %1994 = vst.msk [vmem:[#allocation3 + $0x88] sm:$0xff] %vm1976, %v1915
      %1995 = vst.msk [vmem:[#allocation3 + $0x90] sm:$0xff] %vm1976, %v1917
      %1996 = vst.msk [vmem:[#allocation3 + $0x98] sm:$0xff] %vm1976, %v1919
      %1997 = vst.msk [vmem:[#allocation3 + $0xa0] sm:$0xff] %vm1976, %v1921
      %1998 = vst.msk [vmem:[#allocation3 + $0xa8] sm:$0xff] %vm1976, %v1923
      %1999 = vst.msk [vmem:[#allocation3 + $0xb0] sm:$0xff] %vm1976, %v1925
      %2000 = vst.msk [vmem:[#allocation3 + $0xb8] sm:$0xff] %vm1976, %v1927
      %2001 = vst.msk [vmem:[#allocation3 + $0xc0] sm:$0xff] %vm1976, %v1929
      %2002 = vst.msk [vmem:[#allocation3 + $0xc8] sm:$0xff] %vm1976, %v1931
      %2003 = vst.msk [vmem:[#allocation3 + $0xd0] sm:$0xff] %vm1976, %v1933
      %2004 = vst.msk [vmem:[#allocation3 + $0xd8] sm:$0xff] %vm1976, %v1935
      %2005 = vst.msk [vmem:[#allocation3 + $0xe0] sm:$0xff] %vm1976, %v1937
      %2006 = vst.msk [vmem:[#allocation3 + $0xe8] sm:$0xff] %vm1976, %v1939
      %2007 = vst.msk [vmem:[#allocation3 + $0xf0] sm:$0xff] %vm1976, %v1941
      %2008 = vst.msk [vmem:[#allocation3 + $0xf8] sm:$0xff] %vm1976, %v1943
      %v2009 = vld [vmem:[#allocation3] sm:$0xff]
      %v2010 = vld [vmem:[#allocation3 + $0x8] sm:$0xff]
      %v2011 = vld [vmem:[#allocation3 + $0x10] sm:$0xff]
      %v2012 = vld [vmem:[#allocation3 + $0x18] sm:$0xff]
      %v2013 = vld [vmem:[#allocation3 + $0x20] sm:$0xff]
      %v2014 = vld [vmem:[#allocation3 + $0x28] sm:$0xff]
      %v2015 = vld [vmem:[#allocation3 + $0x30] sm:$0xff]
      %v2016 = vld [vmem:[#allocation3 + $0x38] sm:$0xff]
      %v2017 = vld [vmem:[#allocation3 + $0x40] sm:$0xff]
      %v2018 = vld [vmem:[#allocation3 + $0x48] sm:$0xff]
      %v2019 = vld [vmem:[#allocation3 + $0x50] sm:$0xff]
      %v2020 = vld [vmem:[#allocation3 + $0x58] sm:$0xff]
      %v2021 = vld [vmem:[#allocation3 + $0x60] sm:$0xff]
      %v2022 = vld [vmem:[#allocation3 + $0x68] sm:$0xff]
      %v2023 = vld [vmem:[#allocation3 + $0x70] sm:$0xff]
      %v2024 = vld [vmem:[#allocation3 + $0x78] sm:$0xff]
      %v2025 = vld [vmem:[#allocation3 + $0x80] sm:$0xff]
      %v2026 = vld [vmem:[#allocation3 + $0x88] sm:$0xff]
      %v2027 = vld [vmem:[#allocation3 + $0x90] sm:$0xff]
      %v2028 = vld [vmem:[#allocation3 + $0x98] sm:$0xff]
      %v2029 = vld [vmem:[#allocation3 + $0xa0] sm:$0xff]
      %v2030 = vld [vmem:[#allocation3 + $0xa8] sm:$0xff]
      %v2031 = vld [vmem:[#allocation3 + $0xb0] sm:$0xff]
      %v2032 = vld [vmem:[#allocation3 + $0xb8] sm:$0xff]
      %v2033 = vld [vmem:[#allocation3 + $0xc0] sm:$0xff]
      %v2034 = vld [vmem:[#allocation3 + $0xc8] sm:$0xff]
      %v2035 = vld [vmem:[#allocation3 + $0xd0] sm:$0xff]
      %v2036 = vld [vmem:[#allocation3 + $0xd8] sm:$0xff]
      %v2037 = vld [vmem:[#allocation3 + $0xe0] sm:$0xff]
      %v2038 = vld [vmem:[#allocation3 + $0xe8] sm:$0xff]
      %v2039 = vld [vmem:[#allocation3 + $0xf0] sm:$0xff]
      %v2040 = vld [vmem:[#allocation3 + $0xf8] sm:$0xff]
      %v2041 = vld [vmem:[%s1] sm:$0xff]
      %v2042 = vld [vmem:[%s1 + $0x8] sm:$0xff]
      %v2043 = vld [vmem:[%s1 + $0x10] sm:$0xff]
      %v2044 = vld [vmem:[%s1 + $0x18] sm:$0xff]
      %v2045 = vld [vmem:[%s1 + $0x20] sm:$0xff]
      %v2046 = vld [vmem:[%s1 + $0x28] sm:$0xff]
      %v2047 = vld [vmem:[%s1 + $0x30] sm:$0xff]
      %v2048 = vld [vmem:[%s1 + $0x38] sm:$0xff]
      %v2049 = vld [vmem:[%s1 + $0x40] sm:$0xff]
      %vm2050 = vcmask 588800
      %v2052 = vsel %vm2050, %v2009, 0
      %v2055 = vsel %vm2050, %v2010, 0
      %v2058 = vsel %vm2050, %v2011, 0
      %v2061 = vsel %vm2050, %v2012, 0
      %v2064 = vsel %vm2050, %v2013, 0
      %v2067 = vsel %vm2050, %v2014, 0
      %v2070 = vsel %vm2050, %v2015, 0
      %v2073 = vsel %vm2050, %v2016, 0
      %v2076 = vsel %vm2050, %v2017, 0
      %v2079 = vsel %vm2050, %v2018, 0
      %v2082 = vsel %vm2050, %v2019, 0
      %v2085 = vsel %vm2050, %v2020, 0
      %v2088 = vsel %vm2050, %v2021, 0
      %v2091 = vsel %vm2050, %v2022, 0
      %v2094 = vsel %vm2050, %v2023, 0
      %v2097 = vsel %vm2050, %v2024, 0
      %v2100 = vsel %vm2050, %v2025, 0
      %v2103 = vsel %vm2050, %v2026, 0
      %v2106 = vsel %vm2050, %v2027, 0
      %v2109 = vsel %vm2050, %v2028, 0
      %v2112 = vsel %vm2050, %v2029, 0
      %v2115 = vsel %vm2050, %v2030, 0
      %v2118 = vsel %vm2050, %v2031, 0
      %v2121 = vsel %vm2050, %v2032, 0
      %v2124 = vsel %vm2050, %v2033, 0
      %v2127 = vsel %vm2050, %v2034, 0
      %v2130 = vsel %vm2050, %v2035, 0
      %v2133 = vsel %vm2050, %v2036, 0
      %v2136 = vsel %vm2050, %v2037, 0
      %v2139 = vsel %vm2050, %v2038, 0
      %v2142 = vsel %vm2050, %v2039, 0
      %v2145 = vsel %vm2050, %v2040, 0
      %2147 = vmatprep.subr.mxu0 0.0
      %2148 = vmatpush1.msra.mxu0 %v2041
      %2149 = vmatprep.subr.mxu0 0.0
      %2150 = vmatpush1.msra.mxu0 %v2042
      %2151 = vmatprep.subr.mxu0 0.0
      %2152 = vmatpush1.msra.mxu0 %v2043
      %2153 = vmatprep.subr.mxu0 0.0
      %2154 = vmatpush1.msra.mxu0 %v2044
      %2155 = vmatprep.subr.mxu0 0.0
      %2156 = vmatpush1.msra.mxu0 %v2045
      %2157 = vmatprep.subr.mxu0 0.0
      %2158 = vmatpush1.msra.mxu0 %v2046
      %2159 = vmatprep.subr.mxu0 0.0
      %2160 = vmatpush1.msra.mxu0 %v2047
      %2161 = vmatprep.subr.mxu0 0.0
      %2162 = vmatpush1.msra.mxu0 %v2048
      %2163 = vmatprep.subr.mxu0 0.0
      %2164 = vmatpush1.msra.mxu0 %v2049
      %2165 = vmatprep.subr.mxu0 0.0
      %2166 = vmatpush1.msra.mxu0 0.0
      %2167 = vmatprep.subr.mxu0 0.0
      %2168 = vmatpush1.msra.mxu0 0.0
      %2169 = vmatprep.subr.mxu0 0.0
      %2170 = vmatpush1.msra.mxu0 0.0
      %2171 = vmatprep.subr.mxu0 0.0
      %2172 = vmatpush1.msra.mxu0 0.0
      %2173 = vmatprep.subr.mxu0 0.0
      %2174 = vmatpush1.msra.mxu0 0.0
      %2175 = vmatprep.subr.mxu0 0.0
      %2176 = vmatpush1.msra.mxu0 0.0
      %2177 = vmatprep.subr.mxu0 0.0
      %2178 = vmatpush1.msra.mxu0 0.0
      %2179 = vmatprep.subr.mxu0 0.0
      %2180 = vmatpush1.msra.mxu0 0.0
      %2181 = vmatprep.subr.mxu0 0.0
      %2182 = vmatpush1.msra.mxu0 0.0
      %2183 = vmatprep.subr.mxu0 0.0
      %2184 = vmatpush1.msra.mxu0 0.0
      %2185 = vmatprep.subr.mxu0 0.0
      %2186 = vmatpush1.msra.mxu0 0.0
      %2187 = vmatprep.subr.mxu0 0.0
      %2188 = vmatpush1.msra.mxu0 0.0
      %2189 = vmatprep.subr.mxu0 0.0
      %2190 = vmatpush1.msra.mxu0 0.0
      %2191 = vmatprep.subr.mxu0 0.0
      %2192 = vmatpush1.msra.mxu0 0.0
      %2193 = vmatprep.subr.mxu0 0.0
      %2194 = vmatpush1.msra.mxu0 0.0
      %2195 = vmatprep.subr.mxu0 0.0
      %2196 = vmatpush1.msra.mxu0 0.0
      %2197 = vmatprep.subr.mxu0 0.0
      %2198 = vmatpush1.msra.mxu0 0.0
      %2199 = vmatprep.subr.mxu0 0.0
      %2200 = vmatpush1.msra.mxu0 0.0
      %2201 = vmatprep.subr.mxu0 0.0
      %2202 = vmatpush1.msra.mxu0 0.0
      %2203 = vmatprep.subr.mxu0 0.0
      %2204 = vmatpush1.msra.mxu0 0.0
      %2205 = vmatprep.subr.mxu0 0.0
      %2206 = vmatpush1.msra.mxu0 0.0
      %2207 = vmatprep.subr.mxu0 0.0
      %2208 = vmatpush1.msra.mxu0 0.0
      %2209 = vmatprep.subr.mxu0 0.0
      %2210 = vmatpush1.msra.mxu0 0.0
      %2211 = vmatprep.mubr.f32.mxu0 0.0
      %2212 = vmatmul.mubr.f32.gmra.mrb[0].mxu0 %v2052
      %v2213 = vpop.f32.mrb[0].mxu0
      %v2214 = vadd.f32 0.0, %v2213
      %v2215 = vpop.f32.mrb[0].mxu0
      %2216 = vmatprep.mubr.f32.mxu0 0.0
      %2217 = vmatmul.mubr.f32.gmra.mrb[0].mxu0 %v2055
      %v2218 = vpop.f32.mrb[0].mxu0
      %v2219 = vadd.f32 0.0, %v2218
      %v2220 = vpop.f32.mrb[0].mxu0
      %2221 = vmatprep.mubr.f32.mxu0 0.0
      %2222 = vmatmul.mubr.f32.gmra.mrb[0].mxu0 %v2058
      %v2223 = vpop.f32.mrb[0].mxu0
      %v2224 = vadd.f32 0.0, %v2223
      %v2225 = vpop.f32.mrb[0].mxu0
      %2226 = vmatprep.mubr.f32.mxu0 0.0
      %2227 = vmatmul.mubr.f32.gmra.mrb[0].mxu0 %v2061
      %v2228 = vpop.f32.mrb[0].mxu0
      %v2229 = vadd.f32 0.0, %v2228
      %v2230 = vpop.f32.mrb[0].mxu0
      %2231 = vmatprep.mubr.f32.mxu0 0.0
      %2232 = vmatmul.mubr.f32.gmra.mrb[0].mxu0 %v2064
      %v2233 = vpop.f32.mrb[0].mxu0
      %v2234 = vadd.f32 0.0, %v2233
      %v2235 = vpop.f32.mrb[0].mxu0
      %2236 = vmatprep.mubr.f32.mxu0 0.0
      %2237 = vmatmul.mubr.f32.gmra.mrb[0].mxu0 %v2067
      %v2238 = vpop.f32.mrb[0].mxu0
      %v2239 = vadd.f32 0.0, %v2238
      %v2240 = vpop.f32.mrb[0].mxu0
      %2241 = vmatprep.mubr.f32.mxu0 0.0
      %2242 = vmatmul.mubr.f32.gmra.mrb[0].mxu0 %v2070
      %v2243 = vpop.f32.mrb[0].mxu0
      %v2244 = vadd.f32 0.0, %v2243
      %v2245 = vpop.f32.mrb[0].mxu0
      %2246 = vmatprep.mubr.f32.mxu0 0.0
      %2247 = vmatmul.mubr.f32.gmra.mrb[0].mxu0 %v2073
      %v2248 = vpop.f32.mrb[0].mxu0
      %v2249 = vadd.f32 0.0, %v2248
      %v2250 = vpop.f32.mrb[0].mxu0
      %2251 = vmatprep.mubr.f32.mxu0 0.0
      %2252 = vmatmul.mubr.f32.gmra.mrb[0].mxu0 %v2076
      %v2253 = vpop.f32.mrb[0].mxu0
      %v2254 = vadd.f32 0.0, %v2253
      %v2255 = vpop.f32.mrb[0].mxu0
      %2256 = vmatprep.mubr.f32.mxu0 0.0
      %2257 = vmatmul.mubr.f32.gmra.mrb[0].mxu0 %v2079
      %v2258 = vpop.f32.mrb[0].mxu0
      %v2259 = vadd.f32 0.0, %v2258
      %v2260 = vpop.f32.mrb[0].mxu0
      %2261 = vmatprep.mubr.f32.mxu0 0.0
      %2262 = vmatmul.mubr.f32.gmra.mrb[0].mxu0 %v2082
      %v2263 = vpop.f32.mrb[0].mxu0
      %v2264 = vadd.f32 0.0, %v2263
      %v2265 = vpop.f32.mrb[0].mxu0
      %2266 = vmatprep.mubr.f32.mxu0 0.0
      %2267 = vmatmul.mubr.f32.gmra.mrb[0].mxu0 %v2085
      %v2268 = vpop.f32.mrb[0].mxu0
      %v2269 = vadd.f32 0.0, %v2268
      %v2270 = vpop.f32.mrb[0].mxu0
      %2271 = vmatprep.mubr.f32.mxu0 0.0
      %2272 = vmatmul.mubr.f32.gmra.mrb[0].mxu0 %v2088
      %v2273 = vpop.f32.mrb[0].mxu0
      %v2274 = vadd.f32 0.0, %v2273
      %v2275 = vpop.f32.mrb[0].mxu0
      %2276 = vmatprep.mubr.f32.mxu0 0.0
      %2277 = vmatmul.mubr.f32.gmra.mrb[0].mxu0 %v2091
      %v2278 = vpop.f32.mrb[0].mxu0
      %v2279 = vadd.f32 0.0, %v2278
      %v2280 = vpop.f32.mrb[0].mxu0
      %2281 = vmatprep.mubr.f32.mxu0 0.0
      %2282 = vmatmul.mubr.f32.gmra.mrb[0].mxu0 %v2094
      %v2283 = vpop.f32.mrb[0].mxu0
      %v2284 = vadd.f32 0.0, %v2283
      %v2285 = vpop.f32.mrb[0].mxu0
      %2286 = vmatprep.mubr.f32.mxu0 0.0
      %2287 = vmatmul.mubr.f32.gmra.mrb[0].mxu0 %v2097
      %v2288 = vpop.f32.mrb[0].mxu0
      %v2289 = vadd.f32 0.0, %v2288
      %v2290 = vpop.f32.mrb[0].mxu0
      %2291 = vmatprep.mubr.f32.mxu0 0.0
      %2292 = vmatmul.mubr.f32.gmra.mrb[0].mxu0 %v2100
      %v2293 = vpop.f32.mrb[0].mxu0
      %v2294 = vadd.f32 0.0, %v2293
      %v2295 = vpop.f32.mrb[0].mxu0
      %2296 = vmatprep.mubr.f32.mxu0 0.0
      %2297 = vmatmul.mubr.f32.gmra.mrb[0].mxu0 %v2103
      %v2298 = vpop.f32.mrb[0].mxu0
      %v2299 = vadd.f32 0.0, %v2298
      %v2300 = vpop.f32.mrb[0].mxu0
      %2301 = vmatprep.mubr.f32.mxu0 0.0
      %2302 = vmatmul.mubr.f32.gmra.mrb[0].mxu0 %v2106
      %v2303 = vpop.f32.mrb[0].mxu0
      %v2304 = vadd.f32 0.0, %v2303
      %v2305 = vpop.f32.mrb[0].mxu0
      %2306 = vmatprep.mubr.f32.mxu0 0.0
      %2307 = vmatmul.mubr.f32.gmra.mrb[0].mxu0 %v2109
      %v2308 = vpop.f32.mrb[0].mxu0
      %v2309 = vadd.f32 0.0, %v2308
      %v2310 = vpop.f32.mrb[0].mxu0
      %2311 = vmatprep.mubr.f32.mxu0 0.0
      %2312 = vmatmul.mubr.f32.gmra.mrb[0].mxu0 %v2112
      %v2313 = vpop.f32.mrb[0].mxu0
      %v2314 = vadd.f32 0.0, %v2313
      %v2315 = vpop.f32.mrb[0].mxu0
      %2316 = vmatprep.mubr.f32.mxu0 0.0
      %2317 = vmatmul.mubr.f32.gmra.mrb[0].mxu0 %v2115
      %v2318 = vpop.f32.mrb[0].mxu0
      %v2319 = vadd.f32 0.0, %v2318
      %v2320 = vpop.f32.mrb[0].mxu0
      %2321 = vmatprep.mubr.f32.mxu0 0.0
      %2322 = vmatmul.mubr.f32.gmra.mrb[0].mxu0 %v2118
      %v2323 = vpop.f32.mrb[0].mxu0
      %v2324 = vadd.f32 0.0, %v2323
      %v2325 = vpop.f32.mrb[0].mxu0
      %2326 = vmatprep.mubr.f32.mxu0 0.0
      %2327 = vmatmul.mubr.f32.gmra.mrb[0].mxu0 %v2121
      %v2328 = vpop.f32.mrb[0].mxu0
      %v2329 = vadd.f32 0.0, %v2328
      %v2330 = vpop.f32.mrb[0].mxu0
      %2331 = vmatprep.mubr.f32.mxu0 0.0
      %2332 = vmatmul.mubr.f32.gmra.mrb[0].mxu0 %v2124
      %v2333 = vpop.f32.mrb[0].mxu0
      %v2334 = vadd.f32 0.0, %v2333
      %v2335 = vpop.f32.mrb[0].mxu0
      %2336 = vmatprep.mubr.f32.mxu0 0.0
      %2337 = vmatmul.mubr.f32.gmra.mrb[0].mxu0 %v2127
      %v2338 = vpop.f32.mrb[0].mxu0
      %v2339 = vadd.f32 0.0, %v2338
      %v2340 = vpop.f32.mrb[0].mxu0
      %2341 = vmatprep.mubr.f32.mxu0 0.0
      %2342 = vmatmul.mubr.f32.gmra.mrb[0].mxu0 %v2130
      %v2343 = vpop.f32.mrb[0].mxu0
      %v2344 = vadd.f32 0.0, %v2343
      %v2345 = vpop.f32.mrb[0].mxu0
      %2346 = vmatprep.mubr.f32.mxu0 0.0
      %2347 = vmatmul.mubr.f32.gmra.mrb[0].mxu0 %v2133
      %v2348 = vpop.f32.mrb[0].mxu0
      %v2349 = vadd.f32 0.0, %v2348
      %v2350 = vpop.f32.mrb[0].mxu0
      %2351 = vmatprep.mubr.f32.mxu0 0.0
      %2352 = vmatmul.mubr.f32.gmra.mrb[0].mxu0 %v2136
      %v2353 = vpop.f32.mrb[0].mxu0
      %v2354 = vadd.f32 0.0, %v2353
      %v2355 = vpop.f32.mrb[0].mxu0
      %2356 = vmatprep.mubr.f32.mxu0 0.0
      %2357 = vmatmul.mubr.f32.gmra.mrb[0].mxu0 %v2139
      %v2358 = vpop.f32.mrb[0].mxu0
      %v2359 = vadd.f32 0.0, %v2358
      %v2360 = vpop.f32.mrb[0].mxu0
      %2361 = vmatprep.mubr.f32.mxu0 0.0
      %2362 = vmatmul.mubr.f32.gmra.mrb[0].mxu0 %v2142
      %v2363 = vpop.f32.mrb[0].mxu0
      %v2364 = vadd.f32 0.0, %v2363
      %v2365 = vpop.f32.mrb[0].mxu0
      %2366 = vmatprep.mubr.f32.mxu0 0.0
      %2367 = vmatmul.mubr.f32.gmra.mrb[0].mxu0 %v2145
      %v2368 = vpop.f32.mrb[0].mxu0
      %v2369 = vadd.f32 0.0, %v2368
      %v2370 = vpop.f32.mrb[0].mxu0
      %2371 = vdwg.mxu0
      %v2372 = vld [vmem:[%s2] sm:$0x1]
      %v2374 = vlaneseq
      %v2375 = vshrl.u32 %v2374, 7
      %v2376 = vsub.s32 0, %v2375
      %v2377 = vrot.slane %v2372, %v2376
      %v2379 = vmul.f32 %v2214, %v2377
      %v2380 = vmul.f32 %v2219, %v2377
      %v2381 = vmul.f32 %v2224, %v2377
      %v2382 = vmul.f32 %v2229, %v2377
      %v2383 = vmul.f32 %v2234, %v2377
      %v2384 = vmul.f32 %v2239, %v2377
      %v2385 = vmul.f32 %v2244, %v2377
      %v2386 = vmul.f32 %v2249, %v2377
      %v2387 = vmul.f32 %v2254, %v2377
      %v2388 = vmul.f32 %v2259, %v2377
      %v2389 = vmul.f32 %v2264, %v2377
      %v2390 = vmul.f32 %v2269, %v2377
      %v2391 = vmul.f32 %v2274, %v2377
      %v2392 = vmul.f32 %v2279, %v2377
      %v2393 = vmul.f32 %v2284, %v2377
      %v2394 = vmul.f32 %v2289, %v2377
      %v2395 = vmul.f32 %v2294, %v2377
      %v2396 = vmul.f32 %v2299, %v2377
      %v2397 = vmul.f32 %v2304, %v2377
      %v2398 = vmul.f32 %v2309, %v2377
      %v2399 = vmul.f32 %v2314, %v2377
      %v2400 = vmul.f32 %v2319, %v2377
      %v2401 = vmul.f32 %v2324, %v2377
      %v2402 = vmul.f32 %v2329, %v2377
      %v2403 = vmul.f32 %v2334, %v2377
      %v2404 = vmul.f32 %v2339, %v2377
      %v2405 = vmul.f32 %v2344, %v2377
      %v2406 = vmul.f32 %v2349, %v2377
      %v2407 = vmul.f32 %v2354, %v2377
      %v2408 = vmul.f32 %v2359, %v2377
      %v2409 = vmul.f32 %v2364, %v2377
      %v2410 = vmul.f32 %v2369, %v2377
      %v2411 = vld [vmem:[%s3] sm:$0x1]
      %v2413 = vlaneseq
      %v2414 = vshrl.u32 %v2413, 7
      %v2415 = vsub.s32 0, %v2414
      %v2416 = vrot.slane %v2411, %v2415
      %v2418 = vadd.f32 %v2379, %v2416
      %v2419 = vadd.f32 %v2380, %v2416
      %v2420 = vadd.f32 %v2381, %v2416
      %v2421 = vadd.f32 %v2382, %v2416
      %v2422 = vadd.f32 %v2383, %v2416
      %v2423 = vadd.f32 %v2384, %v2416
      %v2424 = vadd.f32 %v2385, %v2416
      %v2425 = vadd.f32 %v2386, %v2416
      %v2426 = vadd.f32 %v2387, %v2416
      %v2427 = vadd.f32 %v2388, %v2416
      %v2428 = vadd.f32 %v2389, %v2416
      %v2429 = vadd.f32 %v2390, %v2416
      %v2430 = vadd.f32 %v2391, %v2416
      %v2431 = vadd.f32 %v2392, %v2416
      %v2432 = vadd.f32 %v2393, %v2416
      %v2433 = vadd.f32 %v2394, %v2416
      %v2434 = vadd.f32 %v2395, %v2416
      %v2435 = vadd.f32 %v2396, %v2416
      %v2436 = vadd.f32 %v2397, %v2416
      %v2437 = vadd.f32 %v2398, %v2416
      %v2438 = vadd.f32 %v2399, %v2416
      %v2439 = vadd.f32 %v2400, %v2416
      %v2440 = vadd.f32 %v2401, %v2416
      %v2441 = vadd.f32 %v2402, %v2416
      %v2442 = vadd.f32 %v2403, %v2416
      %v2443 = vadd.f32 %v2404, %v2416
      %v2444 = vadd.f32 %v2405, %v2416
      %v2445 = vadd.f32 %v2406, %v2416
      %v2446 = vadd.f32 %v2407, %v2416
      %v2447 = vadd.f32 %v2408, %v2416
      %v2448 = vadd.f32 %v2409, %v2416
      %v2449 = vadd.f32 %v2410, %v2416
      %v2450 = vxor.u32 %v2418, 2147483648
      %v2451 = vxor.u32 %v2419, 2147483648
      %v2452 = vxor.u32 %v2420, 2147483648
      %v2453 = vxor.u32 %v2421, 2147483648
      %v2454 = vxor.u32 %v2422, 2147483648
      %v2455 = vxor.u32 %v2423, 2147483648
      %v2456 = vxor.u32 %v2424, 2147483648
      %v2457 = vxor.u32 %v2425, 2147483648
      %v2458 = vxor.u32 %v2426, 2147483648
      %v2459 = vxor.u32 %v2427, 2147483648
      %v2460 = vxor.u32 %v2428, 2147483648
      %v2461 = vxor.u32 %v2429, 2147483648
      %v2462 = vxor.u32 %v2430, 2147483648
      %v2463 = vxor.u32 %v2431, 2147483648
      %v2464 = vxor.u32 %v2432, 2147483648
      %v2465 = vxor.u32 %v2433, 2147483648
      %v2466 = vxor.u32 %v2434, 2147483648
      %v2467 = vxor.u32 %v2435, 2147483648
      %v2468 = vxor.u32 %v2436, 2147483648
      %v2469 = vxor.u32 %v2437, 2147483648
      %v2470 = vxor.u32 %v2438, 2147483648
      %v2471 = vxor.u32 %v2439, 2147483648
      %v2472 = vxor.u32 %v2440, 2147483648
      %v2473 = vxor.u32 %v2441, 2147483648
      %v2474 = vxor.u32 %v2442, 2147483648
      %v2475 = vxor.u32 %v2443, 2147483648
      %v2476 = vxor.u32 %v2444, 2147483648
      %v2477 = vxor.u32 %v2445, 2147483648
      %v2478 = vxor.u32 %v2446, 2147483648
      %v2479 = vxor.u32 %v2447, 2147483648
      %v2480 = vxor.u32 %v2448, 2147483648
      %v2481 = vxor.u32 %v2449, 2147483648
      %v2482 = vmul.f32 %v2450, 1.442695
      %v2483 = vpow.pop %v2482
      %v2484 = vmul.f32 %v2451, 1.442695
      %v2485 = vpow.pop %v2484
      %v2486 = vmul.f32 %v2452, 1.442695
      %v2487 = vpow.pop %v2486
      %v2488 = vmul.f32 %v2453, 1.442695
      %v2489 = vpow.pop %v2488
      %v2490 = vmul.f32 %v2454, 1.442695
      %v2491 = vpow.pop %v2490
      %v2492 = vmul.f32 %v2455, 1.442695
      %v2493 = vpow.pop %v2492
      %v2494 = vmul.f32 %v2456, 1.442695
      %v2495 = vpow.pop %v2494
      %v2496 = vmul.f32 %v2457, 1.442695
      %v2497 = vpow.pop %v2496
      %v2498 = vmul.f32 %v2458, 1.442695
      %v2499 = vpow.pop %v2498
      %v2500 = vmul.f32 %v2459, 1.442695
      %v2501 = vpow.pop %v2500
      %v2502 = vmul.f32 %v2460, 1.442695
      %v2503 = vpow.pop %v2502
      %v2504 = vmul.f32 %v2461, 1.442695
      %v2505 = vpow.pop %v2504
      %v2506 = vmul.f32 %v2462, 1.442695
      %v2507 = vpow.pop %v2506
      %v2508 = vmul.f32 %v2463, 1.442695
      %v2509 = vpow.pop %v2508
      %v2510 = vmul.f32 %v2464, 1.442695
      %v2511 = vpow.pop %v2510
      %v2512 = vmul.f32 %v2465, 1.442695
      %v2513 = vpow.pop %v2512
      %v2514 = vmul.f32 %v2466, 1.442695
      %v2515 = vpow.pop %v2514
      %v2516 = vmul.f32 %v2467, 1.442695
      %v2517 = vpow.pop %v2516
      %v2518 = vmul.f32 %v2468, 1.442695
      %v2519 = vpow.pop %v2518
      %v2520 = vmul.f32 %v2469, 1.442695
      %v2521 = vpow.pop %v2520
      %v2522 = vmul.f32 %v2470, 1.442695
      %v2523 = vpow.pop %v2522
      %v2524 = vmul.f32 %v2471, 1.442695
      %v2525 = vpow.pop %v2524
      %v2526 = vmul.f32 %v2472, 1.442695
      %v2527 = vpow.pop %v2526
      %v2528 = vmul.f32 %v2473, 1.442695
      %v2529 = vpow.pop %v2528
      %v2530 = vmul.f32 %v2474, 1.442695
      %v2531 = vpow.pop %v2530
      %v2532 = vmul.f32 %v2475, 1.442695
      %v2533 = vpow.pop %v2532
      %v2534 = vmul.f32 %v2476, 1.442695
      %v2535 = vpow.pop %v2534
      %v2536 = vmul.f32 %v2477, 1.442695
      %v2537 = vpow.pop %v2536
      %v2538 = vmul.f32 %v2478, 1.442695
      %v2539 = vpow.pop %v2538
      %v2540 = vmul.f32 %v2479, 1.442695
      %v2541 = vpow.pop %v2540
      %v2542 = vmul.f32 %v2480, 1.442695
      %v2543 = vpow.pop %v2542
      %v2544 = vmul.f32 %v2481, 1.442695
      %v2545 = vpow.pop %v2544
      %v2546 = vadd.f32 %v2483, 1.0
      %v2547 = vadd.f32 %v2485, 1.0
      %v2548 = vadd.f32 %v2487, 1.0
      %v2549 = vadd.f32 %v2489, 1.0
      %v2550 = vadd.f32 %v2491, 1.0
      %v2551 = vadd.f32 %v2493, 1.0
      %v2552 = vadd.f32 %v2495, 1.0
      %v2553 = vadd.f32 %v2497, 1.0
      %v2554 = vadd.f32 %v2499, 1.0
      %v2555 = vadd.f32 %v2501, 1.0
      %v2556 = vadd.f32 %v2503, 1.0
      %v2557 = vadd.f32 %v2505, 1.0
      %v2558 = vadd.f32 %v2507, 1.0
      %v2559 = vadd.f32 %v2509, 1.0
      %v2560 = vadd.f32 %v2511, 1.0
      %v2561 = vadd.f32 %v2513, 1.0
      %v2562 = vadd.f32 %v2515, 1.0
      %v2563 = vadd.f32 %v2517, 1.0
      %v2564 = vadd.f32 %v2519, 1.0
      %v2565 = vadd.f32 %v2521, 1.0
      %v2566 = vadd.f32 %v2523, 1.0
      %v2567 = vadd.f32 %v2525, 1.0
      %v2568 = vadd.f32 %v2527, 1.0
      %v2569 = vadd.f32 %v2529, 1.0
      %v2570 = vadd.f32 %v2531, 1.0
      %v2571 = vadd.f32 %v2533, 1.0
      %v2572 = vadd.f32 %v2535, 1.0
      %v2573 = vadd.f32 %v2537, 1.0
      %v2574 = vadd.f32 %v2539, 1.0
      %v2575 = vadd.f32 %v2541, 1.0
      %v2576 = vadd.f32 %v2543, 1.0
      %v2577 = vadd.f32 %v2545, 1.0
      %v2578 = vrcp.pop %v2546
      %v2579 = vmul.f32 1.0, %v2578
      %v2580 = vrcp.pop %v2547
      %v2581 = vmul.f32 1.0, %v2580
      %v2582 = vrcp.pop %v2548
      %v2583 = vmul.f32 1.0, %v2582
      %v2584 = vrcp.pop %v2549
      %v2585 = vmul.f32 1.0, %v2584
      %v2586 = vrcp.pop %v2550
      %v2587 = vmul.f32 1.0, %v2586
      %v2588 = vrcp.pop %v2551
      %v2589 = vmul.f32 1.0, %v2588
      %v2590 = vrcp.pop %v2552
      %v2591 = vmul.f32 1.0, %v2590
      %v2592 = vrcp.pop %v2553
      %v2593 = vmul.f32 1.0, %v2592
      %v2594 = vrcp.pop %v2554
      %v2595 = vmul.f32 1.0, %v2594
      %v2596 = vrcp.pop %v2555
      %v2597 = vmul.f32 1.0, %v2596
      %v2598 = vrcp.pop %v2556
      %v2599 = vmul.f32 1.0, %v2598
      %v2600 = vrcp.pop %v2557
      %v2601 = vmul.f32 1.0, %v2600
      %v2602 = vrcp.pop %v2558
      %v2603 = vmul.f32 1.0, %v2602
      %v2604 = vrcp.pop %v2559
      %v2605 = vmul.f32 1.0, %v2604
      %v2606 = vrcp.pop %v2560
      %v2607 = vmul.f32 1.0, %v2606
      %v2608 = vrcp.pop %v2561
      %v2609 = vmul.f32 1.0, %v2608
      %v2610 = vrcp.pop %v2562
      %v2611 = vmul.f32 1.0, %v2610
      %v2612 = vrcp.pop %v2563
      %v2613 = vmul.f32 1.0, %v2612
      %v2614 = vrcp.pop %v2564
      %v2615 = vmul.f32 1.0, %v2614
      %v2616 = vrcp.pop %v2565
      %v2617 = vmul.f32 1.0, %v2616
      %v2618 = vrcp.pop %v2566
      %v2619 = vmul.f32 1.0, %v2618
      %v2620 = vrcp.pop %v2567
      %v2621 = vmul.f32 1.0, %v2620
      %v2622 = vrcp.pop %v2568
      %v2623 = vmul.f32 1.0, %v2622
      %v2624 = vrcp.pop %v2569
      %v2625 = vmul.f32 1.0, %v2624
      %v2626 = vrcp.pop %v2570
      %v2627 = vmul.f32 1.0, %v2626
      %v2628 = vrcp.pop %v2571
      %v2629 = vmul.f32 1.0, %v2628
      %v2630 = vrcp.pop %v2572
      %v2631 = vmul.f32 1.0, %v2630
      %v2632 = vrcp.pop %v2573
      %v2633 = vmul.f32 1.0, %v2632
      %v2634 = vrcp.pop %v2574
      %v2635 = vmul.f32 1.0, %v2634
      %v2636 = vrcp.pop %v2575
      %v2637 = vmul.f32 1.0, %v2636
      %v2638 = vrcp.pop %v2576
      %v2639 = vmul.f32 1.0, %v2638
      %v2640 = vrcp.pop %v2577
      %v2641 = vmul.f32 1.0, %v2640
      %v2642 = vmul.f32 %v2418, %v2579
      %v2643 = vmul.f32 %v2419, %v2581
      %v2644 = vmul.f32 %v2420, %v2583
      %v2645 = vmul.f32 %v2421, %v2585
      %v2646 = vmul.f32 %v2422, %v2587
      %v2647 = vmul.f32 %v2423, %v2589
      %v2648 = vmul.f32 %v2424, %v2591
      %v2649 = vmul.f32 %v2425, %v2593
      %v2650 = vmul.f32 %v2426, %v2595
      %v2651 = vmul.f32 %v2427, %v2597
      %v2652 = vmul.f32 %v2428, %v2599
      %v2653 = vmul.f32 %v2429, %v2601
      %v2654 = vmul.f32 %v2430, %v2603
      %v2655 = vmul.f32 %v2431, %v2605
      %v2656 = vmul.f32 %v2432, %v2607
      %v2657 = vmul.f32 %v2433, %v2609
      %v2658 = vmul.f32 %v2434, %v2611
      %v2659 = vmul.f32 %v2435, %v2613
      %v2660 = vmul.f32 %v2436, %v2615
      %v2661 = vmul.f32 %v2437, %v2617
      %v2662 = vmul.f32 %v2438, %v2619
      %v2663 = vmul.f32 %v2439, %v2621
      %v2664 = vmul.f32 %v2440, %v2623
      %v2665 = vmul.f32 %v2441, %v2625
      %v2666 = vmul.f32 %v2442, %v2627
      %v2667 = vmul.f32 %v2443, %v2629
      %v2668 = vmul.f32 %v2444, %v2631
      %v2669 = vmul.f32 %v2445, %v2633
      %v2670 = vmul.f32 %v2446, %v2635
      %v2671 = vmul.f32 %v2447, %v2637
      %v2672 = vmul.f32 %v2448, %v2639
      %v2673 = vmul.f32 %v2449, %v2641
      %2674 = vst.msk [vmem:[#allocation4] sm:$0xff] %vm311, 0.0
      %2675 = vst.msk [vmem:[#allocation4 + $0x8] sm:$0xff] %vm311, 0.0
      %2676 = vst.msk [vmem:[#allocation4 + $0x10] sm:$0x3] %vm314, 0.0
      %2677 = vst.msk [vmem:[#allocation4 + $0x18] sm:$0xff] %vm311, 0.0
      %2678 = vst.msk [vmem:[#allocation4 + $0x20] sm:$0xff] %vm311, 0.0
      %2679 = vst.msk [vmem:[#allocation4 + $0x28] sm:$0x3] %vm314, 0.0
      %2680 = vst.msk [vmem:[#allocation4 + $0x30] sm:$0xff] %vm311, 0.0
      %2681 = vst.msk [vmem:[#allocation4 + $0x38] sm:$0xff] %vm311, 0.0
      %2682 = vst.msk [vmem:[#allocation4 + $0x40] sm:$0x3] %vm314, 0.0
      %2683 = vst.msk [vmem:[#allocation4 + $0x48] sm:$0xff] %vm311, 0.0
      %2684 = vst.msk [vmem:[#allocation4 + $0x50] sm:$0xff] %vm311, 0.0
      %2685 = vst.msk [vmem:[#allocation4 + $0x58] sm:$0x3] %vm314, 0.0
      %2686 = vst.msk [vmem:[#allocation4 + $0x60] sm:$0xff] %vm311, 0.0
      %2687 = vst.msk [vmem:[#allocation4 + $0x68] sm:$0xff] %vm311, 0.0
      %2688 = vst.msk [vmem:[#allocation4 + $0x70] sm:$0x3] %vm314, 0.0
      %2689 = vst.msk [vmem:[#allocation4 + $0x78] sm:$0xff] %vm311, 0.0
      %2690 = vst.msk [vmem:[#allocation4 + $0x80] sm:$0xff] %vm311, 0.0
      %2691 = vst.msk [vmem:[#allocation4 + $0x88] sm:$0x3] %vm314, 0.0
      %2692 = vst.msk [vmem:[#allocation4 + $0x90] sm:$0xff] %vm311, 0.0
      %2693 = vst.msk [vmem:[#allocation4 + $0x98] sm:$0xff] %vm311, 0.0
      %2694 = vst.msk [vmem:[#allocation4 + $0xa0] sm:$0x3] %vm314, 0.0
      %2695 = vst.msk [vmem:[#allocation4 + $0xa8] sm:$0xff] %vm311, 0.0
      %2696 = vst.msk [vmem:[#allocation4 + $0xb0] sm:$0xff] %vm311, 0.0
      %2697 = vst.msk [vmem:[#allocation4 + $0xb8] sm:$0x3] %vm314, 0.0
      %2698 = vst.msk [vmem:[#allocation4 + $0xc0] sm:$0xff] %vm311, 0.0
      %2699 = vst.msk [vmem:[#allocation4 + $0xc8] sm:$0xff] %vm311, 0.0
      %2700 = vst.msk [vmem:[#allocation4 + $0xd0] sm:$0x3] %vm314, 0.0
      %2701 = vst.msk [vmem:[#allocation4 + $0xd8] sm:$0xff] %vm311, 0.0
      %2702 = vst.msk [vmem:[#allocation4 + $0xe0] sm:$0xff] %vm311, 0.0
      %2703 = vst.msk [vmem:[#allocation4 + $0xe8] sm:$0x3] %vm314, 0.0
      %2704 = vst.msk [vmem:[#allocation4 + $0xf0] sm:$0xff] %vm311, 0.0
      %2705 = vst.msk [vmem:[#allocation4 + $0xf8] sm:$0xff] %vm311, 0.0
      %2706 = vst.msk [vmem:[#allocation4 + $0x100] sm:$0x3] %vm314, 0.0
      %2707 = vst.msk [vmem:[#allocation4 + $0x108] sm:$0xff] %vm311, 0.0
      %2708 = vst.msk [vmem:[#allocation4 + $0x110] sm:$0xff] %vm311, 0.0
      %2709 = vst.msk [vmem:[#allocation4 + $0x118] sm:$0x3] %vm314, 0.0
      %2710 = vst.msk [vmem:[#allocation4 + $0x120] sm:$0xff] %vm311, 0.0
      %2711 = vst.msk [vmem:[#allocation4 + $0x128] sm:$0xff] %vm311, 0.0
      %2712 = vst.msk [vmem:[#allocation4 + $0x130] sm:$0x3] %vm314, 0.0
      %2713 = vst.msk [vmem:[#allocation4 + $0x138] sm:$0xff] %vm311, 0.0
      %2714 = vst.msk [vmem:[#allocation4 + $0x140] sm:$0xff] %vm311, 0.0
      %2715 = vst.msk [vmem:[#allocation4 + $0x148] sm:$0x3] %vm314, 0.0
      %2716 = vst.msk [vmem:[#allocation4 + $0x150] sm:$0xff] %vm311, 0.0
      %2717 = vst.msk [vmem:[#allocation4 + $0x158] sm:$0xff] %vm311, 0.0
      %2718 = vst.msk [vmem:[#allocation4 + $0x160] sm:$0x3] %vm314, 0.0
      %2719 = vst.msk [vmem:[#allocation4 + $0x168] sm:$0xff] %vm311, 0.0
      %2720 = vst.msk [vmem:[#allocation4 + $0x170] sm:$0xff] %vm311, 0.0
      %2721 = vst.msk [vmem:[#allocation4 + $0x178] sm:$0x3] %vm314, 0.0
      %2722 = vst.msk [vmem:[#allocation4 + $0x180] sm:$0xff] %vm311, 0.0
      %2723 = vst.msk [vmem:[#allocation4 + $0x188] sm:$0xff] %vm311, 0.0
      %2724 = vst.msk [vmem:[#allocation4 + $0x190] sm:$0x3] %vm314, 0.0
      %2725 = vst.msk [vmem:[#allocation4 + $0x198] sm:$0xff] %vm311, 0.0
      %2726 = vst.msk [vmem:[#allocation4 + $0x1a0] sm:$0xff] %vm311, 0.0
      %2727 = vst.msk [vmem:[#allocation4 + $0x1a8] sm:$0x3] %vm314, 0.0
      %s2728 = scalar_lea.vmem [#allocation4], 24
      %2729 = vst.msk [vmem:[%s2728 + $0x1] sm:$0xff] %vm311, %v2642
      %2730 = vst.msk [vmem:[%s2728 + $0x9] sm:$0xff] %vm311, %v2643
      %2731 = vst.msk [vmem:[%s2728 + $0x19] sm:$0xff] %vm311, %v2644
      %2732 = vst.msk [vmem:[%s2728 + $0x21] sm:$0xff] %vm311, %v2645
      %2733 = vst.msk [vmem:[%s2728 + $0x31] sm:$0xff] %vm311, %v2646
      %2734 = vst.msk [vmem:[%s2728 + $0x39] sm:$0xff] %vm311, %v2647
      %2735 = vst.msk [vmem:[%s2728 + $0x49] sm:$0xff] %vm311, %v2648
      %2736 = vst.msk [vmem:[%s2728 + $0x51] sm:$0xff] %vm311, %v2649
      %2737 = vst.msk [vmem:[%s2728 + $0x61] sm:$0xff] %vm311, %v2650
      %2738 = vst.msk [vmem:[%s2728 + $0x69] sm:$0xff] %vm311, %v2651
      %2739 = vst.msk [vmem:[%s2728 + $0x79] sm:$0xff] %vm311, %v2652
      %2740 = vst.msk [vmem:[%s2728 + $0x81] sm:$0xff] %vm311, %v2653
      %2741 = vst.msk [vmem:[%s2728 + $0x91] sm:$0xff] %vm311, %v2654
      %2742 = vst.msk [vmem:[%s2728 + $0x99] sm:$0xff] %vm311, %v2655
      %2743 = vst.msk [vmem:[%s2728 + $0xa9] sm:$0xff] %vm311, %v2656
      %2744 = vst.msk [vmem:[%s2728 + $0xb1] sm:$0xff] %vm311, %v2657
      %2745 = vst.msk [vmem:[%s2728 + $0xc1] sm:$0xff] %vm311, %v2658
      %2746 = vst.msk [vmem:[%s2728 + $0xc9] sm:$0xff] %vm311, %v2659
      %2747 = vst.msk [vmem:[%s2728 + $0xd9] sm:$0xff] %vm311, %v2660
      %2748 = vst.msk [vmem:[%s2728 + $0xe1] sm:$0xff] %vm311, %v2661
      %2749 = vst.msk [vmem:[%s2728 + $0xf1] sm:$0xff] %vm311, %v2662
      %2750 = vst.msk [vmem:[%s2728 + $0xf9] sm:$0xff] %vm311, %v2663
      %2751 = vst.msk [vmem:[%s2728 + $0x109] sm:$0xff] %vm311, %v2664
      %2752 = vst.msk [vmem:[%s2728 + $0x111] sm:$0xff] %vm311, %v2665
      %2753 = vst.msk [vmem:[%s2728 + $0x121] sm:$0xff] %vm311, %v2666
      %2754 = vst.msk [vmem:[%s2728 + $0x129] sm:$0xff] %vm311, %v2667
      %2755 = vst.msk [vmem:[%s2728 + $0x139] sm:$0xff] %vm311, %v2668
      %2756 = vst.msk [vmem:[%s2728 + $0x141] sm:$0xff] %vm311, %v2669
      %2757 = vst.msk [vmem:[%s2728 + $0x151] sm:$0xff] %vm311, %v2670
      %2758 = vst.msk [vmem:[%s2728 + $0x159] sm:$0xff] %vm311, %v2671
      %2759 = vst.msk [vmem:[%s2728 + $0x169] sm:$0xff] %vm311, %v2672
      %2760 = vst.msk [vmem:[%s2728 + $0x171] sm:$0xff] %vm311, %v2673
      %v2761 = vld [vmem:[#allocation4] sm:$0xff]
      %v2762 = vld [vmem:[#allocation4 + $0x8] sm:$0xff]
      %v2763 = vld [vmem:[#allocation4 + $0x18] sm:$0xff]
      %v2764 = vld [vmem:[#allocation4 + $0x20] sm:$0xff]
      %v2765 = vld [vmem:[#allocation4 + $0x30] sm:$0xff]
      %v2766 = vld [vmem:[#allocation4 + $0x38] sm:$0xff]
      %v2767 = vld [vmem:[#allocation4 + $0x48] sm:$0xff]
      %v2768 = vld [vmem:[#allocation4 + $0x50] sm:$0xff]
      %v2769 = vld [vmem:[#allocation4 + $0x60] sm:$0xff]
      %v2770 = vld [vmem:[#allocation4 + $0x68] sm:$0xff]
      %v2771 = vld [vmem:[#allocation4 + $0x78] sm:$0xff]
      %v2772 = vld [vmem:[#allocation4 + $0x80] sm:$0xff]
      %v2773 = vld [vmem:[#allocation4 + $0x90] sm:$0xff]
      %v2774 = vld [vmem:[#allocation4 + $0x98] sm:$0xff]
      %v2775 = vld [vmem:[#allocation4 + $0xa8] sm:$0xff]
      %v2776 = vld [vmem:[#allocation4 + $0xb0] sm:$0xff]
      %v2777 = vld [vmem:[#allocation4 + $0xc0] sm:$0xff]
      %v2778 = vld [vmem:[#allocation4 + $0xc8] sm:$0xff]
      %v2779 = vld [vmem:[#allocation4 + $0xd8] sm:$0xff]
      %v2780 = vld [vmem:[#allocation4 + $0xe0] sm:$0xff]
      %v2781 = vld [vmem:[#allocation4 + $0xf0] sm:$0xff]
      %v2782 = vld [vmem:[#allocation4 + $0xf8] sm:$0xff]
      %v2783 = vld [vmem:[#allocation4 + $0x108] sm:$0xff]
      %v2784 = vld [vmem:[#allocation4 + $0x110] sm:$0xff]
      %v2785 = vld [vmem:[#allocation4 + $0x120] sm:$0xff]
      %v2786 = vld [vmem:[#allocation4 + $0x128] sm:$0xff]
      %v2787 = vld [vmem:[#allocation4 + $0x138] sm:$0xff]
      %v2788 = vld [vmem:[#allocation4 + $0x140] sm:$0xff]
      %v2789 = vld [vmem:[#allocation4 + $0x150] sm:$0xff]
      %v2790 = vld [vmem:[#allocation4 + $0x158] sm:$0xff]
      %v2791 = vld [vmem:[#allocation4 + $0x168] sm:$0xff]
      %v2792 = vld [vmem:[#allocation4 + $0x170] sm:$0xff]
      %2793 = vst.msk [vmem:[#allocation5] sm:$0xff] %vm311, %v2761
      %2794 = vst.msk [vmem:[#allocation5 + $0x8] sm:$0xff] %vm311, %v2762
      %2795 = vst.msk [vmem:[#allocation5 + $0x10] sm:$0xff] %vm311, %v2763
      %2796 = vst.msk [vmem:[#allocation5 + $0x18] sm:$0xff] %vm311, %v2764
      %2797 = vst.msk [vmem:[#allocation5 + $0x20] sm:$0xff] %vm311, %v2765
      %2798 = vst.msk [vmem:[#allocation5 + $0x28] sm:$0xff] %vm311, %v2766
      %2799 = vst.msk [vmem:[#allocation5 + $0x30] sm:$0xff] %vm311, %v2767
      %2800 = vst.msk [vmem:[#allocation5 + $0x38] sm:$0xff] %vm311, %v2768
      %2801 = vst.msk [vmem:[#allocation5 + $0x40] sm:$0xff] %vm311, %v2769
      %2802 = vst.msk [vmem:[#allocation5 + $0x48] sm:$0xff] %vm311, %v2770
      %2803 = vst.msk [vmem:[#allocation5 + $0x50] sm:$0xff] %vm311, %v2771
      %2804 = vst.msk [vmem:[#allocation5 + $0x58] sm:$0xff] %vm311, %v2772
      %2805 = vst.msk [vmem:[#allocation5 + $0x60] sm:$0xff] %vm311, %v2773
      %2806 = vst.msk [vmem:[#allocation5 + $0x68] sm:$0xff] %vm311, %v2774
      %2807 = vst.msk [vmem:[#allocation5 + $0x70] sm:$0xff] %vm311, %v2775
      %2808 = vst.msk [vmem:[#allocation5 + $0x78] sm:$0xff] %vm311, %v2776
      %2809 = vst.msk [vmem:[#allocation5 + $0x80] sm:$0xff] %vm311, %v2777
      %2810 = vst.msk [vmem:[#allocation5 + $0x88] sm:$0xff] %vm311, %v2778
      %2811 = vst.msk [vmem:[#allocation5 + $0x90] sm:$0xff] %vm311, %v2779
      %2812 = vst.msk [vmem:[#allocation5 + $0x98] sm:$0xff] %vm311, %v2780
      %2813 = vst.msk [vmem:[#allocation5 + $0xa0] sm:$0xff] %vm311, %v2781
      %2814 = vst.msk [vmem:[#allocation5 + $0xa8] sm:$0xff] %vm311, %v2782
      %2815 = vst.msk [vmem:[#allocation5 + $0xb0] sm:$0xff] %vm311, %v2783
      %2816 = vst.msk [vmem:[#allocation5 + $0xb8] sm:$0xff] %vm311, %v2784
      %2817 = vst.msk [vmem:[#allocation5 + $0xc0] sm:$0xff] %vm311, %v2785
      %2818 = vst.msk [vmem:[#allocation5 + $0xc8] sm:$0xff] %vm311, %v2786
      %2819 = vst.msk [vmem:[#allocation5 + $0xd0] sm:$0xff] %vm311, %v2787
      %2820 = vst.msk [vmem:[#allocation5 + $0xd8] sm:$0xff] %vm311, %v2788
      %2821 = vst.msk [vmem:[#allocation5 + $0xe0] sm:$0xff] %vm311, %v2789
      %2822 = vst.msk [vmem:[#allocation5 + $0xe8] sm:$0xff] %vm311, %v2790
      %2823 = vst.msk [vmem:[#allocation5 + $0xf0] sm:$0xff] %vm311, %v2791
      %2824 = vst.msk [vmem:[#allocation5 + $0xf8] sm:$0xff] %vm311, %v2792
      %v2825 = vld [vmem:[#allocation4 + $0x1] sm:$0xff]
      %v2826 = vld [vmem:[#allocation4 + $0x9] sm:$0xff]
      %v2827 = vld [vmem:[#allocation4 + $0x19] sm:$0xff]
      %v2828 = vld [vmem:[#allocation4 + $0x21] sm:$0xff]
      %v2829 = vld [vmem:[#allocation4 + $0x31] sm:$0xff]
      %v2830 = vld [vmem:[#allocation4 + $0x39] sm:$0xff]
      %v2831 = vld [vmem:[#allocation4 + $0x49] sm:$0xff]
      %v2832 = vld [vmem:[#allocation4 + $0x51] sm:$0xff]
      %v2833 = vld [vmem:[#allocation4 + $0x61] sm:$0xff]
      %v2834 = vld [vmem:[#allocation4 + $0x69] sm:$0xff]
      %v2835 = vld [vmem:[#allocation4 + $0x79] sm:$0xff]
      %v2836 = vld [vmem:[#allocation4 + $0x81] sm:$0xff]
      %v2837 = vld [vmem:[#allocation4 + $0x91] sm:$0xff]
      %v2838 = vld [vmem:[#allocation4 + $0x99] sm:$0xff]
      %v2839 = vld [vmem:[#allocation4 + $0xa9] sm:$0xff]
      %v2840 = vld [vmem:[#allocation4 + $0xb1] sm:$0xff]
      %v2841 = vld [vmem:[#allocation4 + $0xc1] sm:$0xff]
      %v2842 = vld [vmem:[#allocation4 + $0xc9] sm:$0xff]
      %v2843 = vld [vmem:[#allocation4 + $0xd9] sm:$0xff]
      %v2844 = vld [vmem:[#allocation4 + $0xe1] sm:$0xff]
      %v2845 = vld [vmem:[#allocation4 + $0xf1] sm:$0xff]
      %v2846 = vld [vmem:[#allocation4 + $0xf9] sm:$0xff]
      %v2847 = vld [vmem:[#allocation4 + $0x109] sm:$0xff]
      %v2848 = vld [vmem:[#allocation4 + $0x111] sm:$0xff]
      %v2849 = vld [vmem:[#allocation4 + $0x121] sm:$0xff]
      %v2850 = vld [vmem:[#allocation4 + $0x129] sm:$0xff]
      %v2851 = vld [vmem:[#allocation4 + $0x139] sm:$0xff]
      %v2852 = vld [vmem:[#allocation4 + $0x141] sm:$0xff]
      %v2853 = vld [vmem:[#allocation4 + $0x151] sm:$0xff]
      %v2854 = vld [vmem:[#allocation4 + $0x159] sm:$0xff]
      %v2855 = vld [vmem:[#allocation4 + $0x169] sm:$0xff]
      %v2856 = vld [vmem:[#allocation4 + $0x171] sm:$0xff]
      %2889 = vrot.lane.b32.xlu0 %v2825, 8
      %v2890 = vpop.permute.xlu0 %2889
      %2891 = vrot.lane.b32.xlu0 %v2826, 8
      %v2892 = vpop.permute.xlu0 %2891
      %2893 = vrot.lane.b32.xlu0 %v2827, 8
      %v2894 = vpop.permute.xlu0 %2893
      %2895 = vrot.lane.b32.xlu0 %v2828, 8
      %v2896 = vpop.permute.xlu0 %2895
      %2897 = vrot.lane.b32.xlu0 %v2829, 8
      %v2898 = vpop.permute.xlu0 %2897
      %2899 = vrot.lane.b32.xlu0 %v2830, 8
      %v2900 = vpop.permute.xlu0 %2899
      %2901 = vrot.lane.b32.xlu0 %v2831, 8
      %v2902 = vpop.permute.xlu0 %2901
      %2903 = vrot.lane.b32.xlu0 %v2832, 8
      %v2904 = vpop.permute.xlu0 %2903
      %2905 = vrot.lane.b32.xlu0 %v2833, 8
      %v2906 = vpop.permute.xlu0 %2905
      %2907 = vrot.lane.b32.xlu0 %v2834, 8
      %v2908 = vpop.permute.xlu0 %2907
      %2909 = vrot.lane.b32.xlu0 %v2835, 8
      %v2910 = vpop.permute.xlu0 %2909
      %2911 = vrot.lane.b32.xlu0 %v2836, 8
      %v2912 = vpop.permute.xlu0 %2911
      %2913 = vrot.lane.b32.xlu0 %v2837, 8
      %v2914 = vpop.permute.xlu0 %2913
      %2915 = vrot.lane.b32.xlu0 %v2838, 8
      %v2916 = vpop.permute.xlu0 %2915
      %2917 = vrot.lane.b32.xlu0 %v2839, 8
      %v2918 = vpop.permute.xlu0 %2917
      %2919 = vrot.lane.b32.xlu0 %v2840, 8
      %v2920 = vpop.permute.xlu0 %2919
      %2921 = vrot.lane.b32.xlu0 %v2841, 8
      %v2922 = vpop.permute.xlu0 %2921
      %2923 = vrot.lane.b32.xlu0 %v2842, 8
      %v2924 = vpop.permute.xlu0 %2923
      %2925 = vrot.lane.b32.xlu0 %v2843, 8
      %v2926 = vpop.permute.xlu0 %2925
      %2927 = vrot.lane.b32.xlu0 %v2844, 8
      %v2928 = vpop.permute.xlu0 %2927
      %2929 = vrot.lane.b32.xlu0 %v2845, 8
      %v2930 = vpop.permute.xlu0 %2929
      %2931 = vrot.lane.b32.xlu0 %v2846, 8
      %v2932 = vpop.permute.xlu0 %2931
      %2933 = vrot.lane.b32.xlu0 %v2847, 8
      %v2934 = vpop.permute.xlu0 %2933
      %2935 = vrot.lane.b32.xlu0 %v2848, 8
      %v2936 = vpop.permute.xlu0 %2935
      %2937 = vrot.lane.b32.xlu0 %v2849, 8
      %v2938 = vpop.permute.xlu0 %2937
      %2939 = vrot.lane.b32.xlu0 %v2850, 8
      %v2940 = vpop.permute.xlu0 %2939
      %2941 = vrot.lane.b32.xlu0 %v2851, 8
      %v2942 = vpop.permute.xlu0 %2941
      %2943 = vrot.lane.b32.xlu0 %v2852, 8
      %v2944 = vpop.permute.xlu0 %2943
      %2945 = vrot.lane.b32.xlu0 %v2853, 8
      %v2946 = vpop.permute.xlu0 %2945
      %2947 = vrot.lane.b32.xlu0 %v2854, 8
      %v2948 = vpop.permute.xlu0 %2947
      %2949 = vrot.lane.b32.xlu0 %v2855, 8
      %v2950 = vpop.permute.xlu0 %2949
      %2951 = vrot.lane.b32.xlu0 %v2856, 8
      %v2952 = vpop.permute.xlu0 %2951
      %2985 = vst.msk [vmem:[#allocation5] sm:$0xff] %vm624, %v2890
      %2986 = vst.msk [vmem:[#allocation5 + $0x8] sm:$0xff] %vm624, %v2892
      %2987 = vst.msk [vmem:[#allocation5 + $0x10] sm:$0xff] %vm624, %v2894
      %2988 = vst.msk [vmem:[#allocation5 + $0x18] sm:$0xff] %vm624, %v2896
      %2989 = vst.msk [vmem:[#allocation5 + $0x20] sm:$0xff] %vm624, %v2898
      %2990 = vst.msk [vmem:[#allocation5 + $0x28] sm:$0xff] %vm624, %v2900
      %2991 = vst.msk [vmem:[#allocation5 + $0x30] sm:$0xff] %vm624, %v2902
      %2992 = vst.msk [vmem:[#allocation5 + $0x38] sm:$0xff] %vm624, %v2904
      %2993 = vst.msk [vmem:[#allocation5 + $0x40] sm:$0xff] %vm624, %v2906
      %2994 = vst.msk [vmem:[#allocation5 + $0x48] sm:$0xff] %vm624, %v2908
      %2995 = vst.msk [vmem:[#allocation5 + $0x50] sm:$0xff] %vm624, %v2910
      %2996 = vst.msk [vmem:[#allocation5 + $0x58] sm:$0xff] %vm624, %v2912
      %2997 = vst.msk [vmem:[#allocation5 + $0x60] sm:$0xff] %vm624, %v2914
      %2998 = vst.msk [vmem:[#allocation5 + $0x68] sm:$0xff] %vm624, %v2916
      %2999 = vst.msk [vmem:[#allocation5 + $0x70] sm:$0xff] %vm624, %v2918
      %3000 = vst.msk [vmem:[#allocation5 + $0x78] sm:$0xff] %vm624, %v2920
      %3001 = vst.msk [vmem:[#allocation5 + $0x80] sm:$0xff] %vm624, %v2922
      %3002 = vst.msk [vmem:[#allocation5 + $0x88] sm:$0xff] %vm624, %v2924
      %3003 = vst.msk [vmem:[#allocation5 + $0x90] sm:$0xff] %vm624, %v2926
      %3004 = vst.msk [vmem:[#allocation5 + $0x98] sm:$0xff] %vm624, %v2928
      %3005 = vst.msk [vmem:[#allocation5 + $0xa0] sm:$0xff] %vm624, %v2930
      %3006 = vst.msk [vmem:[#allocation5 + $0xa8] sm:$0xff] %vm624, %v2932
      %3007 = vst.msk [vmem:[#allocation5 + $0xb0] sm:$0xff] %vm624, %v2934
      %3008 = vst.msk [vmem:[#allocation5 + $0xb8] sm:$0xff] %vm624, %v2936
      %3009 = vst.msk [vmem:[#allocation5 + $0xc0] sm:$0xff] %vm624, %v2938
      %3010 = vst.msk [vmem:[#allocation5 + $0xc8] sm:$0xff] %vm624, %v2940
      %3011 = vst.msk [vmem:[#allocation5 + $0xd0] sm:$0xff] %vm624, %v2942
      %3012 = vst.msk [vmem:[#allocation5 + $0xd8] sm:$0xff] %vm624, %v2944
      %3013 = vst.msk [vmem:[#allocation5 + $0xe0] sm:$0xff] %vm624, %v2946
      %3014 = vst.msk [vmem:[#allocation5 + $0xe8] sm:$0xff] %vm624, %v2948
      %3015 = vst.msk [vmem:[#allocation5 + $0xf0] sm:$0xff] %vm624, %v2950
      %3016 = vst.msk [vmem:[#allocation5 + $0xf8] sm:$0xff] %vm624, %v2952
      %v3017 = vld [vmem:[#allocation4 + $0x2] sm:$0xff]
      %v3018 = vld [vmem:[#allocation4 + $0xa] sm:$0xff]
      %v3019 = vld [vmem:[#allocation4 + $0x1a] sm:$0xff]
      %v3020 = vld [vmem:[#allocation4 + $0x22] sm:$0xff]
      %v3021 = vld [vmem:[#allocation4 + $0x32] sm:$0xff]
      %v3022 = vld [vmem:[#allocation4 + $0x3a] sm:$0xff]
      %v3023 = vld [vmem:[#allocation4 + $0x4a] sm:$0xff]
      %v3024 = vld [vmem:[#allocation4 + $0x52] sm:$0xff]
      %v3025 = vld [vmem:[#allocation4 + $0x62] sm:$0xff]
      %v3026 = vld [vmem:[#allocation4 + $0x6a] sm:$0xff]
      %v3027 = vld [vmem:[#allocation4 + $0x7a] sm:$0xff]
      %v3028 = vld [vmem:[#allocation4 + $0x82] sm:$0xff]
      %v3029 = vld [vmem:[#allocation4 + $0x92] sm:$0xff]
      %v3030 = vld [vmem:[#allocation4 + $0x9a] sm:$0xff]
      %v3031 = vld [vmem:[#allocation4 + $0xaa] sm:$0xff]
      %v3032 = vld [vmem:[#allocation4 + $0xb2] sm:$0xff]
      %v3033 = vld [vmem:[#allocation4 + $0xc2] sm:$0xff]
      %v3034 = vld [vmem:[#allocation4 + $0xca] sm:$0xff]
      %v3035 = vld [vmem:[#allocation4 + $0xda] sm:$0xff]
      %v3036 = vld [vmem:[#allocation4 + $0xe2] sm:$0xff]
      %v3037 = vld [vmem:[#allocation4 + $0xf2] sm:$0xff]
      %v3038 = vld [vmem:[#allocation4 + $0xfa] sm:$0xff]
      %v3039 = vld [vmem:[#allocation4 + $0x10a] sm:$0xff]
      %v3040 = vld [vmem:[#allocation4 + $0x112] sm:$0xff]
      %v3041 = vld [vmem:[#allocation4 + $0x122] sm:$0xff]
      %v3042 = vld [vmem:[#allocation4 + $0x12a] sm:$0xff]
      %v3043 = vld [vmem:[#allocation4 + $0x13a] sm:$0xff]
      %v3044 = vld [vmem:[#allocation4 + $0x142] sm:$0xff]
      %v3045 = vld [vmem:[#allocation4 + $0x152] sm:$0xff]
      %v3046 = vld [vmem:[#allocation4 + $0x15a] sm:$0xff]
      %v3047 = vld [vmem:[#allocation4 + $0x16a] sm:$0xff]
      %v3048 = vld [vmem:[#allocation4 + $0x172] sm:$0xff]
      %3081 = vrot.lane.b32.xlu0 %v3017, 16
      %v3082 = vpop.permute.xlu0 %3081
      %3083 = vrot.lane.b32.xlu0 %v3018, 16
      %v3084 = vpop.permute.xlu0 %3083
      %3085 = vrot.lane.b32.xlu0 %v3019, 16
      %v3086 = vpop.permute.xlu0 %3085
      %3087 = vrot.lane.b32.xlu0 %v3020, 16
      %v3088 = vpop.permute.xlu0 %3087
      %3089 = vrot.lane.b32.xlu0 %v3021, 16
      %v3090 = vpop.permute.xlu0 %3089
      %3091 = vrot.lane.b32.xlu0 %v3022, 16
      %v3092 = vpop.permute.xlu0 %3091
      %3093 = vrot.lane.b32.xlu0 %v3023, 16
      %v3094 = vpop.permute.xlu0 %3093
      %3095 = vrot.lane.b32.xlu0 %v3024, 16
      %v3096 = vpop.permute.xlu0 %3095
      %3097 = vrot.lane.b32.xlu0 %v3025, 16
      %v3098 = vpop.permute.xlu0 %3097
      %3099 = vrot.lane.b32.xlu0 %v3026, 16
      %v3100 = vpop.permute.xlu0 %3099
      %3101 = vrot.lane.b32.xlu0 %v3027, 16
      %v3102 = vpop.permute.xlu0 %3101
      %3103 = vrot.lane.b32.xlu0 %v3028, 16
      %v3104 = vpop.permute.xlu0 %3103
      %3105 = vrot.lane.b32.xlu0 %v3029, 16
      %v3106 = vpop.permute.xlu0 %3105
      %3107 = vrot.lane.b32.xlu0 %v3030, 16
      %v3108 = vpop.permute.xlu0 %3107
      %3109 = vrot.lane.b32.xlu0 %v3031, 16
      %v3110 = vpop.permute.xlu0 %3109
      %3111 = vrot.lane.b32.xlu0 %v3032, 16
      %v3112 = vpop.permute.xlu0 %3111
      %3113 = vrot.lane.b32.xlu0 %v3033, 16
      %v3114 = vpop.permute.xlu0 %3113
      %3115 = vrot.lane.b32.xlu0 %v3034, 16
      %v3116 = vpop.permute.xlu0 %3115
      %3117 = vrot.lane.b32.xlu0 %v3035, 16
      %v3118 = vpop.permute.xlu0 %3117
      %3119 = vrot.lane.b32.xlu0 %v3036, 16
      %v3120 = vpop.permute.xlu0 %3119
      %3121 = vrot.lane.b32.xlu0 %v3037, 16
      %v3122 = vpop.permute.xlu0 %3121
      %3123 = vrot.lane.b32.xlu0 %v3038, 16
      %v3124 = vpop.permute.xlu0 %3123
      %3125 = vrot.lane.b32.xlu0 %v3039, 16
      %v3126 = vpop.permute.xlu0 %3125
      %3127 = vrot.lane.b32.xlu0 %v3040, 16
      %v3128 = vpop.permute.xlu0 %3127
      %3129 = vrot.lane.b32.xlu0 %v3041, 16
      %v3130 = vpop.permute.xlu0 %3129
      %3131 = vrot.lane.b32.xlu0 %v3042, 16
      %v3132 = vpop.permute.xlu0 %3131
      %3133 = vrot.lane.b32.xlu0 %v3043, 16
      %v3134 = vpop.permute.xlu0 %3133
      %3135 = vrot.lane.b32.xlu0 %v3044, 16
      %v3136 = vpop.permute.xlu0 %3135
      %3137 = vrot.lane.b32.xlu0 %v3045, 16
      %v3138 = vpop.permute.xlu0 %3137
      %3139 = vrot.lane.b32.xlu0 %v3046, 16
      %v3140 = vpop.permute.xlu0 %3139
      %3141 = vrot.lane.b32.xlu0 %v3047, 16
      %v3142 = vpop.permute.xlu0 %3141
      %3143 = vrot.lane.b32.xlu0 %v3048, 16
      %v3144 = vpop.permute.xlu0 %3143
      %3177 = vst.msk [vmem:[#allocation5] sm:$0xff] %vm817, %v3082
      %3178 = vst.msk [vmem:[#allocation5 + $0x8] sm:$0xff] %vm817, %v3084
      %3179 = vst.msk [vmem:[#allocation5 + $0x10] sm:$0xff] %vm817, %v3086
      %3180 = vst.msk [vmem:[#allocation5 + $0x18] sm:$0xff] %vm817, %v3088
      %3181 = vst.msk [vmem:[#allocation5 + $0x20] sm:$0xff] %vm817, %v3090
      %3182 = vst.msk [vmem:[#allocation5 + $0x28] sm:$0xff] %vm817, %v3092
      %3183 = vst.msk [vmem:[#allocation5 + $0x30] sm:$0xff] %vm817, %v3094
      %3184 = vst.msk [vmem:[#allocation5 + $0x38] sm:$0xff] %vm817, %v3096
      %3185 = vst.msk [vmem:[#allocation5 + $0x40] sm:$0xff] %vm817, %v3098
      %3186 = vst.msk [vmem:[#allocation5 + $0x48] sm:$0xff] %vm817, %v3100
      %3187 = vst.msk [vmem:[#allocation5 + $0x50] sm:$0xff] %vm817, %v3102
      %3188 = vst.msk [vmem:[#allocation5 + $0x58] sm:$0xff] %vm817, %v3104
      %3189 = vst.msk [vmem:[#allocation5 + $0x60] sm:$0xff] %vm817, %v3106
      %3190 = vst.msk [vmem:[#allocation5 + $0x68] sm:$0xff] %vm817, %v3108
      %3191 = vst.msk [vmem:[#allocation5 + $0x70] sm:$0xff] %vm817, %v3110
      %3192 = vst.msk [vmem:[#allocation5 + $0x78] sm:$0xff] %vm817, %v3112
      %3193 = vst.msk [vmem:[#allocation5 + $0x80] sm:$0xff] %vm817, %v3114
      %3194 = vst.msk [vmem:[#allocation5 + $0x88] sm:$0xff] %vm817, %v3116
      %3195 = vst.msk [vmem:[#allocation5 + $0x90] sm:$0xff] %vm817, %v3118
      %3196 = vst.msk [vmem:[#allocation5 + $0x98] sm:$0xff] %vm817, %v3120
      %3197 = vst.msk [vmem:[#allocation5 + $0xa0] sm:$0xff] %vm817, %v3122
      %3198 = vst.msk [vmem:[#allocation5 + $0xa8] sm:$0xff] %vm817, %v3124
      %3199 = vst.msk [vmem:[#allocation5 + $0xb0] sm:$0xff] %vm817, %v3126
      %3200 = vst.msk [vmem:[#allocation5 + $0xb8] sm:$0xff] %vm817, %v3128
      %3201 = vst.msk [vmem:[#allocation5 + $0xc0] sm:$0xff] %vm817, %v3130
      %3202 = vst.msk [vmem:[#allocation5 + $0xc8] sm:$0xff] %vm817, %v3132
      %3203 = vst.msk [vmem:[#allocation5 + $0xd0] sm:$0xff] %vm817, %v3134
      %3204 = vst.msk [vmem:[#allocation5 + $0xd8] sm:$0xff] %vm817, %v3136
      %3205 = vst.msk [vmem:[#allocation5 + $0xe0] sm:$0xff] %vm817, %v3138
      %3206 = vst.msk [vmem:[#allocation5 + $0xe8] sm:$0xff] %vm817, %v3140
      %3207 = vst.msk [vmem:[#allocation5 + $0xf0] sm:$0xff] %vm817, %v3142
      %3208 = vst.msk [vmem:[#allocation5 + $0xf8] sm:$0xff] %vm817, %v3144
      %v3209 = vld [vmem:[%s2728] sm:$0xff]
      %v3210 = vld [vmem:[%s2728 + $0x8] sm:$0xff]
      %v3211 = vld [vmem:[%s2728 + $0x18] sm:$0xff]
      %v3212 = vld [vmem:[%s2728 + $0x20] sm:$0xff]
      %v3213 = vld [vmem:[%s2728 + $0x30] sm:$0xff]
      %v3214 = vld [vmem:[%s2728 + $0x38] sm:$0xff]
      %v3215 = vld [vmem:[%s2728 + $0x48] sm:$0xff]
      %v3216 = vld [vmem:[%s2728 + $0x50] sm:$0xff]
      %v3217 = vld [vmem:[%s2728 + $0x60] sm:$0xff]
      %v3218 = vld [vmem:[%s2728 + $0x68] sm:$0xff]
      %v3219 = vld [vmem:[%s2728 + $0x78] sm:$0xff]
      %v3220 = vld [vmem:[%s2728 + $0x80] sm:$0xff]
      %v3221 = vld [vmem:[%s2728 + $0x90] sm:$0xff]
      %v3222 = vld [vmem:[%s2728 + $0x98] sm:$0xff]
      %v3223 = vld [vmem:[%s2728 + $0xa8] sm:$0xff]
      %v3224 = vld [vmem:[%s2728 + $0xb0] sm:$0xff]
      %v3225 = vld [vmem:[%s2728 + $0xc0] sm:$0xff]
      %v3226 = vld [vmem:[%s2728 + $0xc8] sm:$0xff]
      %v3227 = vld [vmem:[%s2728 + $0xd8] sm:$0xff]
      %v3228 = vld [vmem:[%s2728 + $0xe0] sm:$0xff]
      %v3229 = vld [vmem:[%s2728 + $0xf0] sm:$0xff]
      %v3230 = vld [vmem:[%s2728 + $0xf8] sm:$0xff]
      %v3231 = vld [vmem:[%s2728 + $0x108] sm:$0xff]
      %v3232 = vld [vmem:[%s2728 + $0x110] sm:$0xff]
      %v3233 = vld [vmem:[%s2728 + $0x120] sm:$0xff]
      %v3234 = vld [vmem:[%s2728 + $0x128] sm:$0xff]
      %v3235 = vld [vmem:[%s2728 + $0x138] sm:$0xff]
      %v3236 = vld [vmem:[%s2728 + $0x140] sm:$0xff]
      %v3237 = vld [vmem:[%s2728 + $0x150] sm:$0xff]
      %v3238 = vld [vmem:[%s2728 + $0x158] sm:$0xff]
      %v3239 = vld [vmem:[%s2728 + $0x168] sm:$0xff]
      %v3240 = vld [vmem:[%s2728 + $0x170] sm:$0xff]
      %3273 = vrot.lane.b32.xlu0 %v3209, 24
      %v3274 = vpop.permute.xlu0 %3273
      %3275 = vrot.lane.b32.xlu0 %v3210, 24
      %v3276 = vpop.permute.xlu0 %3275
      %3277 = vrot.lane.b32.xlu0 %v3211, 24
      %v3278 = vpop.permute.xlu0 %3277
      %3279 = vrot.lane.b32.xlu0 %v3212, 24
      %v3280 = vpop.permute.xlu0 %3279
      %3281 = vrot.lane.b32.xlu0 %v3213, 24
      %v3282 = vpop.permute.xlu0 %3281
      %3283 = vrot.lane.b32.xlu0 %v3214, 24
      %v3284 = vpop.permute.xlu0 %3283
      %3285 = vrot.lane.b32.xlu0 %v3215, 24
      %v3286 = vpop.permute.xlu0 %3285
      %3287 = vrot.lane.b32.xlu0 %v3216, 24
      %v3288 = vpop.permute.xlu0 %3287
      %3289 = vrot.lane.b32.xlu0 %v3217, 24
      %v3290 = vpop.permute.xlu0 %3289
      %3291 = vrot.lane.b32.xlu0 %v3218, 24
      %v3292 = vpop.permute.xlu0 %3291
      %3293 = vrot.lane.b32.xlu0 %v3219, 24
      %v3294 = vpop.permute.xlu0 %3293
      %3295 = vrot.lane.b32.xlu0 %v3220, 24
      %v3296 = vpop.permute.xlu0 %3295
      %3297 = vrot.lane.b32.xlu0 %v3221, 24
      %v3298 = vpop.permute.xlu0 %3297
      %3299 = vrot.lane.b32.xlu0 %v3222, 24
      %v3300 = vpop.permute.xlu0 %3299
      %3301 = vrot.lane.b32.xlu0 %v3223, 24
      %v3302 = vpop.permute.xlu0 %3301
      %3303 = vrot.lane.b32.xlu0 %v3224, 24
      %v3304 = vpop.permute.xlu0 %3303
      %3305 = vrot.lane.b32.xlu0 %v3225, 24
      %v3306 = vpop.permute.xlu0 %3305
      %3307 = vrot.lane.b32.xlu0 %v3226, 24
      %v3308 = vpop.permute.xlu0 %3307
      %3309 = vrot.lane.b32.xlu0 %v3227, 24
      %v3310 = vpop.permute.xlu0 %3309
      %3311 = vrot.lane.b32.xlu0 %v3228, 24
      %v3312 = vpop.permute.xlu0 %3311
      %3313 = vrot.lane.b32.xlu0 %v3229, 24
      %v3314 = vpop.permute.xlu0 %3313
      %3315 = vrot.lane.b32.xlu0 %v3230, 24
      %v3316 = vpop.permute.xlu0 %3315
      %3317 = vrot.lane.b32.xlu0 %v3231, 24
      %v3318 = vpop.permute.xlu0 %3317
      %3319 = vrot.lane.b32.xlu0 %v3232, 24
      %v3320 = vpop.permute.xlu0 %3319
      %3321 = vrot.lane.b32.xlu0 %v3233, 24
      %v3322 = vpop.permute.xlu0 %3321
      %3323 = vrot.lane.b32.xlu0 %v3234, 24
      %v3324 = vpop.permute.xlu0 %3323
      %3325 = vrot.lane.b32.xlu0 %v3235, 24
      %v3326 = vpop.permute.xlu0 %3325
      %3327 = vrot.lane.b32.xlu0 %v3236, 24
      %v3328 = vpop.permute.xlu0 %3327
      %3329 = vrot.lane.b32.xlu0 %v3237, 24
      %v3330 = vpop.permute.xlu0 %3329
      %3331 = vrot.lane.b32.xlu0 %v3238, 24
      %v3332 = vpop.permute.xlu0 %3331
      %3333 = vrot.lane.b32.xlu0 %v3239, 24
      %v3334 = vpop.permute.xlu0 %3333
      %3335 = vrot.lane.b32.xlu0 %v3240, 24
      %v3336 = vpop.permute.xlu0 %3335
      %3369 = vst.msk [vmem:[#allocation5] sm:$0xff] %vm1010, %v3274
      %3370 = vst.msk [vmem:[#allocation5 + $0x8] sm:$0xff] %vm1010, %v3276
      %3371 = vst.msk [vmem:[#allocation5 + $0x10] sm:$0xff] %vm1010, %v3278
      %3372 = vst.msk [vmem:[#allocation5 + $0x18] sm:$0xff] %vm1010, %v3280
      %3373 = vst.msk [vmem:[#allocation5 + $0x20] sm:$0xff] %vm1010, %v3282
      %3374 = vst.msk [vmem:[#allocation5 + $0x28] sm:$0xff] %vm1010, %v3284
      %3375 = vst.msk [vmem:[#allocation5 + $0x30] sm:$0xff] %vm1010, %v3286
      %3376 = vst.msk [vmem:[#allocation5 + $0x38] sm:$0xff] %vm1010, %v3288
      %3377 = vst.msk [vmem:[#allocation5 + $0x40] sm:$0xff] %vm1010, %v3290
      %3378 = vst.msk [vmem:[#allocation5 + $0x48] sm:$0xff] %vm1010, %v3292
      %3379 = vst.msk [vmem:[#allocation5 + $0x50] sm:$0xff] %vm1010, %v3294
      %3380 = vst.msk [vmem:[#allocation5 + $0x58] sm:$0xff] %vm1010, %v3296
      %3381 = vst.msk [vmem:[#allocation5 + $0x60] sm:$0xff] %vm1010, %v3298
      %3382 = vst.msk [vmem:[#allocation5 + $0x68] sm:$0xff] %vm1010, %v3300
      %3383 = vst.msk [vmem:[#allocation5 + $0x70] sm:$0xff] %vm1010, %v3302
      %3384 = vst.msk [vmem:[#allocation5 + $0x78] sm:$0xff] %vm1010, %v3304
      %3385 = vst.msk [vmem:[#allocation5 + $0x80] sm:$0xff] %vm1010, %v3306
      %3386 = vst.msk [vmem:[#allocation5 + $0x88] sm:$0xff] %vm1010, %v3308
      %3387 = vst.msk [vmem:[#allocation5 + $0x90] sm:$0xff] %vm1010, %v3310
      %3388 = vst.msk [vmem:[#allocation5 + $0x98] sm:$0xff] %vm1010, %v3312
      %3389 = vst.msk [vmem:[#allocation5 + $0xa0] sm:$0xff] %vm1010, %v3314
      %3390 = vst.msk [vmem:[#allocation5 + $0xa8] sm:$0xff] %vm1010, %v3316
      %3391 = vst.msk [vmem:[#allocation5 + $0xb0] sm:$0xff] %vm1010, %v3318
      %3392 = vst.msk [vmem:[#allocation5 + $0xb8] sm:$0xff] %vm1010, %v3320
      %3393 = vst.msk [vmem:[#allocation5 + $0xc0] sm:$0xff] %vm1010, %v3322
      %3394 = vst.msk [vmem:[#allocation5 + $0xc8] sm:$0xff] %vm1010, %v3324
      %3395 = vst.msk [vmem:[#allocation5 + $0xd0] sm:$0xff] %vm1010, %v3326
      %3396 = vst.msk [vmem:[#allocation5 + $0xd8] sm:$0xff] %vm1010, %v3328
      %3397 = vst.msk [vmem:[#allocation5 + $0xe0] sm:$0xff] %vm1010, %v3330
      %3398 = vst.msk [vmem:[#allocation5 + $0xe8] sm:$0xff] %vm1010, %v3332
      %3399 = vst.msk [vmem:[#allocation5 + $0xf0] sm:$0xff] %vm1010, %v3334
      %3400 = vst.msk [vmem:[#allocation5 + $0xf8] sm:$0xff] %vm1010, %v3336
      %v3401 = vld [vmem:[%s2728 + $0x1] sm:$0xff]
      %v3402 = vld [vmem:[%s2728 + $0x9] sm:$0xff]
      %v3403 = vld [vmem:[%s2728 + $0x19] sm:$0xff]
      %v3404 = vld [vmem:[%s2728 + $0x21] sm:$0xff]
      %v3405 = vld [vmem:[%s2728 + $0x31] sm:$0xff]
      %v3406 = vld [vmem:[%s2728 + $0x39] sm:$0xff]
      %v3407 = vld [vmem:[%s2728 + $0x49] sm:$0xff]
      %v3408 = vld [vmem:[%s2728 + $0x51] sm:$0xff]
      %v3409 = vld [vmem:[%s2728 + $0x61] sm:$0xff]
      %v3410 = vld [vmem:[%s2728 + $0x69] sm:$0xff]
      %v3411 = vld [vmem:[%s2728 + $0x79] sm:$0xff]
      %v3412 = vld [vmem:[%s2728 + $0x81] sm:$0xff]
      %v3413 = vld [vmem:[%s2728 + $0x91] sm:$0xff]
      %v3414 = vld [vmem:[%s2728 + $0x99] sm:$0xff]
      %v3415 = vld [vmem:[%s2728 + $0xa9] sm:$0xff]
      %v3416 = vld [vmem:[%s2728 + $0xb1] sm:$0xff]
      %v3417 = vld [vmem:[%s2728 + $0xc1] sm:$0xff]
      %v3418 = vld [vmem:[%s2728 + $0xc9] sm:$0xff]
      %v3419 = vld [vmem:[%s2728 + $0xd9] sm:$0xff]
      %v3420 = vld [vmem:[%s2728 + $0xe1] sm:$0xff]
      %v3421 = vld [vmem:[%s2728 + $0xf1] sm:$0xff]
      %v3422 = vld [vmem:[%s2728 + $0xf9] sm:$0xff]
      %v3423 = vld [vmem:[%s2728 + $0x109] sm:$0xff]
      %v3424 = vld [vmem:[%s2728 + $0x111] sm:$0xff]
      %v3425 = vld [vmem:[%s2728 + $0x121] sm:$0xff]
      %v3426 = vld [vmem:[%s2728 + $0x129] sm:$0xff]
      %v3427 = vld [vmem:[%s2728 + $0x139] sm:$0xff]
      %v3428 = vld [vmem:[%s2728 + $0x141] sm:$0xff]
      %v3429 = vld [vmem:[%s2728 + $0x151] sm:$0xff]
      %v3430 = vld [vmem:[%s2728 + $0x159] sm:$0xff]
      %v3431 = vld [vmem:[%s2728 + $0x169] sm:$0xff]
      %v3432 = vld [vmem:[%s2728 + $0x171] sm:$0xff]
      %3465 = vrot.lane.b32.xlu0 %v3401, 32
      %v3466 = vpop.permute.xlu0 %3465
      %3467 = vrot.lane.b32.xlu0 %v3402, 32
      %v3468 = vpop.permute.xlu0 %3467
      %3469 = vrot.lane.b32.xlu0 %v3403, 32
      %v3470 = vpop.permute.xlu0 %3469
      %3471 = vrot.lane.b32.xlu0 %v3404, 32
      %v3472 = vpop.permute.xlu0 %3471
      %3473 = vrot.lane.b32.xlu0 %v3405, 32
      %v3474 = vpop.permute.xlu0 %3473
      %3475 = vrot.lane.b32.xlu0 %v3406, 32
      %v3476 = vpop.permute.xlu0 %3475
      %3477 = vrot.lane.b32.xlu0 %v3407, 32
      %v3478 = vpop.permute.xlu0 %3477
      %3479 = vrot.lane.b32.xlu0 %v3408, 32
      %v3480 = vpop.permute.xlu0 %3479
      %3481 = vrot.lane.b32.xlu0 %v3409, 32
      %v3482 = vpop.permute.xlu0 %3481
      %3483 = vrot.lane.b32.xlu0 %v3410, 32
      %v3484 = vpop.permute.xlu0 %3483
      %3485 = vrot.lane.b32.xlu0 %v3411, 32
      %v3486 = vpop.permute.xlu0 %3485
      %3487 = vrot.lane.b32.xlu0 %v3412, 32
      %v3488 = vpop.permute.xlu0 %3487
      %3489 = vrot.lane.b32.xlu0 %v3413, 32
      %v3490 = vpop.permute.xlu0 %3489
      %3491 = vrot.lane.b32.xlu0 %v3414, 32
      %v3492 = vpop.permute.xlu0 %3491
      %3493 = vrot.lane.b32.xlu0 %v3415, 32
      %v3494 = vpop.permute.xlu0 %3493
      %3495 = vrot.lane.b32.xlu0 %v3416, 32
      %v3496 = vpop.permute.xlu0 %3495
      %3497 = vrot.lane.b32.xlu0 %v3417, 32
      %v3498 = vpop.permute.xlu0 %3497
      %3499 = vrot.lane.b32.xlu0 %v3418, 32
      %v3500 = vpop.permute.xlu0 %3499
      %3501 = vrot.lane.b32.xlu0 %v3419, 32
      %v3502 = vpop.permute.xlu0 %3501
      %3503 = vrot.lane.b32.xlu0 %v3420, 32
      %v3504 = vpop.permute.xlu0 %3503
      %3505 = vrot.lane.b32.xlu0 %v3421, 32
      %v3506 = vpop.permute.xlu0 %3505
      %3507 = vrot.lane.b32.xlu0 %v3422, 32
      %v3508 = vpop.permute.xlu0 %3507
      %3509 = vrot.lane.b32.xlu0 %v3423, 32
      %v3510 = vpop.permute.xlu0 %3509
      %3511 = vrot.lane.b32.xlu0 %v3424, 32
      %v3512 = vpop.permute.xlu0 %3511
      %3513 = vrot.lane.b32.xlu0 %v3425, 32
      %v3514 = vpop.permute.xlu0 %3513
      %3515 = vrot.lane.b32.xlu0 %v3426, 32
      %v3516 = vpop.permute.xlu0 %3515
      %3517 = vrot.lane.b32.xlu0 %v3427, 32
      %v3518 = vpop.permute.xlu0 %3517
      %3519 = vrot.lane.b32.xlu0 %v3428, 32
      %v3520 = vpop.permute.xlu0 %3519
      %3521 = vrot.lane.b32.xlu0 %v3429, 32
      %v3522 = vpop.permute.xlu0 %3521
      %3523 = vrot.lane.b32.xlu0 %v3430, 32
      %v3524 = vpop.permute.xlu0 %3523
      %3525 = vrot.lane.b32.xlu0 %v3431, 32
      %v3526 = vpop.permute.xlu0 %3525
      %3527 = vrot.lane.b32.xlu0 %v3432, 32
      %v3528 = vpop.permute.xlu0 %3527
      %3561 = vst.msk [vmem:[#allocation5] sm:$0xff] %vm1203, %v3466
      %3562 = vst.msk [vmem:[#allocation5 + $0x8] sm:$0xff] %vm1203, %v3468
      %3563 = vst.msk [vmem:[#allocation5 + $0x10] sm:$0xff] %vm1203, %v3470
      %3564 = vst.msk [vmem:[#allocation5 + $0x18] sm:$0xff] %vm1203, %v3472
      %3565 = vst.msk [vmem:[#allocation5 + $0x20] sm:$0xff] %vm1203, %v3474
      %3566 = vst.msk [vmem:[#allocation5 + $0x28] sm:$0xff] %vm1203, %v3476
      %3567 = vst.msk [vmem:[#allocation5 + $0x30] sm:$0xff] %vm1203, %v3478
      %3568 = vst.msk [vmem:[#allocation5 + $0x38] sm:$0xff] %vm1203, %v3480
      %3569 = vst.msk [vmem:[#allocation5 + $0x40] sm:$0xff] %vm1203, %v3482
      %3570 = vst.msk [vmem:[#allocation5 + $0x48] sm:$0xff] %vm1203, %v3484
      %3571 = vst.msk [vmem:[#allocation5 + $0x50] sm:$0xff] %vm1203, %v3486
      %3572 = vst.msk [vmem:[#allocation5 + $0x58] sm:$0xff] %vm1203, %v3488
      %3573 = vst.msk [vmem:[#allocation5 + $0x60] sm:$0xff] %vm1203, %v3490
      %3574 = vst.msk [vmem:[#allocation5 + $0x68] sm:$0xff] %vm1203, %v3492
      %3575 = vst.msk [vmem:[#allocation5 + $0x70] sm:$0xff] %vm1203, %v3494
      %3576 = vst.msk [vmem:[#allocation5 + $0x78] sm:$0xff] %vm1203, %v3496
      %3577 = vst.msk [vmem:[#allocation5 + $0x80] sm:$0xff] %vm1203, %v3498
      %3578 = vst.msk [vmem:[#allocation5 + $0x88] sm:$0xff] %vm1203, %v3500
      %3579 = vst.msk [vmem:[#allocation5 + $0x90] sm:$0xff] %vm1203, %v3502
      %3580 = vst.msk [vmem:[#allocation5 + $0x98] sm:$0xff] %vm1203, %v3504
      %3581 = vst.msk [vmem:[#allocation5 + $0xa0] sm:$0xff] %vm1203, %v3506
      %3582 = vst.msk [vmem:[#allocation5 + $0xa8] sm:$0xff] %vm1203, %v3508
      %3583 = vst.msk [vmem:[#allocation5 + $0xb0] sm:$0xff] %vm1203, %v3510
      %3584 = vst.msk [vmem:[#allocation5 + $0xb8] sm:$0xff] %vm1203, %v3512
      %3585 = vst.msk [vmem:[#allocation5 + $0xc0] sm:$0xff] %vm1203, %v3514
      %3586 = vst.msk [vmem:[#allocation5 + $0xc8] sm:$0xff] %vm1203, %v3516
      %3587 = vst.msk [vmem:[#allocation5 + $0xd0] sm:$0xff] %vm1203, %v3518
      %3588 = vst.msk [vmem:[#allocation5 + $0xd8] sm:$0xff] %vm1203, %v3520
      %3589 = vst.msk [vmem:[#allocation5 + $0xe0] sm:$0xff] %vm1203, %v3522
      %3590 = vst.msk [vmem:[#allocation5 + $0xe8] sm:$0xff] %vm1203, %v3524
      %3591 = vst.msk [vmem:[#allocation5 + $0xf0] sm:$0xff] %vm1203, %v3526
      %3592 = vst.msk [vmem:[#allocation5 + $0xf8] sm:$0xff] %vm1203, %v3528
      %v3593 = vld [vmem:[%s2728 + $0x2] sm:$0xff]
      %v3594 = vld [vmem:[%s2728 + $0xa] sm:$0xff]
      %v3595 = vld [vmem:[%s2728 + $0x1a] sm:$0xff]
      %v3596 = vld [vmem:[%s2728 + $0x22] sm:$0xff]
      %v3597 = vld [vmem:[%s2728 + $0x32] sm:$0xff]
      %v3598 = vld [vmem:[%s2728 + $0x3a] sm:$0xff]
      %v3599 = vld [vmem:[%s2728 + $0x4a] sm:$0xff]
      %v3600 = vld [vmem:[%s2728 + $0x52] sm:$0xff]
      %v3601 = vld [vmem:[%s2728 + $0x62] sm:$0xff]
      %v3602 = vld [vmem:[%s2728 + $0x6a] sm:$0xff]
      %v3603 = vld [vmem:[%s2728 + $0x7a] sm:$0xff]
      %v3604 = vld [vmem:[%s2728 + $0x82] sm:$0xff]
      %v3605 = vld [vmem:[%s2728 + $0x92] sm:$0xff]
      %v3606 = vld [vmem:[%s2728 + $0x9a] sm:$0xff]
      %v3607 = vld [vmem:[%s2728 + $0xaa] sm:$0xff]
      %v3608 = vld [vmem:[%s2728 + $0xb2] sm:$0xff]
      %v3609 = vld [vmem:[%s2728 + $0xc2] sm:$0xff]
      %v3610 = vld [vmem:[%s2728 + $0xca] sm:$0xff]
      %v3611 = vld [vmem:[%s2728 + $0xda] sm:$0xff]
      %v3612 = vld [vmem:[%s2728 + $0xe2] sm:$0xff]
      %v3613 = vld [vmem:[%s2728 + $0xf2] sm:$0xff]
      %v3614 = vld [vmem:[%s2728 + $0xfa] sm:$0xff]
      %v3615 = vld [vmem:[%s2728 + $0x10a] sm:$0xff]
      %v3616 = vld [vmem:[%s2728 + $0x112] sm:$0xff]
      %v3617 = vld [vmem:[%s2728 + $0x122] sm:$0xff]
      %v3618 = vld [vmem:[%s2728 + $0x12a] sm:$0xff]
      %v3619 = vld [vmem:[%s2728 + $0x13a] sm:$0xff]
      %v3620 = vld [vmem:[%s2728 + $0x142] sm:$0xff]
      %v3621 = vld [vmem:[%s2728 + $0x152] sm:$0xff]
      %v3622 = vld [vmem:[%s2728 + $0x15a] sm:$0xff]
      %v3623 = vld [vmem:[%s2728 + $0x16a] sm:$0xff]
      %v3624 = vld [vmem:[%s2728 + $0x172] sm:$0xff]
      %3657 = vrot.lane.b32.xlu0 %v3593, 40
      %v3658 = vpop.permute.xlu0 %3657
      %3659 = vrot.lane.b32.xlu0 %v3594, 40
      %v3660 = vpop.permute.xlu0 %3659
      %3661 = vrot.lane.b32.xlu0 %v3595, 40
      %v3662 = vpop.permute.xlu0 %3661
      %3663 = vrot.lane.b32.xlu0 %v3596, 40
      %v3664 = vpop.permute.xlu0 %3663
      %3665 = vrot.lane.b32.xlu0 %v3597, 40
      %v3666 = vpop.permute.xlu0 %3665
      %3667 = vrot.lane.b32.xlu0 %v3598, 40
      %v3668 = vpop.permute.xlu0 %3667
      %3669 = vrot.lane.b32.xlu0 %v3599, 40
      %v3670 = vpop.permute.xlu0 %3669
      %3671 = vrot.lane.b32.xlu0 %v3600, 40
      %v3672 = vpop.permute.xlu0 %3671
      %3673 = vrot.lane.b32.xlu0 %v3601, 40
      %v3674 = vpop.permute.xlu0 %3673
      %3675 = vrot.lane.b32.xlu0 %v3602, 40
      %v3676 = vpop.permute.xlu0 %3675
      %3677 = vrot.lane.b32.xlu0 %v3603, 40
      %v3678 = vpop.permute.xlu0 %3677
      %3679 = vrot.lane.b32.xlu0 %v3604, 40
      %v3680 = vpop.permute.xlu0 %3679
      %3681 = vrot.lane.b32.xlu0 %v3605, 40
      %v3682 = vpop.permute.xlu0 %3681
      %3683 = vrot.lane.b32.xlu0 %v3606, 40
      %v3684 = vpop.permute.xlu0 %3683
      %3685 = vrot.lane.b32.xlu0 %v3607, 40
      %v3686 = vpop.permute.xlu0 %3685
      %3687 = vrot.lane.b32.xlu0 %v3608, 40
      %v3688 = vpop.permute.xlu0 %3687
      %3689 = vrot.lane.b32.xlu0 %v3609, 40
      %v3690 = vpop.permute.xlu0 %3689
      %3691 = vrot.lane.b32.xlu0 %v3610, 40
      %v3692 = vpop.permute.xlu0 %3691
      %3693 = vrot.lane.b32.xlu0 %v3611, 40
      %v3694 = vpop.permute.xlu0 %3693
      %3695 = vrot.lane.b32.xlu0 %v3612, 40
      %v3696 = vpop.permute.xlu0 %3695
      %3697 = vrot.lane.b32.xlu0 %v3613, 40
      %v3698 = vpop.permute.xlu0 %3697
      %3699 = vrot.lane.b32.xlu0 %v3614, 40
      %v3700 = vpop.permute.xlu0 %3699
      %3701 = vrot.lane.b32.xlu0 %v3615, 40
      %v3702 = vpop.permute.xlu0 %3701
      %3703 = vrot.lane.b32.xlu0 %v3616, 40
      %v3704 = vpop.permute.xlu0 %3703
      %3705 = vrot.lane.b32.xlu0 %v3617, 40
      %v3706 = vpop.permute.xlu0 %3705
      %3707 = vrot.lane.b32.xlu0 %v3618, 40
      %v3708 = vpop.permute.xlu0 %3707
      %3709 = vrot.lane.b32.xlu0 %v3619, 40
      %v3710 = vpop.permute.xlu0 %3709
      %3711 = vrot.lane.b32.xlu0 %v3620, 40
      %v3712 = vpop.permute.xlu0 %3711
      %3713 = vrot.lane.b32.xlu0 %v3621, 40
      %v3714 = vpop.permute.xlu0 %3713
      %3715 = vrot.lane.b32.xlu0 %v3622, 40
      %v3716 = vpop.permute.xlu0 %3715
      %3717 = vrot.lane.b32.xlu0 %v3623, 40
      %v3718 = vpop.permute.xlu0 %3717
      %3719 = vrot.lane.b32.xlu0 %v3624, 40
      %v3720 = vpop.permute.xlu0 %3719
      %3753 = vst.msk [vmem:[#allocation5] sm:$0xff] %vm1396, %v3658
      %3754 = vst.msk [vmem:[#allocation5 + $0x8] sm:$0xff] %vm1396, %v3660
      %3755 = vst.msk [vmem:[#allocation5 + $0x10] sm:$0xff] %vm1396, %v3662
      %3756 = vst.msk [vmem:[#allocation5 + $0x18] sm:$0xff] %vm1396, %v3664
      %3757 = vst.msk [vmem:[#allocation5 + $0x20] sm:$0xff] %vm1396, %v3666
      %3758 = vst.msk [vmem:[#allocation5 + $0x28] sm:$0xff] %vm1396, %v3668
      %3759 = vst.msk [vmem:[#allocation5 + $0x30] sm:$0xff] %vm1396, %v3670
      %3760 = vst.msk [vmem:[#allocation5 + $0x38] sm:$0xff] %vm1396, %v3672
      %3761 = vst.msk [vmem:[#allocation5 + $0x40] sm:$0xff] %vm1396, %v3674
      %3762 = vst.msk [vmem:[#allocation5 + $0x48] sm:$0xff] %vm1396, %v3676
      %3763 = vst.msk [vmem:[#allocation5 + $0x50] sm:$0xff] %vm1396, %v3678
      %3764 = vst.msk [vmem:[#allocation5 + $0x58] sm:$0xff] %vm1396, %v3680
      %3765 = vst.msk [vmem:[#allocation5 + $0x60] sm:$0xff] %vm1396, %v3682
      %3766 = vst.msk [vmem:[#allocation5 + $0x68] sm:$0xff] %vm1396, %v3684
      %3767 = vst.msk [vmem:[#allocation5 + $0x70] sm:$0xff] %vm1396, %v3686
      %3768 = vst.msk [vmem:[#allocation5 + $0x78] sm:$0xff] %vm1396, %v3688
      %3769 = vst.msk [vmem:[#allocation5 + $0x80] sm:$0xff] %vm1396, %v3690
      %3770 = vst.msk [vmem:[#allocation5 + $0x88] sm:$0xff] %vm1396, %v3692
      %3771 = vst.msk [vmem:[#allocation5 + $0x90] sm:$0xff] %vm1396, %v3694
      %3772 = vst.msk [vmem:[#allocation5 + $0x98] sm:$0xff] %vm1396, %v3696
      %3773 = vst.msk [vmem:[#allocation5 + $0xa0] sm:$0xff] %vm1396, %v3698
      %3774 = vst.msk [vmem:[#allocation5 + $0xa8] sm:$0xff] %vm1396, %v3700
      %3775 = vst.msk [vmem:[#allocation5 + $0xb0] sm:$0xff] %vm1396, %v3702
      %3776 = vst.msk [vmem:[#allocation5 + $0xb8] sm:$0xff] %vm1396, %v3704
      %3777 = vst.msk [vmem:[#allocation5 + $0xc0] sm:$0xff] %vm1396, %v3706
      %3778 = vst.msk [vmem:[#allocation5 + $0xc8] sm:$0xff] %vm1396, %v3708
      %3779 = vst.msk [vmem:[#allocation5 + $0xd0] sm:$0xff] %vm1396, %v3710
      %3780 = vst.msk [vmem:[#allocation5 + $0xd8] sm:$0xff] %vm1396, %v3712
      %3781 = vst.msk [vmem:[#allocation5 + $0xe0] sm:$0xff] %vm1396, %v3714
      %3782 = vst.msk [vmem:[#allocation5 + $0xe8] sm:$0xff] %vm1396, %v3716
      %3783 = vst.msk [vmem:[#allocation5 + $0xf0] sm:$0xff] %vm1396, %v3718
      %3784 = vst.msk [vmem:[#allocation5 + $0xf8] sm:$0xff] %vm1396, %v3720
      %s3785 = scalar_lea.vmem [#allocation4], 48
      %v3786 = vld [vmem:[%s3785] sm:$0xff]
      %v3787 = vld [vmem:[%s3785 + $0x8] sm:$0xff]
      %v3788 = vld [vmem:[%s3785 + $0x18] sm:$0xff]
      %v3789 = vld [vmem:[%s3785 + $0x20] sm:$0xff]
      %v3790 = vld [vmem:[%s3785 + $0x30] sm:$0xff]
      %v3791 = vld [vmem:[%s3785 + $0x38] sm:$0xff]
      %v3792 = vld [vmem:[%s3785 + $0x48] sm:$0xff]
      %v3793 = vld [vmem:[%s3785 + $0x50] sm:$0xff]
      %v3794 = vld [vmem:[%s3785 + $0x60] sm:$0xff]
      %v3795 = vld [vmem:[%s3785 + $0x68] sm:$0xff]
      %v3796 = vld [vmem:[%s3785 + $0x78] sm:$0xff]
      %v3797 = vld [vmem:[%s3785 + $0x80] sm:$0xff]
      %v3798 = vld [vmem:[%s3785 + $0x90] sm:$0xff]
      %v3799 = vld [vmem:[%s3785 + $0x98] sm:$0xff]
      %v3800 = vld [vmem:[%s3785 + $0xa8] sm:$0xff]
      %v3801 = vld [vmem:[%s3785 + $0xb0] sm:$0xff]
      %v3802 = vld [vmem:[%s3785 + $0xc0] sm:$0xff]
      %v3803 = vld [vmem:[%s3785 + $0xc8] sm:$0xff]
      %v3804 = vld [vmem:[%s3785 + $0xd8] sm:$0xff]
      %v3805 = vld [vmem:[%s3785 + $0xe0] sm:$0xff]
      %v3806 = vld [vmem:[%s3785 + $0xf0] sm:$0xff]
      %v3807 = vld [vmem:[%s3785 + $0xf8] sm:$0xff]
      %v3808 = vld [vmem:[%s3785 + $0x108] sm:$0xff]
      %v3809 = vld [vmem:[%s3785 + $0x110] sm:$0xff]
      %v3810 = vld [vmem:[%s3785 + $0x120] sm:$0xff]
      %v3811 = vld [vmem:[%s3785 + $0x128] sm:$0xff]
      %v3812 = vld [vmem:[%s3785 + $0x138] sm:$0xff]
      %v3813 = vld [vmem:[%s3785 + $0x140] sm:$0xff]
      %v3814 = vld [vmem:[%s3785 + $0x150] sm:$0xff]
      %v3815 = vld [vmem:[%s3785 + $0x158] sm:$0xff]
      %v3816 = vld [vmem:[%s3785 + $0x168] sm:$0xff]
      %v3817 = vld [vmem:[%s3785 + $0x170] sm:$0xff]
      %3850 = vrot.lane.b32.xlu0 %v3786, 48
      %v3851 = vpop.permute.xlu0 %3850
      %3852 = vrot.lane.b32.xlu0 %v3787, 48
      %v3853 = vpop.permute.xlu0 %3852
      %3854 = vrot.lane.b32.xlu0 %v3788, 48
      %v3855 = vpop.permute.xlu0 %3854
      %3856 = vrot.lane.b32.xlu0 %v3789, 48
      %v3857 = vpop.permute.xlu0 %3856
      %3858 = vrot.lane.b32.xlu0 %v3790, 48
      %v3859 = vpop.permute.xlu0 %3858
      %3860 = vrot.lane.b32.xlu0 %v3791, 48
      %v3861 = vpop.permute.xlu0 %3860
      %3862 = vrot.lane.b32.xlu0 %v3792, 48
      %v3863 = vpop.permute.xlu0 %3862
      %3864 = vrot.lane.b32.xlu0 %v3793, 48
      %v3865 = vpop.permute.xlu0 %3864
      %3866 = vrot.lane.b32.xlu0 %v3794, 48
      %v3867 = vpop.permute.xlu0 %3866
      %3868 = vrot.lane.b32.xlu0 %v3795, 48
      %v3869 = vpop.permute.xlu0 %3868
      %3870 = vrot.lane.b32.xlu0 %v3796, 48
      %v3871 = vpop.permute.xlu0 %3870
      %3872 = vrot.lane.b32.xlu0 %v3797, 48
      %v3873 = vpop.permute.xlu0 %3872
      %3874 = vrot.lane.b32.xlu0 %v3798, 48
      %v3875 = vpop.permute.xlu0 %3874
      %3876 = vrot.lane.b32.xlu0 %v3799, 48
      %v3877 = vpop.permute.xlu0 %3876
      %3878 = vrot.lane.b32.xlu0 %v3800, 48
      %v3879 = vpop.permute.xlu0 %3878
      %3880 = vrot.lane.b32.xlu0 %v3801, 48
      %v3881 = vpop.permute.xlu0 %3880
      %3882 = vrot.lane.b32.xlu0 %v3802, 48
      %v3883 = vpop.permute.xlu0 %3882
      %3884 = vrot.lane.b32.xlu0 %v3803, 48
      %v3885 = vpop.permute.xlu0 %3884
      %3886 = vrot.lane.b32.xlu0 %v3804, 48
      %v3887 = vpop.permute.xlu0 %3886
      %3888 = vrot.lane.b32.xlu0 %v3805, 48
      %v3889 = vpop.permute.xlu0 %3888
      %3890 = vrot.lane.b32.xlu0 %v3806, 48
      %v3891 = vpop.permute.xlu0 %3890
      %3892 = vrot.lane.b32.xlu0 %v3807, 48
      %v3893 = vpop.permute.xlu0 %3892
      %3894 = vrot.lane.b32.xlu0 %v3808, 48
      %v3895 = vpop.permute.xlu0 %3894
      %3896 = vrot.lane.b32.xlu0 %v3809, 48
      %v3897 = vpop.permute.xlu0 %3896
      %3898 = vrot.lane.b32.xlu0 %v3810, 48
      %v3899 = vpop.permute.xlu0 %3898
      %3900 = vrot.lane.b32.xlu0 %v3811, 48
      %v3901 = vpop.permute.xlu0 %3900
      %3902 = vrot.lane.b32.xlu0 %v3812, 48
      %v3903 = vpop.permute.xlu0 %3902
      %3904 = vrot.lane.b32.xlu0 %v3813, 48
      %v3905 = vpop.permute.xlu0 %3904
      %3906 = vrot.lane.b32.xlu0 %v3814, 48
      %v3907 = vpop.permute.xlu0 %3906
      %3908 = vrot.lane.b32.xlu0 %v3815, 48
      %v3909 = vpop.permute.xlu0 %3908
      %3910 = vrot.lane.b32.xlu0 %v3816, 48
      %v3911 = vpop.permute.xlu0 %3910
      %3912 = vrot.lane.b32.xlu0 %v3817, 48
      %v3913 = vpop.permute.xlu0 %3912
      %3946 = vst.msk [vmem:[#allocation5] sm:$0xff] %vm1590, %v3851
      %3947 = vst.msk [vmem:[#allocation5 + $0x8] sm:$0xff] %vm1590, %v3853
      %3948 = vst.msk [vmem:[#allocation5 + $0x10] sm:$0xff] %vm1590, %v3855
      %3949 = vst.msk [vmem:[#allocation5 + $0x18] sm:$0xff] %vm1590, %v3857
      %3950 = vst.msk [vmem:[#allocation5 + $0x20] sm:$0xff] %vm1590, %v3859
      %3951 = vst.msk [vmem:[#allocation5 + $0x28] sm:$0xff] %vm1590, %v3861
      %3952 = vst.msk [vmem:[#allocation5 + $0x30] sm:$0xff] %vm1590, %v3863
      %3953 = vst.msk [vmem:[#allocation5 + $0x38] sm:$0xff] %vm1590, %v3865
      %3954 = vst.msk [vmem:[#allocation5 + $0x40] sm:$0xff] %vm1590, %v3867
      %3955 = vst.msk [vmem:[#allocation5 + $0x48] sm:$0xff] %vm1590, %v3869
      %3956 = vst.msk [vmem:[#allocation5 + $0x50] sm:$0xff] %vm1590, %v3871
      %3957 = vst.msk [vmem:[#allocation5 + $0x58] sm:$0xff] %vm1590, %v3873
      %3958 = vst.msk [vmem:[#allocation5 + $0x60] sm:$0xff] %vm1590, %v3875
      %3959 = vst.msk [vmem:[#allocation5 + $0x68] sm:$0xff] %vm1590, %v3877
      %3960 = vst.msk [vmem:[#allocation5 + $0x70] sm:$0xff] %vm1590, %v3879
      %3961 = vst.msk [vmem:[#allocation5 + $0x78] sm:$0xff] %vm1590, %v3881
      %3962 = vst.msk [vmem:[#allocation5 + $0x80] sm:$0xff] %vm1590, %v3883
      %3963 = vst.msk [vmem:[#allocation5 + $0x88] sm:$0xff] %vm1590, %v3885
      %3964 = vst.msk [vmem:[#allocation5 + $0x90] sm:$0xff] %vm1590, %v3887
      %3965 = vst.msk [vmem:[#allocation5 + $0x98] sm:$0xff] %vm1590, %v3889
      %3966 = vst.msk [vmem:[#allocation5 + $0xa0] sm:$0xff] %vm1590, %v3891
      %3967 = vst.msk [vmem:[#allocation5 + $0xa8] sm:$0xff] %vm1590, %v3893
      %3968 = vst.msk [vmem:[#allocation5 + $0xb0] sm:$0xff] %vm1590, %v3895
      %3969 = vst.msk [vmem:[#allocation5 + $0xb8] sm:$0xff] %vm1590, %v3897
      %3970 = vst.msk [vmem:[#allocation5 + $0xc0] sm:$0xff] %vm1590, %v3899
      %3971 = vst.msk [vmem:[#allocation5 + $0xc8] sm:$0xff] %vm1590, %v3901
      %3972 = vst.msk [vmem:[#allocation5 + $0xd0] sm:$0xff] %vm1590, %v3903
      %3973 = vst.msk [vmem:[#allocation5 + $0xd8] sm:$0xff] %vm1590, %v3905
      %3974 = vst.msk [vmem:[#allocation5 + $0xe0] sm:$0xff] %vm1590, %v3907
      %3975 = vst.msk [vmem:[#allocation5 + $0xe8] sm:$0xff] %vm1590, %v3909
      %3976 = vst.msk [vmem:[#allocation5 + $0xf0] sm:$0xff] %vm1590, %v3911
      %3977 = vst.msk [vmem:[#allocation5 + $0xf8] sm:$0xff] %vm1590, %v3913
      %v3978 = vld [vmem:[%s3785 + $0x1] sm:$0xff]
      %v3979 = vld [vmem:[%s3785 + $0x9] sm:$0xff]
      %v3980 = vld [vmem:[%s3785 + $0x19] sm:$0xff]
      %v3981 = vld [vmem:[%s3785 + $0x21] sm:$0xff]
      %v3982 = vld [vmem:[%s3785 + $0x31] sm:$0xff]
      %v3983 = vld [vmem:[%s3785 + $0x39] sm:$0xff]
      %v3984 = vld [vmem:[%s3785 + $0x49] sm:$0xff]
      %v3985 = vld [vmem:[%s3785 + $0x51] sm:$0xff]
      %v3986 = vld [vmem:[%s3785 + $0x61] sm:$0xff]
      %v3987 = vld [vmem:[%s3785 + $0x69] sm:$0xff]
      %v3988 = vld [vmem:[%s3785 + $0x79] sm:$0xff]
      %v3989 = vld [vmem:[%s3785 + $0x81] sm:$0xff]
      %v3990 = vld [vmem:[%s3785 + $0x91] sm:$0xff]
      %v3991 = vld [vmem:[%s3785 + $0x99] sm:$0xff]
      %v3992 = vld [vmem:[%s3785 + $0xa9] sm:$0xff]
      %v3993 = vld [vmem:[%s3785 + $0xb1] sm:$0xff]
      %v3994 = vld [vmem:[%s3785 + $0xc1] sm:$0xff]
      %v3995 = vld [vmem:[%s3785 + $0xc9] sm:$0xff]
      %v3996 = vld [vmem:[%s3785 + $0xd9] sm:$0xff]
      %v3997 = vld [vmem:[%s3785 + $0xe1] sm:$0xff]
      %v3998 = vld [vmem:[%s3785 + $0xf1] sm:$0xff]
      %v3999 = vld [vmem:[%s3785 + $0xf9] sm:$0xff]
      %v4000 = vld [vmem:[%s3785 + $0x109] sm:$0xff]
      %v4001 = vld [vmem:[%s3785 + $0x111] sm:$0xff]
      %v4002 = vld [vmem:[%s3785 + $0x121] sm:$0xff]
      %v4003 = vld [vmem:[%s3785 + $0x129] sm:$0xff]
      %v4004 = vld [vmem:[%s3785 + $0x139] sm:$0xff]
      %v4005 = vld [vmem:[%s3785 + $0x141] sm:$0xff]
      %v4006 = vld [vmem:[%s3785 + $0x151] sm:$0xff]
      %v4007 = vld [vmem:[%s3785 + $0x159] sm:$0xff]
      %v4008 = vld [vmem:[%s3785 + $0x169] sm:$0xff]
      %v4009 = vld [vmem:[%s3785 + $0x171] sm:$0xff]
      %4042 = vrot.lane.b32.xlu0 %v3978, 56
      %v4043 = vpop.permute.xlu0 %4042
      %4044 = vrot.lane.b32.xlu0 %v3979, 56
      %v4045 = vpop.permute.xlu0 %4044
      %4046 = vrot.lane.b32.xlu0 %v3980, 56
      %v4047 = vpop.permute.xlu0 %4046
      %4048 = vrot.lane.b32.xlu0 %v3981, 56
      %v4049 = vpop.permute.xlu0 %4048
      %4050 = vrot.lane.b32.xlu0 %v3982, 56
      %v4051 = vpop.permute.xlu0 %4050
      %4052 = vrot.lane.b32.xlu0 %v3983, 56
      %v4053 = vpop.permute.xlu0 %4052
      %4054 = vrot.lane.b32.xlu0 %v3984, 56
      %v4055 = vpop.permute.xlu0 %4054
      %4056 = vrot.lane.b32.xlu0 %v3985, 56
      %v4057 = vpop.permute.xlu0 %4056
      %4058 = vrot.lane.b32.xlu0 %v3986, 56
      %v4059 = vpop.permute.xlu0 %4058
      %4060 = vrot.lane.b32.xlu0 %v3987, 56
      %v4061 = vpop.permute.xlu0 %4060
      %4062 = vrot.lane.b32.xlu0 %v3988, 56
      %v4063 = vpop.permute.xlu0 %4062
      %4064 = vrot.lane.b32.xlu0 %v3989, 56
      %v4065 = vpop.permute.xlu0 %4064
      %4066 = vrot.lane.b32.xlu0 %v3990, 56
      %v4067 = vpop.permute.xlu0 %4066
      %4068 = vrot.lane.b32.xlu0 %v3991, 56
      %v4069 = vpop.permute.xlu0 %4068
      %4070 = vrot.lane.b32.xlu0 %v3992, 56
      %v4071 = vpop.permute.xlu0 %4070
      %4072 = vrot.lane.b32.xlu0 %v3993, 56
      %v4073 = vpop.permute.xlu0 %4072
      %4074 = vrot.lane.b32.xlu0 %v3994, 56
      %v4075 = vpop.permute.xlu0 %4074
      %4076 = vrot.lane.b32.xlu0 %v3995, 56
      %v4077 = vpop.permute.xlu0 %4076
      %4078 = vrot.lane.b32.xlu0 %v3996, 56
      %v4079 = vpop.permute.xlu0 %4078
      %4080 = vrot.lane.b32.xlu0 %v3997, 56
      %v4081 = vpop.permute.xlu0 %4080
      %4082 = vrot.lane.b32.xlu0 %v3998, 56
      %v4083 = vpop.permute.xlu0 %4082
      %4084 = vrot.lane.b32.xlu0 %v3999, 56
      %v4085 = vpop.permute.xlu0 %4084
      %4086 = vrot.lane.b32.xlu0 %v4000, 56
      %v4087 = vpop.permute.xlu0 %4086
      %4088 = vrot.lane.b32.xlu0 %v4001, 56
      %v4089 = vpop.permute.xlu0 %4088
      %4090 = vrot.lane.b32.xlu0 %v4002, 56
      %v4091 = vpop.permute.xlu0 %4090
      %4092 = vrot.lane.b32.xlu0 %v4003, 56
      %v4093 = vpop.permute.xlu0 %4092
      %4094 = vrot.lane.b32.xlu0 %v4004, 56
      %v4095 = vpop.permute.xlu0 %4094
      %4096 = vrot.lane.b32.xlu0 %v4005, 56
      %v4097 = vpop.permute.xlu0 %4096
      %4098 = vrot.lane.b32.xlu0 %v4006, 56
      %v4099 = vpop.permute.xlu0 %4098
      %4100 = vrot.lane.b32.xlu0 %v4007, 56
      %v4101 = vpop.permute.xlu0 %4100
      %4102 = vrot.lane.b32.xlu0 %v4008, 56
      %v4103 = vpop.permute.xlu0 %4102
      %4104 = vrot.lane.b32.xlu0 %v4009, 56
      %v4105 = vpop.permute.xlu0 %4104
      %4138 = vst.msk [vmem:[#allocation5] sm:$0xff] %vm1783, %v4043
      %4139 = vst.msk [vmem:[#allocation5 + $0x8] sm:$0xff] %vm1783, %v4045
      %4140 = vst.msk [vmem:[#allocation5 + $0x10] sm:$0xff] %vm1783, %v4047
      %4141 = vst.msk [vmem:[#allocation5 + $0x18] sm:$0xff] %vm1783, %v4049
      %4142 = vst.msk [vmem:[#allocation5 + $0x20] sm:$0xff] %vm1783, %v4051
      %4143 = vst.msk [vmem:[#allocation5 + $0x28] sm:$0xff] %vm1783, %v4053
      %4144 = vst.msk [vmem:[#allocation5 + $0x30] sm:$0xff] %vm1783, %v4055
      %4145 = vst.msk [vmem:[#allocation5 + $0x38] sm:$0xff] %vm1783, %v4057
      %4146 = vst.msk [vmem:[#allocation5 + $0x40] sm:$0xff] %vm1783, %v4059
      %4147 = vst.msk [vmem:[#allocation5 + $0x48] sm:$0xff] %vm1783, %v4061
      %4148 = vst.msk [vmem:[#allocation5 + $0x50] sm:$0xff] %vm1783, %v4063
      %4149 = vst.msk [vmem:[#allocation5 + $0x58] sm:$0xff] %vm1783, %v4065
      %4150 = vst.msk [vmem:[#allocation5 + $0x60] sm:$0xff] %vm1783, %v4067
      %4151 = vst.msk [vmem:[#allocation5 + $0x68] sm:$0xff] %vm1783, %v4069
      %4152 = vst.msk [vmem:[#allocation5 + $0x70] sm:$0xff] %vm1783, %v4071
      %4153 = vst.msk [vmem:[#allocation5 + $0x78] sm:$0xff] %vm1783, %v4073
      %4154 = vst.msk [vmem:[#allocation5 + $0x80] sm:$0xff] %vm1783, %v4075
      %4155 = vst.msk [vmem:[#allocation5 + $0x88] sm:$0xff] %vm1783, %v4077
      %4156 = vst.msk [vmem:[#allocation5 + $0x90] sm:$0xff] %vm1783, %v4079
      %4157 = vst.msk [vmem:[#allocation5 + $0x98] sm:$0xff] %vm1783, %v4081
      %4158 = vst.msk [vmem:[#allocation5 + $0xa0] sm:$0xff] %vm1783, %v4083
      %4159 = vst.msk [vmem:[#allocation5 + $0xa8] sm:$0xff] %vm1783, %v4085
      %4160 = vst.msk [vmem:[#allocation5 + $0xb0] sm:$0xff] %vm1783, %v4087
      %4161 = vst.msk [vmem:[#allocation5 + $0xb8] sm:$0xff] %vm1783, %v4089
      %4162 = vst.msk [vmem:[#allocation5 + $0xc0] sm:$0xff] %vm1783, %v4091
      %4163 = vst.msk [vmem:[#allocation5 + $0xc8] sm:$0xff] %vm1783, %v4093
      %4164 = vst.msk [vmem:[#allocation5 + $0xd0] sm:$0xff] %vm1783, %v4095
      %4165 = vst.msk [vmem:[#allocation5 + $0xd8] sm:$0xff] %vm1783, %v4097
      %4166 = vst.msk [vmem:[#allocation5 + $0xe0] sm:$0xff] %vm1783, %v4099
      %4167 = vst.msk [vmem:[#allocation5 + $0xe8] sm:$0xff] %vm1783, %v4101
      %4168 = vst.msk [vmem:[#allocation5 + $0xf0] sm:$0xff] %vm1783, %v4103
      %4169 = vst.msk [vmem:[#allocation5 + $0xf8] sm:$0xff] %vm1783, %v4105
      %v4170 = vld [vmem:[%s3785 + $0x2] sm:$0xff]
      %v4171 = vld [vmem:[%s3785 + $0xa] sm:$0xff]
      %v4172 = vld [vmem:[%s3785 + $0x1a] sm:$0xff]
      %v4173 = vld [vmem:[%s3785 + $0x22] sm:$0xff]
      %v4174 = vld [vmem:[%s3785 + $0x32] sm:$0xff]
      %v4175 = vld [vmem:[%s3785 + $0x3a] sm:$0xff]
      %v4176 = vld [vmem:[%s3785 + $0x4a] sm:$0xff]
      %v4177 = vld [vmem:[%s3785 + $0x52] sm:$0xff]
      %v4178 = vld [vmem:[%s3785 + $0x62] sm:$0xff]
      %v4179 = vld [vmem:[%s3785 + $0x6a] sm:$0xff]
      %v4180 = vld [vmem:[%s3785 + $0x7a] sm:$0xff]
      %v4181 = vld [vmem:[%s3785 + $0x82] sm:$0xff]
      %v4182 = vld [vmem:[%s3785 + $0x92] sm:$0xff]
      %v4183 = vld [vmem:[%s3785 + $0x9a] sm:$0xff]
      %v4184 = vld [vmem:[%s3785 + $0xaa] sm:$0xff]
      %v4185 = vld [vmem:[%s3785 + $0xb2] sm:$0xff]
      %v4186 = vld [vmem:[%s3785 + $0xc2] sm:$0xff]
      %v4187 = vld [vmem:[%s3785 + $0xca] sm:$0xff]
      %v4188 = vld [vmem:[%s3785 + $0xda] sm:$0xff]
      %v4189 = vld [vmem:[%s3785 + $0xe2] sm:$0xff]
      %v4190 = vld [vmem:[%s3785 + $0xf2] sm:$0xff]
      %v4191 = vld [vmem:[%s3785 + $0xfa] sm:$0xff]
      %v4192 = vld [vmem:[%s3785 + $0x10a] sm:$0xff]
      %v4193 = vld [vmem:[%s3785 + $0x112] sm:$0xff]
      %v4194 = vld [vmem:[%s3785 + $0x122] sm:$0xff]
      %v4195 = vld [vmem:[%s3785 + $0x12a] sm:$0xff]
      %v4196 = vld [vmem:[%s3785 + $0x13a] sm:$0xff]
      %v4197 = vld [vmem:[%s3785 + $0x142] sm:$0xff]
      %v4198 = vld [vmem:[%s3785 + $0x152] sm:$0xff]
      %v4199 = vld [vmem:[%s3785 + $0x15a] sm:$0xff]
      %v4200 = vld [vmem:[%s3785 + $0x16a] sm:$0xff]
      %v4201 = vld [vmem:[%s3785 + $0x172] sm:$0xff]
      %4234 = vrot.lane.b32.xlu0 %v4170, 64
      %v4235 = vpop.permute.xlu0 %4234
      %4236 = vrot.lane.b32.xlu0 %v4171, 64
      %v4237 = vpop.permute.xlu0 %4236
      %4238 = vrot.lane.b32.xlu0 %v4172, 64
      %v4239 = vpop.permute.xlu0 %4238
      %4240 = vrot.lane.b32.xlu0 %v4173, 64
      %v4241 = vpop.permute.xlu0 %4240
      %4242 = vrot.lane.b32.xlu0 %v4174, 64
      %v4243 = vpop.permute.xlu0 %4242
      %4244 = vrot.lane.b32.xlu0 %v4175, 64
      %v4245 = vpop.permute.xlu0 %4244
      %4246 = vrot.lane.b32.xlu0 %v4176, 64
      %v4247 = vpop.permute.xlu0 %4246
      %4248 = vrot.lane.b32.xlu0 %v4177, 64
      %v4249 = vpop.permute.xlu0 %4248
      %4250 = vrot.lane.b32.xlu0 %v4178, 64
      %v4251 = vpop.permute.xlu0 %4250
      %4252 = vrot.lane.b32.xlu0 %v4179, 64
      %v4253 = vpop.permute.xlu0 %4252
      %4254 = vrot.lane.b32.xlu0 %v4180, 64
      %v4255 = vpop.permute.xlu0 %4254
      %4256 = vrot.lane.b32.xlu0 %v4181, 64
      %v4257 = vpop.permute.xlu0 %4256
      %4258 = vrot.lane.b32.xlu0 %v4182, 64
      %v4259 = vpop.permute.xlu0 %4258
      %4260 = vrot.lane.b32.xlu0 %v4183, 64
      %v4261 = vpop.permute.xlu0 %4260
      %4262 = vrot.lane.b32.xlu0 %v4184, 64
      %v4263 = vpop.permute.xlu0 %4262
      %4264 = vrot.lane.b32.xlu0 %v4185, 64
      %v4265 = vpop.permute.xlu0 %4264
      %4266 = vrot.lane.b32.xlu0 %v4186, 64
      %v4267 = vpop.permute.xlu0 %4266
      %4268 = vrot.lane.b32.xlu0 %v4187, 64
      %v4269 = vpop.permute.xlu0 %4268
      %4270 = vrot.lane.b32.xlu0 %v4188, 64
      %v4271 = vpop.permute.xlu0 %4270
      %4272 = vrot.lane.b32.xlu0 %v4189, 64
      %v4273 = vpop.permute.xlu0 %4272
      %4274 = vrot.lane.b32.xlu0 %v4190, 64
      %v4275 = vpop.permute.xlu0 %4274
      %4276 = vrot.lane.b32.xlu0 %v4191, 64
      %v4277 = vpop.permute.xlu0 %4276
      %4278 = vrot.lane.b32.xlu0 %v4192, 64
      %v4279 = vpop.permute.xlu0 %4278
      %4280 = vrot.lane.b32.xlu0 %v4193, 64
      %v4281 = vpop.permute.xlu0 %4280
      %4282 = vrot.lane.b32.xlu0 %v4194, 64
      %v4283 = vpop.permute.xlu0 %4282
      %4284 = vrot.lane.b32.xlu0 %v4195, 64
      %v4285 = vpop.permute.xlu0 %4284
      %4286 = vrot.lane.b32.xlu0 %v4196, 64
      %v4287 = vpop.permute.xlu0 %4286
      %4288 = vrot.lane.b32.xlu0 %v4197, 64
      %v4289 = vpop.permute.xlu0 %4288
      %4290 = vrot.lane.b32.xlu0 %v4198, 64
      %v4291 = vpop.permute.xlu0 %4290
      %4292 = vrot.lane.b32.xlu0 %v4199, 64
      %v4293 = vpop.permute.xlu0 %4292
      %4294 = vrot.lane.b32.xlu0 %v4200, 64
      %v4295 = vpop.permute.xlu0 %4294
      %4296 = vrot.lane.b32.xlu0 %v4201, 64
      %v4297 = vpop.permute.xlu0 %4296
      %4330 = vst.msk [vmem:[#allocation5] sm:$0xff] %vm1976, %v4235
      %4331 = vst.msk [vmem:[#allocation5 + $0x8] sm:$0xff] %vm1976, %v4237
      %4332 = vst.msk [vmem:[#allocation5 + $0x10] sm:$0xff] %vm1976, %v4239
      %4333 = vst.msk [vmem:[#allocation5 + $0x18] sm:$0xff] %vm1976, %v4241
      %4334 = vst.msk [vmem:[#allocation5 + $0x20] sm:$0xff] %vm1976, %v4243
      %4335 = vst.msk [vmem:[#allocation5 + $0x28] sm:$0xff] %vm1976, %v4245
      %4336 = vst.msk [vmem:[#allocation5 + $0x30] sm:$0xff] %vm1976, %v4247
      %4337 = vst.msk [vmem:[#allocation5 + $0x38] sm:$0xff] %vm1976, %v4249
      %4338 = vst.msk [vmem:[#allocation5 + $0x40] sm:$0xff] %vm1976, %v4251
      %4339 = vst.msk [vmem:[#allocation5 + $0x48] sm:$0xff] %vm1976, %v4253
      %4340 = vst.msk [vmem:[#allocation5 + $0x50] sm:$0xff] %vm1976, %v4255
      %4341 = vst.msk [vmem:[#allocation5 + $0x58] sm:$0xff] %vm1976, %v4257
      %4342 = vst.msk [vmem:[#allocation5 + $0x60] sm:$0xff] %vm1976, %v4259
      %4343 = vst.msk [vmem:[#allocation5 + $0x68] sm:$0xff] %vm1976, %v4261
      %4344 = vst.msk [vmem:[#allocation5 + $0x70] sm:$0xff] %vm1976, %v4263
      %4345 = vst.msk [vmem:[#allocation5 + $0x78] sm:$0xff] %vm1976, %v4265
      %4346 = vst.msk [vmem:[#allocation5 + $0x80] sm:$0xff] %vm1976, %v4267
      %4347 = vst.msk [vmem:[#allocation5 + $0x88] sm:$0xff] %vm1976, %v4269
      %4348 = vst.msk [vmem:[#allocation5 + $0x90] sm:$0xff] %vm1976, %v4271
      %4349 = vst.msk [vmem:[#allocation5 + $0x98] sm:$0xff] %vm1976, %v4273
      %4350 = vst.msk [vmem:[#allocation5 + $0xa0] sm:$0xff] %vm1976, %v4275
      %4351 = vst.msk [vmem:[#allocation5 + $0xa8] sm:$0xff] %vm1976, %v4277
      %4352 = vst.msk [vmem:[#allocation5 + $0xb0] sm:$0xff] %vm1976, %v4279
      %4353 = vst.msk [vmem:[#allocation5 + $0xb8] sm:$0xff] %vm1976, %v4281
      %4354 = vst.msk [vmem:[#allocation5 + $0xc0] sm:$0xff] %vm1976, %v4283
      %4355 = vst.msk [vmem:[#allocation5 + $0xc8] sm:$0xff] %vm1976, %v4285
      %4356 = vst.msk [vmem:[#allocation5 + $0xd0] sm:$0xff] %vm1976, %v4287
      %4357 = vst.msk [vmem:[#allocation5 + $0xd8] sm:$0xff] %vm1976, %v4289
      %4358 = vst.msk [vmem:[#allocation5 + $0xe0] sm:$0xff] %vm1976, %v4291
      %4359 = vst.msk [vmem:[#allocation5 + $0xe8] sm:$0xff] %vm1976, %v4293
      %4360 = vst.msk [vmem:[#allocation5 + $0xf0] sm:$0xff] %vm1976, %v4295
      %4361 = vst.msk [vmem:[#allocation5 + $0xf8] sm:$0xff] %vm1976, %v4297
      %v4362 = vld [vmem:[#allocation5] sm:$0xff]
      %v4363 = vld [vmem:[#allocation5 + $0x8] sm:$0xff]
      %v4364 = vld [vmem:[#allocation5 + $0x10] sm:$0xff]
      %v4365 = vld [vmem:[#allocation5 + $0x18] sm:$0xff]
      %v4366 = vld [vmem:[#allocation5 + $0x20] sm:$0xff]
      %v4367 = vld [vmem:[#allocation5 + $0x28] sm:$0xff]
      %v4368 = vld [vmem:[#allocation5 + $0x30] sm:$0xff]
      %v4369 = vld [vmem:[#allocation5 + $0x38] sm:$0xff]
      %v4370 = vld [vmem:[#allocation5 + $0x40] sm:$0xff]
      %v4371 = vld [vmem:[#allocation5 + $0x48] sm:$0xff]
      %v4372 = vld [vmem:[#allocation5 + $0x50] sm:$0xff]
      %v4373 = vld [vmem:[#allocation5 + $0x58] sm:$0xff]
      %v4374 = vld [vmem:[#allocation5 + $0x60] sm:$0xff]
      %v4375 = vld [vmem:[#allocation5 + $0x68] sm:$0xff]
      %v4376 = vld [vmem:[#allocation5 + $0x70] sm:$0xff]
      %v4377 = vld [vmem:[#allocation5 + $0x78] sm:$0xff]
      %v4378 = vld [vmem:[#allocation5 + $0x80] sm:$0xff]
      %v4379 = vld [vmem:[#allocation5 + $0x88] sm:$0xff]
      %v4380 = vld [vmem:[#allocation5 + $0x90] sm:$0xff]
      %v4381 = vld [vmem:[#allocation5 + $0x98] sm:$0xff]
      %v4382 = vld [vmem:[#allocation5 + $0xa0] sm:$0xff]
      %v4383 = vld [vmem:[#allocation5 + $0xa8] sm:$0xff]
      %v4384 = vld [vmem:[#allocation5 + $0xb0] sm:$0xff]
      %v4385 = vld [vmem:[#allocation5 + $0xb8] sm:$0xff]
      %v4386 = vld [vmem:[#allocation5 + $0xc0] sm:$0xff]
      %v4387 = vld [vmem:[#allocation5 + $0xc8] sm:$0xff]
      %v4388 = vld [vmem:[#allocation5 + $0xd0] sm:$0xff]
      %v4389 = vld [vmem:[#allocation5 + $0xd8] sm:$0xff]
      %v4390 = vld [vmem:[#allocation5 + $0xe0] sm:$0xff]
      %v4391 = vld [vmem:[#allocation5 + $0xe8] sm:$0xff]
      %v4392 = vld [vmem:[#allocation5 + $0xf0] sm:$0xff]
      %v4393 = vld [vmem:[#allocation5 + $0xf8] sm:$0xff]
      %v4394 = vld [vmem:[%s4] sm:$0xff]
      %v4395 = vld [vmem:[%s4 + $0x8] sm:$0xff]
      %v4396 = vld [vmem:[%s4 + $0x10] sm:$0xff]
      %v4397 = vld [vmem:[%s4 + $0x18] sm:$0xff]
      %v4398 = vld [vmem:[%s4 + $0x20] sm:$0xff]
      %v4399 = vld [vmem:[%s4 + $0x28] sm:$0xff]
      %v4400 = vld [vmem:[%s4 + $0x30] sm:$0xff]
      %v4401 = vld [vmem:[%s4 + $0x38] sm:$0xff]
      %v4402 = vld [vmem:[%s4 + $0x40] sm:$0xff]
      %v4404 = vsel %vm2050, %v4362, 0
      %v4407 = vsel %vm2050, %v4363, 0
      %v4410 = vsel %vm2050, %v4364, 0
      %v4413 = vsel %vm2050, %v4365, 0
      %v4416 = vsel %vm2050, %v4366, 0
      %v4419 = vsel %vm2050, %v4367, 0
      %v4422 = vsel %vm2050, %v4368, 0
      %v4425 = vsel %vm2050, %v4369, 0
      %v4428 = vsel %vm2050, %v4370, 0
      %v4431 = vsel %vm2050, %v4371, 0
      %v4434 = vsel %vm2050, %v4372, 0
      %v4437 = vsel %vm2050, %v4373, 0
      %v4440 = vsel %vm2050, %v4374, 0
      %v4443 = vsel %vm2050, %v4375, 0
      %v4446 = vsel %vm2050, %v4376, 0
      %v4449 = vsel %vm2050, %v4377, 0
      %v4452 = vsel %vm2050, %v4378, 0
      %v4455 = vsel %vm2050, %v4379, 0
      %v4458 = vsel %vm2050, %v4380, 0
      %v4461 = vsel %vm2050, %v4381, 0
      %v4464 = vsel %vm2050, %v4382, 0
      %v4467 = vsel %vm2050, %v4383, 0
      %v4470 = vsel %vm2050, %v4384, 0
      %v4473 = vsel %vm2050, %v4385, 0
      %v4476 = vsel %vm2050, %v4386, 0
      %v4479 = vsel %vm2050, %v4387, 0
      %v4482 = vsel %vm2050, %v4388, 0
      %v4485 = vsel %vm2050, %v4389, 0
      %v4488 = vsel %vm2050, %v4390, 0
      %v4491 = vsel %vm2050, %v4391, 0
      %v4494 = vsel %vm2050, %v4392, 0
      %v4497 = vsel %vm2050, %v4393, 0
      %4499 = vmatprep.subr.mxu0 0.0
      %4500 = vmatpush1.msra.mxu0 %v4394
      %4501 = vmatprep.subr.mxu0 0.0
      %4502 = vmatpush1.msra.mxu0 %v4395
      %4503 = vmatprep.subr.mxu0 0.0
      %4504 = vmatpush1.msra.mxu0 %v4396
      %4505 = vmatprep.subr.mxu0 0.0
      %4506 = vmatpush1.msra.mxu0 %v4397
      %4507 = vmatprep.subr.mxu0 0.0
      %4508 = vmatpush1.msra.mxu0 %v4398
      %4509 = vmatprep.subr.mxu0 0.0
      %4510 = vmatpush1.msra.mxu0 %v4399
      %4511 = vmatprep.subr.mxu0 0.0
      %4512 = vmatpush1.msra.mxu0 %v4400
      %4513 = vmatprep.subr.mxu0 0.0
      %4514 = vmatpush1.msra.mxu0 %v4401
      %4515 = vmatprep.subr.mxu0 0.0
      %4516 = vmatpush1.msra.mxu0 %v4402
      %4517 = vmatprep.subr.mxu0 0.0
      %4518 = vmatpush1.msra.mxu0 0.0
      %4519 = vmatprep.subr.mxu0 0.0
      %4520 = vmatpush1.msra.mxu0 0.0
      %4521 = vmatprep.subr.mxu0 0.0
      %4522 = vmatpush1.msra.mxu0 0.0
      %4523 = vmatprep.subr.mxu0 0.0
      %4524 = vmatpush1.msra.mxu0 0.0
      %4525 = vmatprep.subr.mxu0 0.0
      %4526 = vmatpush1.msra.mxu0 0.0
      %4527 = vmatprep.subr.mxu0 0.0
      %4528 = vmatpush1.msra.mxu0 0.0
      %4529 = vmatprep.subr.mxu0 0.0
      %4530 = vmatpush1.msra.mxu0 0.0
      %4531 = vmatprep.subr.mxu0 0.0
      %4532 = vmatpush1.msra.mxu0 0.0
      %4533 = vmatprep.subr.mxu0 0.0
      %4534 = vmatpush1.msra.mxu0 0.0
      %4535 = vmatprep.subr.mxu0 0.0
      %4536 = vmatpush1.msra.mxu0 0.0
      %4537 = vmatprep.subr.mxu0 0.0
      %4538 = vmatpush1.msra.mxu0 0.0
      %4539 = vmatprep.subr.mxu0 0.0
      %4540 = vmatpush1.msra.mxu0 0.0
      %4541 = vmatprep.subr.mxu0 0.0
      %4542 = vmatpush1.msra.mxu0 0.0
      %4543 = vmatprep.subr.mxu0 0.0
      %4544 = vmatpush1.msra.mxu0 0.0
      %4545 = vmatprep.subr.mxu0 0.0
      %4546 = vmatpush1.msra.mxu0 0.0
      %4547 = vmatprep.subr.mxu0 0.0
      %4548 = vmatpush1.msra.mxu0 0.0
      %4549 = vmatprep.subr.mxu0 0.0
      %4550 = vmatpush1.msra.mxu0 0.0
      %4551 = vmatprep.subr.mxu0 0.0
      %4552 = vmatpush1.msra.mxu0 0.0
      %4553 = vmatprep.subr.mxu0 0.0
      %4554 = vmatpush1.msra.mxu0 0.0
      %4555 = vmatprep.subr.mxu0 0.0
      %4556 = vmatpush1.msra.mxu0 0.0
      %4557 = vmatprep.subr.mxu0 0.0
      %4558 = vmatpush1.msra.mxu0 0.0
      %4559 = vmatprep.subr.mxu0 0.0
      %4560 = vmatpush1.msra.mxu0 0.0
      %4561 = vmatprep.subr.mxu0 0.0
      %4562 = vmatpush1.msra.mxu0 0.0
      %4563 = vmatprep.mubr.f32.mxu0 0.0
      %4564 = vmatmul.mubr.f32.gmra.mrb[0].mxu0 %v4404
      %v4565 = vpop.f32.mrb[0].mxu0
      %v4566 = vadd.f32 0.0, %v4565
      %v4567 = vpop.f32.mrb[0].mxu0
      %4568 = vmatprep.mubr.f32.mxu0 0.0
      %4569 = vmatmul.mubr.f32.gmra.mrb[0].mxu0 %v4407
      %v4570 = vpop.f32.mrb[0].mxu0
      %v4571 = vadd.f32 0.0, %v4570
      %v4572 = vpop.f32.mrb[0].mxu0
      %4573 = vmatprep.mubr.f32.mxu0 0.0
      %4574 = vmatmul.mubr.f32.gmra.mrb[0].mxu0 %v4410
      %v4575 = vpop.f32.mrb[0].mxu0
      %v4576 = vadd.f32 0.0, %v4575
      %v4577 = vpop.f32.mrb[0].mxu0
      %4578 = vmatprep.mubr.f32.mxu0 0.0
      %4579 = vmatmul.mubr.f32.gmra.mrb[0].mxu0 %v4413
      %v4580 = vpop.f32.mrb[0].mxu0
      %v4581 = vadd.f32 0.0, %v4580
      %v4582 = vpop.f32.mrb[0].mxu0
      %4583 = vmatprep.mubr.f32.mxu0 0.0
      %4584 = vmatmul.mubr.f32.gmra.mrb[0].mxu0 %v4416
      %v4585 = vpop.f32.mrb[0].mxu0
      %v4586 = vadd.f32 0.0, %v4585
      %v4587 = vpop.f32.mrb[0].mxu0
      %4588 = vmatprep.mubr.f32.mxu0 0.0
      %4589 = vmatmul.mubr.f32.gmra.mrb[0].mxu0 %v4419
      %v4590 = vpop.f32.mrb[0].mxu0
      %v4591 = vadd.f32 0.0, %v4590
      %v4592 = vpop.f32.mrb[0].mxu0
      %4593 = vmatprep.mubr.f32.mxu0 0.0
      %4594 = vmatmul.mubr.f32.gmra.mrb[0].mxu0 %v4422
      %v4595 = vpop.f32.mrb[0].mxu0
      %v4596 = vadd.f32 0.0, %v4595
      %v4597 = vpop.f32.mrb[0].mxu0
      %4598 = vmatprep.mubr.f32.mxu0 0.0
      %4599 = vmatmul.mubr.f32.gmra.mrb[0].mxu0 %v4425
      %v4600 = vpop.f32.mrb[0].mxu0
      %v4601 = vadd.f32 0.0, %v4600
      %v4602 = vpop.f32.mrb[0].mxu0
      %4603 = vmatprep.mubr.f32.mxu0 0.0
      %4604 = vmatmul.mubr.f32.gmra.mrb[0].mxu0 %v4428
      %v4605 = vpop.f32.mrb[0].mxu0
      %v4606 = vadd.f32 0.0, %v4605
      %v4607 = vpop.f32.mrb[0].mxu0
      %4608 = vmatprep.mubr.f32.mxu0 0.0
      %4609 = vmatmul.mubr.f32.gmra.mrb[0].mxu0 %v4431
      %v4610 = vpop.f32.mrb[0].mxu0
      %v4611 = vadd.f32 0.0, %v4610
      %v4612 = vpop.f32.mrb[0].mxu0
      %4613 = vmatprep.mubr.f32.mxu0 0.0
      %4614 = vmatmul.mubr.f32.gmra.mrb[0].mxu0 %v4434
      %v4615 = vpop.f32.mrb[0].mxu0
      %v4616 = vadd.f32 0.0, %v4615
      %v4617 = vpop.f32.mrb[0].mxu0
      %4618 = vmatprep.mubr.f32.mxu0 0.0
      %4619 = vmatmul.mubr.f32.gmra.mrb[0].mxu0 %v4437
      %v4620 = vpop.f32.mrb[0].mxu0
      %v4621 = vadd.f32 0.0, %v4620
      %v4622 = vpop.f32.mrb[0].mxu0
      %4623 = vmatprep.mubr.f32.mxu0 0.0
      %4624 = vmatmul.mubr.f32.gmra.mrb[0].mxu0 %v4440
      %v4625 = vpop.f32.mrb[0].mxu0
      %v4626 = vadd.f32 0.0, %v4625
      %v4627 = vpop.f32.mrb[0].mxu0
      %4628 = vmatprep.mubr.f32.mxu0 0.0
      %4629 = vmatmul.mubr.f32.gmra.mrb[0].mxu0 %v4443
      %v4630 = vpop.f32.mrb[0].mxu0
      %v4631 = vadd.f32 0.0, %v4630
      %v4632 = vpop.f32.mrb[0].mxu0
      %4633 = vmatprep.mubr.f32.mxu0 0.0
      %4634 = vmatmul.mubr.f32.gmra.mrb[0].mxu0 %v4446
      %v4635 = vpop.f32.mrb[0].mxu0
      %v4636 = vadd.f32 0.0, %v4635
      %v4637 = vpop.f32.mrb[0].mxu0
      %4638 = vmatprep.mubr.f32.mxu0 0.0
      %4639 = vmatmul.mubr.f32.gmra.mrb[0].mxu0 %v4449
      %v4640 = vpop.f32.mrb[0].mxu0
      %v4641 = vadd.f32 0.0, %v4640
      %v4642 = vpop.f32.mrb[0].mxu0
      %4643 = vmatprep.mubr.f32.mxu0 0.0
      %4644 = vmatmul.mubr.f32.gmra.mrb[0].mxu0 %v4452
      %v4645 = vpop.f32.mrb[0].mxu0
      %v4646 = vadd.f32 0.0, %v4645
      %v4647 = vpop.f32.mrb[0].mxu0
      %4648 = vmatprep.mubr.f32.mxu0 0.0
      %4649 = vmatmul.mubr.f32.gmra.mrb[0].mxu0 %v4455
      %v4650 = vpop.f32.mrb[0].mxu0
      %v4651 = vadd.f32 0.0, %v4650
      %v4652 = vpop.f32.mrb[0].mxu0
      %4653 = vmatprep.mubr.f32.mxu0 0.0
      %4654 = vmatmul.mubr.f32.gmra.mrb[0].mxu0 %v4458
      %v4655 = vpop.f32.mrb[0].mxu0
      %v4656 = vadd.f32 0.0, %v4655
      %v4657 = vpop.f32.mrb[0].mxu0
      %4658 = vmatprep.mubr.f32.mxu0 0.0
      %4659 = vmatmul.mubr.f32.gmra.mrb[0].mxu0 %v4461
      %v4660 = vpop.f32.mrb[0].mxu0
      %v4661 = vadd.f32 0.0, %v4660
      %v4662 = vpop.f32.mrb[0].mxu0
      %4663 = vmatprep.mubr.f32.mxu0 0.0
      %4664 = vmatmul.mubr.f32.gmra.mrb[0].mxu0 %v4464
      %v4665 = vpop.f32.mrb[0].mxu0
      %v4666 = vadd.f32 0.0, %v4665
      %v4667 = vpop.f32.mrb[0].mxu0
      %4668 = vmatprep.mubr.f32.mxu0 0.0
      %4669 = vmatmul.mubr.f32.gmra.mrb[0].mxu0 %v4467
      %v4670 = vpop.f32.mrb[0].mxu0
      %v4671 = vadd.f32 0.0, %v4670
      %v4672 = vpop.f32.mrb[0].mxu0
      %4673 = vmatprep.mubr.f32.mxu0 0.0
      %4674 = vmatmul.mubr.f32.gmra.mrb[0].mxu0 %v4470
      %v4675 = vpop.f32.mrb[0].mxu0
      %v4676 = vadd.f32 0.0, %v4675
      %v4677 = vpop.f32.mrb[0].mxu0
      %4678 = vmatprep.mubr.f32.mxu0 0.0
      %4679 = vmatmul.mubr.f32.gmra.mrb[0].mxu0 %v4473
      %v4680 = vpop.f32.mrb[0].mxu0
      %v4681 = vadd.f32 0.0, %v4680
      %v4682 = vpop.f32.mrb[0].mxu0
      %4683 = vmatprep.mubr.f32.mxu0 0.0
      %4684 = vmatmul.mubr.f32.gmra.mrb[0].mxu0 %v4476
      %v4685 = vpop.f32.mrb[0].mxu0
      %v4686 = vadd.f32 0.0, %v4685
      %v4687 = vpop.f32.mrb[0].mxu0
      %4688 = vmatprep.mubr.f32.mxu0 0.0
      %4689 = vmatmul.mubr.f32.gmra.mrb[0].mxu0 %v4479
      %v4690 = vpop.f32.mrb[0].mxu0
      %v4691 = vadd.f32 0.0, %v4690
      %v4692 = vpop.f32.mrb[0].mxu0
      %4693 = vmatprep.mubr.f32.mxu0 0.0
      %4694 = vmatmul.mubr.f32.gmra.mrb[0].mxu0 %v4482
      %v4695 = vpop.f32.mrb[0].mxu0
      %v4696 = vadd.f32 0.0, %v4695
      %v4697 = vpop.f32.mrb[0].mxu0
      %4698 = vmatprep.mubr.f32.mxu0 0.0
      %4699 = vmatmul.mubr.f32.gmra.mrb[0].mxu0 %v4485
      %v4700 = vpop.f32.mrb[0].mxu0
      %v4701 = vadd.f32 0.0, %v4700
      %v4702 = vpop.f32.mrb[0].mxu0
      %4703 = vmatprep.mubr.f32.mxu0 0.0
      %4704 = vmatmul.mubr.f32.gmra.mrb[0].mxu0 %v4488
      %v4705 = vpop.f32.mrb[0].mxu0
      %v4706 = vadd.f32 0.0, %v4705
      %v4707 = vpop.f32.mrb[0].mxu0
      %4708 = vmatprep.mubr.f32.mxu0 0.0
      %4709 = vmatmul.mubr.f32.gmra.mrb[0].mxu0 %v4491
      %v4710 = vpop.f32.mrb[0].mxu0
      %v4711 = vadd.f32 0.0, %v4710
      %v4712 = vpop.f32.mrb[0].mxu0
      %4713 = vmatprep.mubr.f32.mxu0 0.0
      %4714 = vmatmul.mubr.f32.gmra.mrb[0].mxu0 %v4494
      %v4715 = vpop.f32.mrb[0].mxu0
      %v4716 = vadd.f32 0.0, %v4715
      %v4717 = vpop.f32.mrb[0].mxu0
      %4718 = vmatprep.mubr.f32.mxu0 0.0
      %4719 = vmatmul.mubr.f32.gmra.mrb[0].mxu0 %v4497
      %v4720 = vpop.f32.mrb[0].mxu0
      %v4721 = vadd.f32 0.0, %v4720
      %v4722 = vpop.f32.mrb[0].mxu0
      %4723 = vdwg.mxu0
      %v4724 = vld [vmem:[%s5] sm:$0x1]
      %v4726 = vlaneseq
      %v4727 = vshrl.u32 %v4726, 7
      %v4728 = vsub.s32 0, %v4727
      %v4729 = vrot.slane %v4724, %v4728
      %v4731 = vmul.f32 %v4566, %v4729
      %v4732 = vmul.f32 %v4571, %v4729
      %v4733 = vmul.f32 %v4576, %v4729
      %v4734 = vmul.f32 %v4581, %v4729
      %v4735 = vmul.f32 %v4586, %v4729
      %v4736 = vmul.f32 %v4591, %v4729
      %v4737 = vmul.f32 %v4596, %v4729
      %v4738 = vmul.f32 %v4601, %v4729
      %v4739 = vmul.f32 %v4606, %v4729
      %v4740 = vmul.f32 %v4611, %v4729
      %v4741 = vmul.f32 %v4616, %v4729
      %v4742 = vmul.f32 %v4621, %v4729
      %v4743 = vmul.f32 %v4626, %v4729
      %v4744 = vmul.f32 %v4631, %v4729
      %v4745 = vmul.f32 %v4636, %v4729
      %v4746 = vmul.f32 %v4641, %v4729
      %v4747 = vmul.f32 %v4646, %v4729
      %v4748 = vmul.f32 %v4651, %v4729
      %v4749 = vmul.f32 %v4656, %v4729
      %v4750 = vmul.f32 %v4661, %v4729
      %v4751 = vmul.f32 %v4666, %v4729
      %v4752 = vmul.f32 %v4671, %v4729
      %v4753 = vmul.f32 %v4676, %v4729
      %v4754 = vmul.f32 %v4681, %v4729
      %v4755 = vmul.f32 %v4686, %v4729
      %v4756 = vmul.f32 %v4691, %v4729
      %v4757 = vmul.f32 %v4696, %v4729
      %v4758 = vmul.f32 %v4701, %v4729
      %v4759 = vmul.f32 %v4706, %v4729
      %v4760 = vmul.f32 %v4711, %v4729
      %v4761 = vmul.f32 %v4716, %v4729
      %v4762 = vmul.f32 %v4721, %v4729
      %v4763 = vld [vmem:[%s6] sm:$0x1]
      %v4765 = vlaneseq
      %v4766 = vshrl.u32 %v4765, 7
      %v4767 = vsub.s32 0, %v4766
      %v4768 = vrot.slane %v4763, %v4767
      %v4770 = vadd.f32 %v4731, %v4768
      %v4771 = vadd.f32 %v4732, %v4768
      %v4772 = vadd.f32 %v4733, %v4768
      %v4773 = vadd.f32 %v4734, %v4768
      %v4774 = vadd.f32 %v4735, %v4768
      %v4775 = vadd.f32 %v4736, %v4768
      %v4776 = vadd.f32 %v4737, %v4768
      %v4777 = vadd.f32 %v4738, %v4768
      %v4778 = vadd.f32 %v4739, %v4768
      %v4779 = vadd.f32 %v4740, %v4768
      %v4780 = vadd.f32 %v4741, %v4768
      %v4781 = vadd.f32 %v4742, %v4768
      %v4782 = vadd.f32 %v4743, %v4768
      %v4783 = vadd.f32 %v4744, %v4768
      %v4784 = vadd.f32 %v4745, %v4768
      %v4785 = vadd.f32 %v4746, %v4768
      %v4786 = vadd.f32 %v4747, %v4768
      %v4787 = vadd.f32 %v4748, %v4768
      %v4788 = vadd.f32 %v4749, %v4768
      %v4789 = vadd.f32 %v4750, %v4768
      %v4790 = vadd.f32 %v4751, %v4768
      %v4791 = vadd.f32 %v4752, %v4768
      %v4792 = vadd.f32 %v4753, %v4768
      %v4793 = vadd.f32 %v4754, %v4768
      %v4794 = vadd.f32 %v4755, %v4768
      %v4795 = vadd.f32 %v4756, %v4768
      %v4796 = vadd.f32 %v4757, %v4768
      %v4797 = vadd.f32 %v4758, %v4768
      %v4798 = vadd.f32 %v4759, %v4768
      %v4799 = vadd.f32 %v4760, %v4768
      %v4800 = vadd.f32 %v4761, %v4768
      %v4801 = vadd.f32 %v4762, %v4768
      %v4802 = vadd.f32 %v4770, %v279
      %v4803 = vadd.f32 %v4771, %v280
      %v4804 = vadd.f32 %v4772, %v281
      %v4805 = vadd.f32 %v4773, %v282
      %v4806 = vadd.f32 %v4774, %v283
      %v4807 = vadd.f32 %v4775, %v284
      %v4808 = vadd.f32 %v4776, %v285
      %v4809 = vadd.f32 %v4777, %v286
      %v4810 = vadd.f32 %v4778, %v287
      %v4811 = vadd.f32 %v4779, %v288
      %v4812 = vadd.f32 %v4780, %v289
      %v4813 = vadd.f32 %v4781, %v290
      %v4814 = vadd.f32 %v4782, %v291
      %v4815 = vadd.f32 %v4783, %v292
      %v4816 = vadd.f32 %v4784, %v293
      %v4817 = vadd.f32 %v4785, %v294
      %v4818 = vadd.f32 %v4786, %v295
      %v4819 = vadd.f32 %v4787, %v296
      %v4820 = vadd.f32 %v4788, %v297
      %v4821 = vadd.f32 %v4789, %v298
      %v4822 = vadd.f32 %v4790, %v299
      %v4823 = vadd.f32 %v4791, %v300
      %v4824 = vadd.f32 %v4792, %v301
      %v4825 = vadd.f32 %v4793, %v302
      %v4826 = vadd.f32 %v4794, %v303
      %v4827 = vadd.f32 %v4795, %v304
      %v4828 = vadd.f32 %v4796, %v305
      %v4829 = vadd.f32 %v4797, %v306
      %v4830 = vadd.f32 %v4798, %v307
      %v4831 = vadd.f32 %v4799, %v308
      %v4832 = vadd.f32 %v4800, %v309
      %v4833 = vadd.f32 %v4801, %v310
      %v4834 = vxor.u32 %v4802, 2147483648
      %v4835 = vxor.u32 %v4803, 2147483648
      %v4836 = vxor.u32 %v4804, 2147483648
      %v4837 = vxor.u32 %v4805, 2147483648
      %v4838 = vxor.u32 %v4806, 2147483648
      %v4839 = vxor.u32 %v4807, 2147483648
      %v4840 = vxor.u32 %v4808, 2147483648
      %v4841 = vxor.u32 %v4809, 2147483648
      %v4842 = vxor.u32 %v4810, 2147483648
      %v4843 = vxor.u32 %v4811, 2147483648
      %v4844 = vxor.u32 %v4812, 2147483648
      %v4845 = vxor.u32 %v4813, 2147483648
      %v4846 = vxor.u32 %v4814, 2147483648
      %v4847 = vxor.u32 %v4815, 2147483648
      %v4848 = vxor.u32 %v4816, 2147483648
      %v4849 = vxor.u32 %v4817, 2147483648
      %v4850 = vxor.u32 %v4818, 2147483648
      %v4851 = vxor.u32 %v4819, 2147483648
      %v4852 = vxor.u32 %v4820, 2147483648
      %v4853 = vxor.u32 %v4821, 2147483648
      %v4854 = vxor.u32 %v4822, 2147483648
      %v4855 = vxor.u32 %v4823, 2147483648
      %v4856 = vxor.u32 %v4824, 2147483648
      %v4857 = vxor.u32 %v4825, 2147483648
      %v4858 = vxor.u32 %v4826, 2147483648
      %v4859 = vxor.u32 %v4827, 2147483648
      %v4860 = vxor.u32 %v4828, 2147483648
      %v4861 = vxor.u32 %v4829, 2147483648
      %v4862 = vxor.u32 %v4830, 2147483648
      %v4863 = vxor.u32 %v4831, 2147483648
      %v4864 = vxor.u32 %v4832, 2147483648
      %v4865 = vxor.u32 %v4833, 2147483648
      %v4866 = vmul.f32 %v4834, 1.442695
      %v4867 = vpow.pop %v4866
      %v4868 = vmul.f32 %v4835, 1.442695
      %v4869 = vpow.pop %v4868
      %v4870 = vmul.f32 %v4836, 1.442695
      %v4871 = vpow.pop %v4870
      %v4872 = vmul.f32 %v4837, 1.442695
      %v4873 = vpow.pop %v4872
      %v4874 = vmul.f32 %v4838, 1.442695
      %v4875 = vpow.pop %v4874
      %v4876 = vmul.f32 %v4839, 1.442695
      %v4877 = vpow.pop %v4876
      %v4878 = vmul.f32 %v4840, 1.442695
      %v4879 = vpow.pop %v4878
      %v4880 = vmul.f32 %v4841, 1.442695
      %v4881 = vpow.pop %v4880
      %v4882 = vmul.f32 %v4842, 1.442695
      %v4883 = vpow.pop %v4882
      %v4884 = vmul.f32 %v4843, 1.442695
      %v4885 = vpow.pop %v4884
      %v4886 = vmul.f32 %v4844, 1.442695
      %v4887 = vpow.pop %v4886
      %v4888 = vmul.f32 %v4845, 1.442695
      %v4889 = vpow.pop %v4888
      %v4890 = vmul.f32 %v4846, 1.442695
      %v4891 = vpow.pop %v4890
      %v4892 = vmul.f32 %v4847, 1.442695
      %v4893 = vpow.pop %v4892
      %v4894 = vmul.f32 %v4848, 1.442695
      %v4895 = vpow.pop %v4894
      %v4896 = vmul.f32 %v4849, 1.442695
      %v4897 = vpow.pop %v4896
      %v4898 = vmul.f32 %v4850, 1.442695
      %v4899 = vpow.pop %v4898
      %v4900 = vmul.f32 %v4851, 1.442695
      %v4901 = vpow.pop %v4900
      %v4902 = vmul.f32 %v4852, 1.442695
      %v4903 = vpow.pop %v4902
      %v4904 = vmul.f32 %v4853, 1.442695
      %v4905 = vpow.pop %v4904
      %v4906 = vmul.f32 %v4854, 1.442695
      %v4907 = vpow.pop %v4906
      %v4908 = vmul.f32 %v4855, 1.442695
      %v4909 = vpow.pop %v4908
      %v4910 = vmul.f32 %v4856, 1.442695
      %v4911 = vpow.pop %v4910
      %v4912 = vmul.f32 %v4857, 1.442695
      %v4913 = vpow.pop %v4912
      %v4914 = vmul.f32 %v4858, 1.442695
      %v4915 = vpow.pop %v4914
      %v4916 = vmul.f32 %v4859, 1.442695
      %v4917 = vpow.pop %v4916
      %v4918 = vmul.f32 %v4860, 1.442695
      %v4919 = vpow.pop %v4918
      %v4920 = vmul.f32 %v4861, 1.442695
      %v4921 = vpow.pop %v4920
      %v4922 = vmul.f32 %v4862, 1.442695
      %v4923 = vpow.pop %v4922
      %v4924 = vmul.f32 %v4863, 1.442695
      %v4925 = vpow.pop %v4924
      %v4926 = vmul.f32 %v4864, 1.442695
      %v4927 = vpow.pop %v4926
      %v4928 = vmul.f32 %v4865, 1.442695
      %v4929 = vpow.pop %v4928
      %v4930 = vadd.f32 %v4867, 1.0
      %v4931 = vadd.f32 %v4869, 1.0
      %v4932 = vadd.f32 %v4871, 1.0
      %v4933 = vadd.f32 %v4873, 1.0
      %v4934 = vadd.f32 %v4875, 1.0
      %v4935 = vadd.f32 %v4877, 1.0
      %v4936 = vadd.f32 %v4879, 1.0
      %v4937 = vadd.f32 %v4881, 1.0
      %v4938 = vadd.f32 %v4883, 1.0
      %v4939 = vadd.f32 %v4885, 1.0
      %v4940 = vadd.f32 %v4887, 1.0
      %v4941 = vadd.f32 %v4889, 1.0
      %v4942 = vadd.f32 %v4891, 1.0
      %v4943 = vadd.f32 %v4893, 1.0
      %v4944 = vadd.f32 %v4895, 1.0
      %v4945 = vadd.f32 %v4897, 1.0
      %v4946 = vadd.f32 %v4899, 1.0
      %v4947 = vadd.f32 %v4901, 1.0
      %v4948 = vadd.f32 %v4903, 1.0
      %v4949 = vadd.f32 %v4905, 1.0
      %v4950 = vadd.f32 %v4907, 1.0
      %v4951 = vadd.f32 %v4909, 1.0
      %v4952 = vadd.f32 %v4911, 1.0
      %v4953 = vadd.f32 %v4913, 1.0
      %v4954 = vadd.f32 %v4915, 1.0
      %v4955 = vadd.f32 %v4917, 1.0
      %v4956 = vadd.f32 %v4919, 1.0
      %v4957 = vadd.f32 %v4921, 1.0
      %v4958 = vadd.f32 %v4923, 1.0
      %v4959 = vadd.f32 %v4925, 1.0
      %v4960 = vadd.f32 %v4927, 1.0
      %v4961 = vadd.f32 %v4929, 1.0
      %v4962 = vrcp.pop %v4930
      %v4963 = vmul.f32 1.0, %v4962
      %v4964 = vrcp.pop %v4931
      %v4965 = vmul.f32 1.0, %v4964
      %v4966 = vrcp.pop %v4932
      %v4967 = vmul.f32 1.0, %v4966
      %v4968 = vrcp.pop %v4933
      %v4969 = vmul.f32 1.0, %v4968
      %v4970 = vrcp.pop %v4934
      %v4971 = vmul.f32 1.0, %v4970
      %v4972 = vrcp.pop %v4935
      %v4973 = vmul.f32 1.0, %v4972
      %v4974 = vrcp.pop %v4936
      %v4975 = vmul.f32 1.0, %v4974
      %v4976 = vrcp.pop %v4937
      %v4977 = vmul.f32 1.0, %v4976
      %v4978 = vrcp.pop %v4938
      %v4979 = vmul.f32 1.0, %v4978
      %v4980 = vrcp.pop %v4939
      %v4981 = vmul.f32 1.0, %v4980
      %v4982 = vrcp.pop %v4940
      %v4983 = vmul.f32 1.0, %v4982
      %v4984 = vrcp.pop %v4941
      %v4985 = vmul.f32 1.0, %v4984
      %v4986 = vrcp.pop %v4942
      %v4987 = vmul.f32 1.0, %v4986
      %v4988 = vrcp.pop %v4943
      %v4989 = vmul.f32 1.0, %v4988
      %v4990 = vrcp.pop %v4944
      %v4991 = vmul.f32 1.0, %v4990
      %v4992 = vrcp.pop %v4945
      %v4993 = vmul.f32 1.0, %v4992
      %v4994 = vrcp.pop %v4946
      %v4995 = vmul.f32 1.0, %v4994
      %v4996 = vrcp.pop %v4947
      %v4997 = vmul.f32 1.0, %v4996
      %v4998 = vrcp.pop %v4948
      %v4999 = vmul.f32 1.0, %v4998
      %v5000 = vrcp.pop %v4949
      %v5001 = vmul.f32 1.0, %v5000
      %v5002 = vrcp.pop %v4950
      %v5003 = vmul.f32 1.0, %v5002
      %v5004 = vrcp.pop %v4951
      %v5005 = vmul.f32 1.0, %v5004
      %v5006 = vrcp.pop %v4952
      %v5007 = vmul.f32 1.0, %v5006
      %v5008 = vrcp.pop %v4953
      %v5009 = vmul.f32 1.0, %v5008
      %v5010 = vrcp.pop %v4954
      %v5011 = vmul.f32 1.0, %v5010
      %v5012 = vrcp.pop %v4955
      %v5013 = vmul.f32 1.0, %v5012
      %v5014 = vrcp.pop %v4956
      %v5015 = vmul.f32 1.0, %v5014
      %v5016 = vrcp.pop %v4957
      %v5017 = vmul.f32 1.0, %v5016
      %v5018 = vrcp.pop %v4958
      %v5019 = vmul.f32 1.0, %v5018
      %v5020 = vrcp.pop %v4959
      %v5021 = vmul.f32 1.0, %v5020
      %v5022 = vrcp.pop %v4960
      %v5023 = vmul.f32 1.0, %v5022
      %v5024 = vrcp.pop %v4961
      %v5025 = vmul.f32 1.0, %v5024
      %v5026 = vmul.f32 %v4802, %v4963
      %v5027 = vmul.f32 %v4803, %v4965
      %v5028 = vmul.f32 %v4804, %v4967
      %v5029 = vmul.f32 %v4805, %v4969
      %v5030 = vmul.f32 %v4806, %v4971
      %v5031 = vmul.f32 %v4807, %v4973
      %v5032 = vmul.f32 %v4808, %v4975
      %v5033 = vmul.f32 %v4809, %v4977
      %v5034 = vmul.f32 %v4810, %v4979
      %v5035 = vmul.f32 %v4811, %v4981
      %v5036 = vmul.f32 %v4812, %v4983
      %v5037 = vmul.f32 %v4813, %v4985
      %v5038 = vmul.f32 %v4814, %v4987
      %v5039 = vmul.f32 %v4815, %v4989
      %v5040 = vmul.f32 %v4816, %v4991
      %v5041 = vmul.f32 %v4817, %v4993
      %v5042 = vmul.f32 %v4818, %v4995
      %v5043 = vmul.f32 %v4819, %v4997
      %v5044 = vmul.f32 %v4820, %v4999
      %v5045 = vmul.f32 %v4821, %v5001
      %v5046 = vmul.f32 %v4822, %v5003
      %v5047 = vmul.f32 %v4823, %v5005
      %v5048 = vmul.f32 %v4824, %v5007
      %v5049 = vmul.f32 %v4825, %v5009
      %v5050 = vmul.f32 %v4826, %v5011
      %v5051 = vmul.f32 %v4827, %v5013
      %v5052 = vmul.f32 %v4828, %v5015
      %v5053 = vmul.f32 %v4829, %v5017
      %v5054 = vmul.f32 %v4830, %v5019
      %v5055 = vmul.f32 %v4831, %v5021
      %v5056 = vmul.f32 %v4832, %v5023
      %v5057 = vmul.f32 %v4833, %v5025
      %5058 = vst.msk [vmem:[%s278] sm:$0xff] %vm311, %v5026
      %5059 = vst.msk [vmem:[%s278 + $0x8] sm:$0xff] %vm311, %v5027
      %5060 = vst.msk [vmem:[%s278 + $0x10] sm:$0xff] %vm311, %v5028
      %5061 = vst.msk [vmem:[%s278 + $0x18] sm:$0xff] %vm311, %v5029
      %5062 = vst.msk [vmem:[%s278 + $0x20] sm:$0xff] %vm311, %v5030
      %5063 = vst.msk [vmem:[%s278 + $0x28] sm:$0xff] %vm311, %v5031
      %5064 = vst.msk [vmem:[%s278 + $0x30] sm:$0xff] %vm311, %v5032
      %5065 = vst.msk [vmem:[%s278 + $0x38] sm:$0xff] %vm311, %v5033
      %5066 = vst.msk [vmem:[%s278 + $0x40] sm:$0xff] %vm311, %v5034
      %5067 = vst.msk [vmem:[%s278 + $0x48] sm:$0xff] %vm311, %v5035
      %5068 = vst.msk [vmem:[%s278 + $0x50] sm:$0xff] %vm311, %v5036
      %5069 = vst.msk [vmem:[%s278 + $0x58] sm:$0xff] %vm311, %v5037
      %5070 = vst.msk [vmem:[%s278 + $0x60] sm:$0xff] %vm311, %v5038
      %5071 = vst.msk [vmem:[%s278 + $0x68] sm:$0xff] %vm311, %v5039
      %5072 = vst.msk [vmem:[%s278 + $0x70] sm:$0xff] %vm311, %v5040
      %5073 = vst.msk [vmem:[%s278 + $0x78] sm:$0xff] %vm311, %v5041
      %5074 = vst.msk [vmem:[%s278 + $0x80] sm:$0xff] %vm311, %v5042
      %5075 = vst.msk [vmem:[%s278 + $0x88] sm:$0xff] %vm311, %v5043
      %5076 = vst.msk [vmem:[%s278 + $0x90] sm:$0xff] %vm311, %v5044
      %5077 = vst.msk [vmem:[%s278 + $0x98] sm:$0xff] %vm311, %v5045
      %5078 = vst.msk [vmem:[%s278 + $0xa0] sm:$0xff] %vm311, %v5046
      %5079 = vst.msk [vmem:[%s278 + $0xa8] sm:$0xff] %vm311, %v5047
      %5080 = vst.msk [vmem:[%s278 + $0xb0] sm:$0xff] %vm311, %v5048
      %5081 = vst.msk [vmem:[%s278 + $0xb8] sm:$0xff] %vm311, %v5049
      %5082 = vst.msk [vmem:[%s278 + $0xc0] sm:$0xff] %vm311, %v5050
      %5083 = vst.msk [vmem:[%s278 + $0xc8] sm:$0xff] %vm311, %v5051
      %5084 = vst.msk [vmem:[%s278 + $0xd0] sm:$0xff] %vm311, %v5052
      %5085 = vst.msk [vmem:[%s278 + $0xd8] sm:$0xff] %vm311, %v5053
      %5086 = vst.msk [vmem:[%s278 + $0xe0] sm:$0xff] %vm311, %v5054
      %5087 = vst.msk [vmem:[%s278 + $0xe8] sm:$0xff] %vm311, %v5055
      %5088 = vst.msk [vmem:[%s278 + $0xf0] sm:$0xff] %vm311, %v5056
      %5089 = vst.msk [vmem:[%s278 + $0xf8] sm:$0xff] %vm311, %v5057
      %p5090 = scmp.lt.s32.totalorder %s18, 1
      %s5091 = scalar_select %p5090, %s18, 1
      %s5092 = smul.addr %s5091, 32
      %s5093 = smul.addr %s5092, 8
      %s5094 = scalar_lea.vmem %s7, %s5093
      // Predicated region
      $region49: #{basic_block_forward.1} parent=47 // pred_check
        %p5095 = pneg %p188
      $region50: #{basic_block_forward.1} parent=47 // pred_check_branch
        %5097 = sbr.rel (%p5095) target = $region52
      $region51: #{basic_block_forward.1} parent=47 // pred_region
        _
      $region52: #{basic_block_forward.1} parent=47 // pred_fallthru
        _
    $region48: #{basic_block_forward.1} parent=5 // pred_fallthru
      _
    %p5098 = scmp.le.s32.totalorder 2, %s13
    // Predicated region
    $region53: #{basic_block_forward.1} parent=5 // pred_check
      %p5099 = pneg %p5098
    $region54: #{basic_block_forward.1} parent=5 // pred_check_branch
      %5101 = sbr.rel (%p5099) target = $region56
    $region55: #{basic_block_forward.1} parent=5 // pred_region
      %s5102 = ssub.s32 %s13, 2
      // Predicated region
      $region57: #{basic_block_forward.1} parent=55 // pred_check
        %p5103 = pneg %p194
      $region58: #{basic_block_forward.1} parent=55 // pred_check_branch
        %5105 = sbr.rel (%p5103) target = $region60
      $region59: #{basic_block_forward.1} parent=55 // pred_region
        %p5106 = scmp.lt.s32.totalorder %s19, 1
        %s5107 = scalar_select %p5106, %s19, 1
        %s5108 = smul.addr %s5107, 32
        %s5109 = smul.addr %s5108, 8
        %s5110 = scalar_lea.vmem %s7, %s5109
      $region60: #{basic_block_forward.1} parent=55 // pred_fallthru
        _
    $region56: #{basic_block_forward.1} parent=5 // pred_fallthru
      _
  $region6: #{basic_block_forward.1} parent=0 // loop_footer
    %s17 = sadd.s32 1, %s13
  $region7: #{basic_block_forward.1} parent=0 // loop_footer_branch
    %12 = sbr.rel target = $region3
  $region8: #{basic_block_forward.1} parent=0 // loop_exit
    _

</llo_original>
